<compile_context>
chip_gen: v7x
topology: tpu7x:2x2x1
jax: 0.10.0
libtpu: 0.0.40
codegen_flags: <defaults>
</compile_context>

<pallas_src>
import functools
import math

import jax
import jax.numpy as jnp
from jax import lax
from jax.experimental import pallas as pl
from jax.experimental.pallas import tpu as pltpu


def _sparse_attn_kernel(ns_ref, wqkv_ref, bqkv_ref, wout_ref, bout_ref,
                        hproj_ref, src_ref, tgtc_ref, tgtr_ref, out_ref,
                        q_s, kv_s, acc_s, m_s, *, scaling):
    """Refs:
      ns_ref    (N, D)     bf16  node states
      wqkv_ref  (D, 3D)    bf16  fused q|k|v weight (pre-transposed: x @ W)
      bqkv_ref  (1, 3D)    f32   fused q|k|v bias
      wout_ref  (D, D)     bf16  out_proj weight (pre-transposed)
      bout_ref  (1, D)     f32   out_proj bias
      hproj_ref (D, D)     bf16  0/1 head projector: hproj[d,d'] = [head(d)==head(d')]
      src_ref   (Mc, 1)    i32   edge sources  (column layout, pad = -1)
      tgtc_ref  (Mc, 1)    i32   edge targets  (column layout, pad = -1)
      tgtr_ref  (1, Mc)    i32   edge targets  (row layout,    pad = -1)
      out_ref   (N, D)     f32   messages
      scratch:  q_s (N,D) bf16; kv_s (N,2D) bf16;
                acc_s (N,2D) f32  (cols [0:D]=den, [D:2D]=num);
                m_s (1,D) f32     per-head conservative score bound
    """
    N, D = ns_ref.shape
    Mc = src_ref.shape[0]
    f32 = jnp.float32
    bf16 = jnp.bfloat16

    step = pl.program_id(0)
    last = pl.num_programs(0) - 1

    # ---- step 0: fused QKV projection + accumulator init + score bound ------
    @pl.when(step == 0)
    def _init():
        ns = ns_ref[...]                                             # (N, D) bf16
        proj = jnp.dot(ns, wqkv_ref[...],
                       preferred_element_type=f32) + bqkv_ref[...]   # (N, 3D) f32
        qf = proj[:, :D]
        kvf = proj[:, D:]
        q_s[...] = qf.astype(bf16)
        kv_s[...] = kvf.astype(bf16)
        acc_s[...] = jnp.zeros_like(acc_s)

        # Per-head conservative score bound (Cauchy-Schwarz).  Any per-head
        # constant shift cancels exactly in the per-node softmax; this one is
        # computed once so the per-chunk path needs no running max / rescale.
        kf = kvf[:, :D]
        q_sq = jnp.dot((qf * qf).astype(bf16), hproj_ref[...],
                       preferred_element_type=f32)                   # (N, D)
        k_sq = jnp.dot((kf * kf).astype(bf16), hproj_ref[...],
                       preferred_element_type=f32)                   # (N, D)
        qn = jnp.sqrt(jnp.max(q_sq, axis=0, keepdims=True))          # (1, D)
        kn = jnp.sqrt(jnp.max(k_sq, axis=0, keepdims=True))          # (1, D)
        m_s[...] = qn * kn * scaling

    # ---- per-chunk one-hot gather / scatter matrices (0/1, exact in bf16) ---
    src_col = src_ref[...]                                           # (Mc, 1)
    tgt_col = tgtc_ref[...]                                          # (Mc, 1)
    tgt_row = tgtr_ref[...]                                          # (1, Mc)

    lane_nodes = lax.broadcasted_iota(jnp.int32, (Mc, N), 1)
    subl_nodes = lax.broadcasted_iota(jnp.int32, (N, Mc), 0)
    s_oh = (lane_nodes == src_col).astype(bf16)                      # (Mc, N)
    t_oh = (lane_nodes == tgt_col).astype(bf16)                      # (Mc, N)
    t_ohT = (subl_nodes == tgt_row).astype(bf16)                     # (N, Mc)

    # ---- gathers on the MXU (bf16 in, f32 accumulate); K|V fused ------------
    qp = jnp.dot(t_oh, q_s[...], preferred_element_type=f32)         # (Mc, D)
    kv = jnp.dot(s_oh, kv_s[...], preferred_element_type=f32)        # (Mc, 2D)
    kp = kv[:, :D]
    vp = kv[:, D:]

    # ---- per-edge per-head scores, broadcast to head width via hproj --------
    qk = (qp * kp).astype(bf16)                                      # (Mc, D)
    sc = jnp.dot(qk, hproj_ref[...],
                 preferred_element_type=f32) * scaling               # (Mc, D)

    # ---- shifted exp + fused scatter of [den | num] --------------------------
    es = jnp.exp(sc - m_s[...])                                      # (Mc, D) f32
    msg = vp * es                                                    # (Mc, D) f32
    rhs = jnp.concatenate([es, msg], axis=1).astype(bf16)            # (Mc, 2D)
    acc_s[...] = acc_s[...] + jnp.dot(t_ohT, rhs,
                                      preferred_element_type=f32)    # (N, 2D)

    # ---- last step: normalize (scatter softmax) + out_proj ------------------
    @pl.when(step == last)
    def _finalize():
        acc = acc_s[...]
        den = acc[:, :D]
        num = acc[:, D:]
        den = jnp.where(den <= 0.0, 1.0, den)                        # isolated nodes
        attn = num * pl.reciprocal(den, approx=True)                 # (N, D)
        out = jnp.dot(attn.astype(bf16), wout_ref[...],
                      preferred_element_type=f32) + bout_ref[...]
        out_ref[...] = out.astype(out_ref.dtype)


def self_attention_message_layer(node_states, edges, wqkv, bqkv, wout, bout,
                                 *, num_heads, edge_chunk=512):
    """node_states (N, D) f32; edges (2, M) i32 [row 0 = sources, row 1 = targets];
    wqkv (3D, D), bqkv (3D,), wout (D, D), bout (D,) in PyTorch Linear layout."""
    N, D = node_states.shape
    H = num_heads
    hd = D // H
    assert hd * H == D, "embed_dim must be divisible by num_heads"
    M = edges.shape[1]

    n_chunks = int(pl.cdiv(M, edge_chunk))
    m_pad = n_chunks * edge_chunk
    edges_p = jnp.pad(edges.astype(jnp.int32), ((0, 0), (0, m_pad - M)),
                      constant_values=-1)                            # sentinel pad
    src_col = edges_p[0].reshape(m_pad, 1)                           # (m_pad, 1)
    tgt_col = edges_p[1].reshape(m_pad, 1)                           # (m_pad, 1)
    tgt_row = edges_p[1].reshape(1, m_pad)                           # (1, m_pad)

    # Fused, pre-transposed torch-layout weights; 2-D biases.
    wqkv_t = wqkv.T.astype(jnp.bfloat16)                             # (D, 3D)
    bqkv_2d = bqkv.reshape(1, 3 * D).astype(jnp.float32)
    wout_t = wout.T.astype(jnp.bfloat16)                             # (D, D)
    bout_2d = bout.reshape(1, D).astype(jnp.float32)

    head_ids = jnp.arange(D, dtype=jnp.int32) // hd
    hproj = (head_ids[:, None] == head_ids[None, :]).astype(jnp.bfloat16)

    kernel = functools.partial(_sparse_attn_kernel, scaling=float(hd) ** -0.5)

    def full(shape):
        return pl.BlockSpec(shape, lambda i, _r=len(shape): (0,) * _r)

    grid_spec = pltpu.PrefetchScalarGridSpec(
        num_scalar_prefetch=0,
        grid=(n_chunks,),
        in_specs=[
            full((N, D)),                                            # node states (bf16)
            full((D, 3 * D)),                                        # wqkv_t (fused)
            full((1, 3 * D)),                                        # bqkv (fused)
            full((D, D)),                                            # wout_t
            full((1, D)),                                            # bout
            full((D, D)),                                            # head projector
            pl.BlockSpec((edge_chunk, 1), lambda i: (i, 0)),         # src (column)
            pl.BlockSpec((edge_chunk, 1), lambda i: (i, 0)),         # tgt (column)
            pl.BlockSpec((1, edge_chunk), lambda i: (0, i)),         # tgt (row)
        ],
        out_specs=pl.BlockSpec((N, D), lambda i: (0, 0)),
        scratch_shapes=[
            pltpu.VMEM((N, D), jnp.bfloat16),       # q
            pltpu.VMEM((N, 2 * D), jnp.bfloat16),   # fused k|v
            pltpu.VMEM((N, 2 * D), jnp.float32),    # fused den|num accumulator
            pltpu.VMEM((1, D), jnp.float32),        # per-head score bound
        ],
    )

    # TODO(synk): for v7x, add a "parallel" node-tile axis so the second
    # TensorCore is used; grid=(n_chunks,) is inherently sequential here.
    return pl.pallas_call(
        kernel,
        out_shape=jax.ShapeDtypeStruct((N, D), jnp.float32),
        grid_spec=grid_spec,
        compiler_params=pltpu.CompilerParams(
            dimension_semantics=("arbitrary",),
            vmem_limit_bytes=16 * 1024 * 1024),
    )(node_states.astype(jnp.bfloat16), wqkv_t, bqkv_2d, wout_t, bout_2d,
      hproj, src_col, tgt_col, tgt_row)


def _reference(node_states, edges, wqkv, bqkv, wout, bout, *, num_heads):
    """Pure-JAX f32 reference mirroring the PyTorch forward."""
    N, D = node_states.shape
    H = num_heads
    hd = D // H
    src, tgt = edges[0], edges[1]
    qkv = node_states @ wqkv.T + bqkv                                # (N, 3D)
    q, k, v = jnp.split(qkv, 3, axis=1)
    qp, kp, vp = q[tgt], k[src], v[src]                              # (M, D)
    scores = (qp * kp).reshape(-1, H, hd).sum(-1) * float(hd) ** -0.5  # (M, H)
    smax = jnp.full((N, H), -jnp.inf, jnp.float32).at[tgt].max(scores)
    ex = jnp.exp(scores - smax[tgt])
    ssum = jnp.zeros((N, H), jnp.float32).at[tgt].add(ex)
    w = ex / ssum[tgt]                                               # scatter softmax
    msg = (vp.reshape(-1, H, hd) * w[:, :, None]).reshape(-1, D)
    attn = jnp.zeros((N, D), jnp.float32).at[tgt].add(msg)
    return attn @ wout.T + bout


if __name__ == "__main__":
    # Small deterministic problem: 64 nodes, hidden 32, 4 heads, 1000 edges
    # (padded to 1024 -> two 512-edge chunks, exercising multi-chunk accumulation).
    N, D, H, M = 64, 32, 4, 1000

    key = jax.random.PRNGKey(0)
    k_ns, k_wqkv, k_wout, k_src, k_tgt = jax.random.split(key, 5)

    node_states = jax.random.normal(k_ns, (N, D), dtype=jnp.float32)

    def xavier(k, out_f, in_f, gain):
        bound = gain * (6.0 / (in_f + out_f)) ** 0.5
        return jax.random.uniform(k, (out_f, in_f), jnp.float32, -bound, bound)

    wqkv = xavier(k_wqkv, 3 * D, D, 1.0 / math.sqrt(2.0))            # qkv_in_proj
    bqkv = jnp.zeros((3 * D,), jnp.float32)                          # attn_bias=True, zero-init
    wout = xavier(k_wout, D, D, 1.0)                                 # out_proj
    bout = jnp.zeros((D,), jnp.float32)

    src = jax.random.randint(k_src, (M,), 0, N, dtype=jnp.int32)
    tgt = jax.random.randint(k_tgt, (M,), 0, N, dtype=jnp.int32)
    edges = jnp.stack([src, tgt], axis=0)                            # (2, M) torch-geometric

    out = self_attention_message_layer(node_states, edges, wqkv, bqkv,
                                       wout, bout, num_heads=H, edge_chunk=512)
    out = jax.block_until_ready(out)

    ref = _reference(node_states, edges, wqkv, bqkv, wout, bout, num_heads=H)
    assert out.shape == (N, D) and out.dtype == jnp.float32
    # Tolerance reflects bf16 MXU operands in the kernel vs. an f32 reference.
    err = float(jnp.max(jnp.abs(out - ref)))
    assert jnp.allclose(out, ref, rtol=5e-2, atol=5e-2), f"mismatch vs ref: {err}"
    print("KERNEL_OK")
</pallas_src>

<mosaic_0001>
module attributes {stable_mosaic.version = 11 : i64} {
  func.func @_sparse_attn_kernel(%arg0: i32, %arg1: memref<64x32xbf16, #tpu.memory_space<vmem>>, %arg2: memref<32x96xbf16, #tpu.memory_space<vmem>>, %arg3: memref<1x96xf32, #tpu.memory_space<vmem>>, %arg4: memref<32x32xbf16, #tpu.memory_space<vmem>>, %arg5: memref<1x32xf32, #tpu.memory_space<vmem>>, %arg6: memref<32x32xbf16, #tpu.memory_space<vmem>>, %arg7: memref<512x1xi32, #tpu.memory_space<vmem>>, %arg8: memref<512x1xi32, #tpu.memory_space<vmem>>, %arg9: memref<1x512xi32, #tpu.memory_space<vmem>>, %arg10: memref<64x32xf32, #tpu.memory_space<vmem>>, %arg11: memref<64x32xbf16, #tpu.memory_space<vmem>>, %arg12: memref<64x64xbf16, #tpu.memory_space<vmem>>, %arg13: memref<64x64xf32, #tpu.memory_space<vmem>>, %arg14: memref<1x32xf32, #tpu.memory_space<vmem>>) attributes {dimension_semantics = [#tpu.dimension_semantics<arbitrary>], iteration_bounds = array<i64: 2>, scalar_prefetch = 0 : i64, scratch_operands = 4 : i64, tpu.core_type = #tpu.core_type<tc>, window_params = [{pipeline_mode = #tpu.pipeline_mode<synchronous>, transform_indices = @transform_0, window_bounds = array<i64: 64, 32>}, {pipeline_mode = #tpu.pipeline_mode<synchronous>, transform_indices = @transform_1, window_bounds = array<i64: 32, 96>}, {pipeline_mode = #tpu.pipeline_mode<synchronous>, transform_indices = @transform_2, window_bounds = array<i64: 1, 96>}, {pipeline_mode = #tpu.pipeline_mode<synchronous>, transform_indices = @transform_3, window_bounds = array<i64: 32, 32>}, {pipeline_mode = #tpu.pipeline_mode<synchronous>, transform_indices = @transform_4, window_bounds = array<i64: 1, 32>}, {pipeline_mode = #tpu.pipeline_mode<synchronous>, transform_indices = @transform_5, window_bounds = array<i64: 32, 32>}, {transform_indices = @transform_6, window_bounds = array<i64: 512, 1>}, {transform_indices = @transform_7, window_bounds = array<i64: 512, 1>}, {transform_indices = @transform_8, window_bounds = array<i64: 1, 512>}, {pipeline_mode = #tpu.pipeline_mode<synchronous>, transform_indices = @transform_9, window_bounds = array<i64: 64, 32>}]} {
    %c0_i32 = arith.constant 0 : i32
    %0 = arith.cmpi eq, %arg0, %c0_i32 : i32
    %1 = arith.extui %0 : i1 to i32
    %c0_i32_0 = arith.constant 0 : i32
    %2 = arith.cmpi ne, %1, %c0_i32_0 : i32
    scf.if %2 {
      %c0_23 = arith.constant 0 : index
      %c0_24 = arith.constant 0 : index
      %49 = vector.load %arg1[%c0_23, %c0_24] : memref<64x32xbf16, #tpu.memory_space<vmem>>, vector<64x32xbf16>
      %c0_25 = arith.constant 0 : index
      %c0_26 = arith.constant 0 : index
      %50 = vector.load %arg2[%c0_25, %c0_26] : memref<32x96xbf16, #tpu.memory_space<vmem>>, vector<32x96xbf16>
      %cst_27 = arith.constant dense<0.000000e+00> : vector<64x96xf32>
      %51 = tpu.matmul %49, %50, %cst_27 {dimension_numbers = #tpu.dot_dimension_numbers<[1], [0], [0], [1], [0, 0, 1, 1], [], []>} : vector<64x32xbf16>, vector<32x96xbf16>, vector<64x96xf32> -> vector<64x96xf32>
      %c0_28 = arith.constant 0 : index
      %c0_29 = arith.constant 0 : index
      %52 = vector.load %arg3[%c0_28, %c0_29] : memref<1x96xf32, #tpu.memory_space<vmem>>, vector<1x96xf32>
      %53 = vector.broadcast %52 : vector<1x96xf32> to vector<64x96xf32>
      %54 = arith.addf %51, %53 : vector<64x96xf32>
      %55 = vector.extract_strided_slice %54 {offsets = [0, 0], sizes = [64, 32], strides = [1, 1]} : vector<64x96xf32> to vector<64x32xf32>
      %56 = vector.extract_strided_slice %54 {offsets = [0, 32], sizes = [64, 64], strides = [1, 1]} : vector<64x96xf32> to vector<64x64xf32>
      %57 = arith.truncf %55 : vector<64x32xf32> to vector<64x32xbf16>
      %c0_30 = arith.constant 0 : index
      %c0_31 = arith.constant 0 : index
      %58 = vector.load %arg11[%c0_30, %c0_31] : memref<64x32xbf16, #tpu.memory_space<vmem>>, vector<64x32xbf16>
      tpu.vector_store %arg11[%c0_30, %c0_31], %57 {strides = array<i32>} : memref<64x32xbf16, #tpu.memory_space<vmem>>, vector<64x32xbf16>,
      %59 = arith.truncf %56 : vector<64x64xf32> to vector<64x64xbf16>
      %c0_32 = arith.constant 0 : index
      %c0_33 = arith.constant 0 : index
      %60 = vector.load %arg12[%c0_32, %c0_33] : memref<64x64xbf16, #tpu.memory_space<vmem>>, vector<64x64xbf16>
      tpu.vector_store %arg12[%c0_32, %c0_33], %59 {strides = array<i32>} : memref<64x64xbf16, #tpu.memory_space<vmem>>, vector<64x64xbf16>,
      %cst_34 = arith.constant 0.000000e+00 : f32
      %61 = vector.broadcast %cst_34 : f32 to vector<64x64xf32>
      %c0_35 = arith.constant 0 : index
      %c0_36 = arith.constant 0 : index
      %62 = vector.load %arg13[%c0_35, %c0_36] : memref<64x64xf32, #tpu.memory_space<vmem>>, vector<64x64xf32>
      tpu.vector_store %arg13[%c0_35, %c0_36], %61 {strides = array<i32>} : memref<64x64xf32, #tpu.memory_space<vmem>>, vector<64x64xf32>,
      %63 = vector.extract_strided_slice %56 {offsets = [0, 0], sizes = [64, 32], strides = [1, 1]} : vector<64x64xf32> to vector<64x32xf32>
      %64 = arith.mulf %55, %55 : vector<64x32xf32>
      %65 = arith.truncf %64 : vector<64x32xf32> to vector<64x32xbf16>
      %c0_37 = arith.constant 0 : index
      %c0_38 = arith.constant 0 : index
      %66 = vector.load %arg6[%c0_37, %c0_38] : memref<32x32xbf16, #tpu.memory_space<vmem>>, vector<32x32xbf16>
      %cst_39 = arith.constant dense<0.000000e+00> : vector<64x32xf32>
      %67 = tpu.matmul %65, %66, %cst_39 {dimension_numbers = #tpu.dot_dimension_numbers<[1], [0], [0], [1], [0, 0, 1, 1], [], []>} : vector<64x32xbf16>, vector<32x32xbf16>, vector<64x32xf32> -> vector<64x32xf32>
      %68 = arith.mulf %63, %63 : vector<64x32xf32>
      %69 = arith.truncf %68 : vector<64x32xf32> to vector<64x32xbf16>
      %c0_40 = arith.constant 0 : index
      %c0_41 = arith.constant 0 : index
      %70 = vector.load %arg6[%c0_40, %c0_41] : memref<32x32xbf16, #tpu.memory_space<vmem>>, vector<32x32xbf16>
      %cst_42 = arith.constant dense<0.000000e+00> : vector<64x32xf32>
      %71 = tpu.matmul %69, %70, %cst_42 {dimension_numbers = #tpu.dot_dimension_numbers<[1], [0], [0], [1], [0, 0, 1, 1], [], []>} : vector<64x32xbf16>, vector<32x32xbf16>, vector<64x32xf32> -> vector<64x32xf32>
      %cst_43 = arith.constant dense<0xFF800000> : vector<32xf32>
      %72 = vector.multi_reduction <maximumf>, %67, %cst_43 [0] : vector<64x32xf32> to vector<32xf32>
      %73 = vector.shape_cast %72 : vector<32xf32> to vector<1x32xf32>
      %74 = math.sqrt %73 : vector<1x32xf32>
      %cst_44 = arith.constant dense<0xFF800000> : vector<32xf32>
      %75 = vector.multi_reduction <maximumf>, %71, %cst_44 [0] : vector<64x32xf32> to vector<32xf32>
      %76 = vector.shape_cast %75 : vector<32xf32> to vector<1x32xf32>
      %77 = math.sqrt %76 : vector<1x32xf32>
      %78 = arith.mulf %74, %77 : vector<1x32xf32>
      %cst_45 = arith.constant 0.353553385 : f32
      %79 = vector.broadcast %cst_45 : f32 to vector<1x32xf32>
      %80 = arith.mulf %78, %79 : vector<1x32xf32>
      %c0_46 = arith.constant 0 : index
      %c0_47 = arith.constant 0 : index
      %81 = vector.load %arg14[%c0_46, %c0_47] : memref<1x32xf32, #tpu.memory_space<vmem>>, vector<1x32xf32>
      tpu.vector_store %arg14[%c0_46, %c0_47], %80 {strides = array<i32>} : memref<1x32xf32, #tpu.memory_space<vmem>>, vector<1x32xf32>,
    } else {
    }
    %c0 = arith.constant 0 : index
    %c0_1 = arith.constant 0 : index
    %3 = vector.load %arg7[%c0, %c0_1] : memref<512x1xi32, #tpu.memory_space<vmem>>, vector<512x1xi32>
    %c0_2 = arith.constant 0 : index
    %c0_3 = arith.constant 0 : index
    %4 = vector.load %arg8[%c0_2, %c0_3] : memref<512x1xi32, #tpu.memory_space<vmem>>, vector<512x1xi32>
    %c0_4 = arith.constant 0 : index
    %c0_5 = arith.constant 0 : index
    %5 = vector.load %arg9[%c0_4, %c0_5] : memref<1x512xi32, #tpu.memory_space<vmem>>, vector<1x512xi32>
    %6 = tpu.iota {dimensions = array<i32: 1>} : vector<512x64xi32>
    %7 = tpu.iota {dimensions = array<i32: 0>} : vector<64x512xi32>
    %8 = vector.broadcast %3 : vector<512x1xi32> to vector<512x64xi32>
    %9 = arith.cmpi eq, %6, %8 : vector<512x64xi32>
    %10 = arith.extui %9 : vector<512x64xi1> to vector<512x64xi32>
    %11 = arith.sitofp %10 : vector<512x64xi32> to vector<512x64xf32>
    %12 = arith.truncf %11 : vector<512x64xf32> to vector<512x64xbf16>
    %13 = vector.broadcast %4 : vector<512x1xi32> to vector<512x64xi32>
    %14 = arith.cmpi eq, %6, %13 : vector<512x64xi32>
    %15 = arith.extui %14 : vector<512x64xi1> to vector<512x64xi32>
    %16 = arith.sitofp %15 : vector<512x64xi32> to vector<512x64xf32>
    %17 = arith.truncf %16 : vector<512x64xf32> to vector<512x64xbf16>
    %18 = vector.broadcast %5 : vector<1x512xi32> to vector<64x512xi32>
    %19 = arith.cmpi eq, %7, %18 : vector<64x512xi32>
    %20 = arith.extui %19 : vector<64x512xi1> to vector<64x512xi32>
    %21 = arith.sitofp %20 : vector<64x512xi32> to vector<64x512xf32>
    %22 = arith.truncf %21 : vector<64x512xf32> to vector<64x512xbf16>
    %c0_6 = arith.constant 0 : index
    %c0_7 = arith.constant 0 : index
    %23 = vector.load %arg11[%c0_6, %c0_7] : memref<64x32xbf16, #tpu.memory_space<vmem>>, vector<64x32xbf16>
    %cst = arith.constant dense<0.000000e+00> : vector<512x32xf32>
    %24 = tpu.matmul %17, %23, %cst {dimension_numbers = #tpu.dot_dimension_numbers<[1], [0], [0], [1], [0, 0, 1, 1], [], []>} : vector<512x64xbf16>, vector<64x32xbf16>, vector<512x32xf32> -> vector<512x32xf32>
    %c0_8 = arith.constant 0 : index
    %c0_9 = arith.constant 0 : index
    %25 = vector.load %arg12[%c0_8, %c0_9] : memref<64x64xbf16, #tpu.memory_space<vmem>>, vector<64x64xbf16>
    %cst_10 = arith.constant dense<0.000000e+00> : vector<512x64xf32>
    %26 = tpu.matmul %12, %25, %cst_10 {dimension_numbers = #tpu.dot_dimension_numbers<[1], [0], [0], [1], [0, 0, 1, 1], [], []>} : vector<512x64xbf16>, vector<64x64xbf16>, vector<512x64xf32> -> vector<512x64xf32>
    %27 = vector.extract_strided_slice %26 {offsets = [0, 0], sizes = [512, 32], strides = [1, 1]} : vector<512x64xf32> to vector<512x32xf32>
    %28 = vector.extract_strided_slice %26 {offsets = [0, 32], sizes = [512, 32], strides = [1, 1]} : vector<512x64xf32> to vector<512x32xf32>
    %29 = arith.mulf %24, %27 : vector<512x32xf32>
    %30 = arith.truncf %29 : vector<512x32xf32> to vector<512x32xbf16>
    %c0_11 = arith.constant 0 : index
    %c0_12 = arith.constant 0 : index
    %31 = vector.load %arg6[%c0_11, %c0_12] : memref<32x32xbf16, #tpu.memory_space<vmem>>, vector<32x32xbf16>
    %cst_13 = arith.constant dense<0.000000e+00> : vector<512x32xf32>
    %32 = tpu.matmul %30, %31, %cst_13 {dimension_numbers = #tpu.dot_dimension_numbers<[1], [0], [0], [1], [0, 0, 1, 1], [], []>} : vector<512x32xbf16>, vector<32x32xbf16>, vector<512x32xf32> -> vector<512x32xf32>
    %cst_14 = arith.constant 0.353553385 : f32
    %33 = vector.broadcast %cst_14 : f32 to vector<512x32xf32>
    %34 = arith.mulf %32, %33 : vector<512x32xf32>
    %c0_15 = arith.constant 0 : index
    %c0_16 = arith.constant 0 : index
    %35 = vector.load %arg14[%c0_15, %c0_16] : memref<1x32xf32, #tpu.memory_space<vmem>>, vector<1x32xf32>
    %36 = vector.broadcast %35 : vector<1x32xf32> to vector<512x32xf32>
    %37 = arith.subf %34, %36 : vector<512x32xf32>
    %38 = math.exp %37 : vector<512x32xf32>
    %39 = arith.mulf %28, %38 : vector<512x32xf32>
    %40 = tpu.concatenate %38, %39 in 1 : vector<512x32xf32>, vector<512x32xf32> -> vector<512x64xf32>
    %41 = arith.truncf %40 : vector<512x64xf32> to vector<512x64xbf16>
    %c0_17 = arith.constant 0 : index
    %c0_18 = arith.constant 0 : index
    %42 = vector.load %arg13[%c0_17, %c0_18] : memref<64x64xf32, #tpu.memory_space<vmem>>, vector<64x64xf32>
    %cst_19 = arith.constant dense<0.000000e+00> : vector<64x64xf32>
    %43 = tpu.matmul %22, %41, %cst_19 {dimension_numbers = #tpu.dot_dimension_numbers<[1], [0], [0], [1], [0, 0, 1, 1], [], []>} : vector<64x512xbf16>, vector<512x64xbf16>, vector<64x64xf32> -> vector<64x64xf32>
    %44 = arith.addf %42, %43 : vector<64x64xf32>
    %c0_20 = arith.constant 0 : index
    %c0_21 = arith.constant 0 : index
    %45 = vector.load %arg13[%c0_20, %c0_21] : memref<64x64xf32, #tpu.memory_space<vmem>>, vector<64x64xf32>
    tpu.vector_store %arg13[%c0_20, %c0_21], %44 {strides = array<i32>} : memref<64x64xf32, #tpu.memory_space<vmem>>, vector<64x64xf32>,
    %c1_i32 = arith.constant 1 : i32
    %46 = arith.cmpi eq, %arg0, %c1_i32 : i32
    %47 = arith.extui %46 : i1 to i32
    %c0_i32_22 = arith.constant 0 : i32
    %48 = arith.cmpi ne, %47, %c0_i32_22 : i32
    scf.if %48 {
      %c0_23 = arith.constant 0 : index
      %c0_24 = arith.constant 0 : index
      %49 = vector.load %arg13[%c0_23, %c0_24] : memref<64x64xf32, #tpu.memory_space<vmem>>, vector<64x64xf32>
      %50 = vector.extract_strided_slice %49 {offsets = [0, 0], sizes = [64, 32], strides = [1, 1]} : vector<64x64xf32> to vector<64x32xf32>
      %51 = vector.extract_strided_slice %49 {offsets = [0, 32], sizes = [64, 32], strides = [1, 1]} : vector<64x64xf32> to vector<64x32xf32>
      %cst_25 = arith.constant 0.000000e+00 : f32
      %52 = vector.broadcast %cst_25 : f32 to vector<64x32xf32>
      %53 = arith.cmpf ole, %50, %52 : vector<64x32xf32>
      %cst_26 = arith.constant 1.000000e+00 : f32
      %54 = vector.broadcast %cst_26 : f32 to vector<64x32xf32>
      %55 = arith.select %53, %54, %50 : vector<64x32xi1>, vector<64x32xf32>
      %56 = tpu.reciprocal %55 {approx = true} : vector<64x32xf32> -> vector<64x32xf32>
      %57 = arith.mulf %51, %56 : vector<64x32xf32>
      %58 = arith.truncf %57 : vector<64x32xf32> to vector<64x32xbf16>
      %c0_27 = arith.constant 0 : index
      %c0_28 = arith.constant 0 : index
      %59 = vector.load %arg4[%c0_27, %c0_28] : memref<32x32xbf16, #tpu.memory_space<vmem>>, vector<32x32xbf16>
      %cst_29 = arith.constant dense<0.000000e+00> : vector<64x32xf32>
      %60 = tpu.matmul %58, %59, %cst_29 {dimension_numbers = #tpu.dot_dimension_numbers<[1], [0], [0], [1], [0, 0, 1, 1], [], []>} : vector<64x32xbf16>, vector<32x32xbf16>, vector<64x32xf32> -> vector<64x32xf32>
      %c0_30 = arith.constant 0 : index
      %c0_31 = arith.constant 0 : index
      %61 = vector.load %arg5[%c0_30, %c0_31] : memref<1x32xf32, #tpu.memory_space<vmem>>, vector<1x32xf32>
      %62 = vector.broadcast %61 : vector<1x32xf32> to vector<64x32xf32>
      %63 = arith.addf %60, %62 : vector<64x32xf32>
      %c0_32 = arith.constant 0 : index
      %c0_33 = arith.constant 0 : index
      %64 = vector.load %arg10[%c0_32, %c0_33] : memref<64x32xf32, #tpu.memory_space<vmem>>, vector<64x32xf32>
      tpu.vector_store %arg10[%c0_32, %c0_33], %63 {strides = array<i32>} : memref<64x32xf32, #tpu.memory_space<vmem>>, vector<64x32xf32>,
    } else {
    }
    return
  }
  func.func @transform_0(%arg0: i32) -> (i32, i32) {
    %c0_i32 = arith.constant 0 : i32
    %c0_i32_0 = arith.constant 0 : i32
    %c0_i32_1 = arith.constant 0 : i32
    return %c0_i32, %c0_i32_0 : i32, i32
  }
  func.func @transform_1(%arg0: i32) -> (i32, i32) {
    %c0_i32 = arith.constant 0 : i32
    %c0_i32_0 = arith.constant 0 : i32
    %c0_i32_1 = arith.constant 0 : i32
    return %c0_i32, %c0_i32_0 : i32, i32
  }
  func.func @transform_2(%arg0: i32) -> (i32, i32) {
    %c0_i32 = arith.constant 0 : i32
    %c0_i32_0 = arith.constant 0 : i32
    %c0_i32_1 = arith.constant 0 : i32
    return %c0_i32, %c0_i32_0 : i32, i32
  }
  func.func @transform_3(%arg0: i32) -> (i32, i32) {
    %c0_i32 = arith.constant 0 : i32
    %c0_i32_0 = arith.constant 0 : i32
    %c0_i32_1 = arith.constant 0 : i32
    return %c0_i32, %c0_i32_0 : i32, i32
  }
  func.func @transform_4(%arg0: i32) -> (i32, i32) {
    %c0_i32 = arith.constant 0 : i32
    %c0_i32_0 = arith.constant 0 : i32
    %c0_i32_1 = arith.constant 0 : i32
    return %c0_i32, %c0_i32_0 : i32, i32
  }
  func.func @transform_5(%arg0: i32) -> (i32, i32) {
    %c0_i32 = arith.constant 0 : i32
    %c0_i32_0 = arith.constant 0 : i32
    %c0_i32_1 = arith.constant 0 : i32
    return %c0_i32, %c0_i32_0 : i32, i32
  }
  func.func @transform_6(%arg0: i32) -> (i32, i32) {
    %c0_i32 = arith.constant 0 : i32
    %c0_i32_0 = arith.constant 0 : i32
    return %arg0, %c0_i32 : i32, i32
  }
  func.func @transform_7(%arg0: i32) -> (i32, i32) {
    %c0_i32 = arith.constant 0 : i32
    %c0_i32_0 = arith.constant 0 : i32
    return %arg0, %c0_i32 : i32, i32
  }
  func.func @transform_8(%arg0: i32) -> (i32, i32) {
    %c0_i32 = arith.constant 0 : i32
    %c0_i32_0 = arith.constant 0 : i32
    return %c0_i32, %arg0 : i32, i32
  }
  func.func @transform_9(%arg0: i32) -> (i32, i32) {
    %c0_i32 = arith.constant 0 : i32
    %c0_i32_0 = arith.constant 0 : i32
    %c0_i32_1 = arith.constant 0 : i32
    return %c0_i32, %c0_i32_0 : i32, i32
  }
}

</mosaic_0001>

<llo_original>
// kernel: tpu_custom_call.1
$region0: #{tpu_custom_call.1}
  #allocation0 [shape = 'u32[]', space=smem, size = 0x4, offset = 0x4, fixed_abs, tag = 'smem constant byte address 0x4 - core index']
  #allocation1 [shape = 'u32[144,128]{1,0:T(1,128)}', space=vmem, size = 0x12000, scoped, tag = 'internal scratch']
  #allocation2 [shape = 'bf16[64,32]{1,0:T(16,128)(2,1)}', space=vmem, size = 0x4000, scoped, tag = 'scratch operand']
  #allocation3 [shape = 'bf16[64,64]{1,0:T(16,128)(2,1)}', space=vmem, size = 0x4000, scoped, tag = 'scratch operand']
  #allocation4 [shape = 'f32[64,64]{1,0:T(8,128)}', space=vmem, size = 0x8000, scoped, tag = 'scratch operand']
  #allocation5 [shape = 'f32[1,32]{1,0:T(1,128)}', space=vmem, size = 0x200, scoped, tag = 'scratch operand']
  %s0 = inlined_call_operand.vmem [shape: bf16[64,32], index: 0, kind: input, shape index: {}]
  %s1 = inlined_call_operand.vmem [shape: bf16[32,96], index: 1, kind: input, shape index: {}]
  %s2 = inlined_call_operand.vmem [shape: f32[1,96], index: 2, kind: input, shape index: {}]
  %s3 = inlined_call_operand.vmem [shape: bf16[32,32], index: 3, kind: input, shape index: {}]
  %s4 = inlined_call_operand.vmem [shape: f32[1,32], index: 4, kind: input, shape index: {}]
  %s5 = inlined_call_operand.vmem [shape: bf16[32,32], index: 5, kind: input, shape index: {}]
  %s6 = inlined_call_operand.vmem [shape: s32[1024,1], index: 6, kind: input, shape index: {}]
  %s7 = inlined_call_operand.vmem [shape: s32[1024,1], index: 7, kind: input, shape index: {}]
  %s8 = inlined_call_operand.vmem [shape: s32[1,1024], index: 8, kind: input, shape index: {}]
  %s9 = inlined_call_operand.vmem [shape: f32[64,32], index: 9, kind: output, shape index: {}]
  %s10 = sld [smem:[#allocation0]]
  $region77: #{tpu_custom_call.1} parent=0
    _
  %s12 = ssub.s32 1, %s10
  %s13 = scalar_select 0, %s12, %s10
  loop: start=0, step=1, limit=4
  $region2: #{tpu_custom_call.1} parent=0 // loop_pre_header
    _
  $region3: #{tpu_custom_call.1} parent=0 // loop_header
    %s15 = sphi 0, %s19
    %p16 = scmp.ge.s32.totalorder %s15, 4
    %s23 = sphi 0, %s23
    %s25 = sphi 0, %s23
    %s26 = sphi 0, %s25
    %s40 = sphi 0, %s26
    %s44 = sphi 0, %s44
    %s46 = sphi 0, %s44
    %s47 = sphi 0, %s46
    %s61 = sphi 0, %s47
    %s65 = sphi 0, %s65
    %s67 = sphi 0, %s65
    %s68 = sphi 0, %s67
    %s82 = sphi 0, %s68
    %s86 = sphi 0, %s86
    %s88 = sphi 0, %s86
    %s89 = sphi 0, %s88
    %s103 = sphi 0, %s89
    %s107 = sphi 0, %s107
    %s109 = sphi 0, %s107
    %s110 = sphi 0, %s109
    %s124 = sphi 0, %s110
    %s128 = sphi 0, %s128
    %s130 = sphi 0, %s128
    %s131 = sphi 0, %s130
    %s145 = sphi 0, %s131
    %s151 = sphi 0, %s153
    %s154 = sphi 0, %s151
    %s155 = sphi 0, %s154
    %s171 = sphi 0, %s155
    %s177 = sphi 0, %s179
    %s180 = sphi 0, %s177
    %s181 = sphi 0, %s180
    %s197 = sphi 0, %s181
    %s203 = sphi 0, %s205
    %s206 = sphi 0, %s203
    %s207 = sphi 0, %s206
    %s223 = sphi 0, %s207
    %s227 = sphi 0, %s227
    %s229 = sphi 0, %s227
    %s230 = sphi 0, %s229
    %s244 = sphi 0, %s230
  $region4: #{tpu_custom_call.1} parent=0 // loop_header_branch
    %18 = sbr.rel (%p16) target = $region8
  $region5: #{tpu_custom_call.1} parent=0 // loop_body
    %s20 = ssub.s32 %s15, 1
    %s21 = ssub.s32 %s15, 2
    %s22 = sadd.s32 %s15, 1
    %s24 = sadd.s32 %s23, 1
    %p27 = scmp.eq.s32.totalorder %s15, 1
    %p28 = scmp.ne.s32.totalorder %s23, %s25
    %p29 = scmp.eq.s32.totalorder %s15, 0
    %p30 = por %p28, %p29
    %p31 = scmp.ne.s32.totalorder %s23, %s25
    %p32 = scmp.eq.s32.totalorder %s20, 1
    %p33 = por %p31, %p32
    %p34 = scmp.ne.s32.totalorder %s25, %s26
    %p35 = scmp.eq.s32.totalorder %s20, 0
    %p36 = por %p34, %p35
    %p37 = scmp.ne.s32.totalorder %s25, %s26
    %p38 = scmp.eq.s32.totalorder %s21, 1
    %p39 = por %p37, %p38
    %p41 = scmp.ne.s32.totalorder %s26, %s40
    %p42 = scmp.eq.s32.totalorder %s21, 0
    %p43 = por %p41, %p42
    %s45 = sadd.s32 %s44, 1
    %p48 = scmp.eq.s32.totalorder %s15, 1
    %p49 = scmp.ne.s32.totalorder %s44, %s46
    %p50 = scmp.eq.s32.totalorder %s15, 0
    %p51 = por %p49, %p50
    %p52 = scmp.ne.s32.totalorder %s44, %s46
    %p53 = scmp.eq.s32.totalorder %s20, 1
    %p54 = por %p52, %p53
    %p55 = scmp.ne.s32.totalorder %s46, %s47
    %p56 = scmp.eq.s32.totalorder %s20, 0
    %p57 = por %p55, %p56
    %p58 = scmp.ne.s32.totalorder %s46, %s47
    %p59 = scmp.eq.s32.totalorder %s21, 1
    %p60 = por %p58, %p59
    %p62 = scmp.ne.s32.totalorder %s47, %s61
    %p63 = scmp.eq.s32.totalorder %s21, 0
    %p64 = por %p62, %p63
    %s66 = sadd.s32 %s65, 1
    %p69 = scmp.eq.s32.totalorder %s15, 1
    %p70 = scmp.ne.s32.totalorder %s65, %s67
    %p71 = scmp.eq.s32.totalorder %s15, 0
    %p72 = por %p70, %p71
    %p73 = scmp.ne.s32.totalorder %s65, %s67
    %p74 = scmp.eq.s32.totalorder %s20, 1
    %p75 = por %p73, %p74
    %p76 = scmp.ne.s32.totalorder %s67, %s68
    %p77 = scmp.eq.s32.totalorder %s20, 0
    %p78 = por %p76, %p77
    %p79 = scmp.ne.s32.totalorder %s67, %s68
    %p80 = scmp.eq.s32.totalorder %s21, 1
    %p81 = por %p79, %p80
    %p83 = scmp.ne.s32.totalorder %s68, %s82
    %p84 = scmp.eq.s32.totalorder %s21, 0
    %p85 = por %p83, %p84
    %s87 = sadd.s32 %s86, 1
    %p90 = scmp.eq.s32.totalorder %s15, 1
    %p91 = scmp.ne.s32.totalorder %s86, %s88
    %p92 = scmp.eq.s32.totalorder %s15, 0
    %p93 = por %p91, %p92
    %p94 = scmp.ne.s32.totalorder %s86, %s88
    %p95 = scmp.eq.s32.totalorder %s20, 1
    %p96 = por %p94, %p95
    %p97 = scmp.ne.s32.totalorder %s88, %s89
    %p98 = scmp.eq.s32.totalorder %s20, 0
    %p99 = por %p97, %p98
    %p100 = scmp.ne.s32.totalorder %s88, %s89
    %p101 = scmp.eq.s32.totalorder %s21, 1
    %p102 = por %p100, %p101
    %p104 = scmp.ne.s32.totalorder %s89, %s103
    %p105 = scmp.eq.s32.totalorder %s21, 0
    %p106 = por %p104, %p105
    %s108 = sadd.s32 %s107, 1
    %p111 = scmp.eq.s32.totalorder %s15, 1
    %p112 = scmp.ne.s32.totalorder %s107, %s109
    %p113 = scmp.eq.s32.totalorder %s15, 0
    %p114 = por %p112, %p113
    %p115 = scmp.ne.s32.totalorder %s107, %s109
    %p116 = scmp.eq.s32.totalorder %s20, 1
    %p117 = por %p115, %p116
    %p118 = scmp.ne.s32.totalorder %s109, %s110
    %p119 = scmp.eq.s32.totalorder %s20, 0
    %p120 = por %p118, %p119
    %p121 = scmp.ne.s32.totalorder %s109, %s110
    %p122 = scmp.eq.s32.totalorder %s21, 1
    %p123 = por %p121, %p122
    %p125 = scmp.ne.s32.totalorder %s110, %s124
    %p126 = scmp.eq.s32.totalorder %s21, 0
    %p127 = por %p125, %p126
    %s129 = sadd.s32 %s128, 1
    %p132 = scmp.eq.s32.totalorder %s15, 1
    %p133 = scmp.ne.s32.totalorder %s128, %s130
    %p134 = scmp.eq.s32.totalorder %s15, 0
    %p135 = por %p133, %p134
    %p136 = scmp.ne.s32.totalorder %s128, %s130
    %p137 = scmp.eq.s32.totalorder %s20, 1
    %p138 = por %p136, %p137
    %p139 = scmp.ne.s32.totalorder %s130, %s131
    %p140 = scmp.eq.s32.totalorder %s20, 0
    %p141 = por %p139, %p140
    %p142 = scmp.ne.s32.totalorder %s130, %s131
    %p143 = scmp.eq.s32.totalorder %s21, 1
    %p144 = por %p142, %p143
    %p146 = scmp.ne.s32.totalorder %s131, %s145
    %p147 = scmp.eq.s32.totalorder %s21, 0
    %p148 = por %p146, %p147
    %s149 = ssub.s32 %s15, %s22
    %p150 = scmp.eq.s32.totalorder %s149, 0
    %s152 = sadd.s32 %s151, 1
    %s153 = scalar_select %p150, %s151, %s152
    %p156 = pneg %p150
    %p157 = scmp.eq.s32.totalorder %s15, 1
    %p158 = por %p156, %p157
    %p159 = scmp.ne.s32.totalorder %s151, %s154
    %p160 = scmp.eq.s32.totalorder %s15, 0
    %p161 = por %p159, %p160
    %p162 = scmp.ne.s32.totalorder %s151, %s154
    %p163 = scmp.eq.s32.totalorder %s20, 1
    %p164 = por %p162, %p163
    %p165 = scmp.ne.s32.totalorder %s154, %s155
    %p166 = scmp.eq.s32.totalorder %s20, 0
    %p167 = por %p165, %p166
    %p168 = scmp.ne.s32.totalorder %s154, %s155
    %p169 = scmp.eq.s32.totalorder %s21, 1
    %p170 = por %p168, %p169
    %p172 = scmp.ne.s32.totalorder %s155, %s171
    %p173 = scmp.eq.s32.totalorder %s21, 0
    %p174 = por %p172, %p173
    %s175 = ssub.s32 %s15, %s22
    %p176 = scmp.eq.s32.totalorder %s175, 0
    %s178 = sadd.s32 %s177, 1
    %s179 = scalar_select %p176, %s177, %s178
    %p182 = pneg %p176
    %p183 = scmp.eq.s32.totalorder %s15, 1
    %p184 = por %p182, %p183
    %p185 = scmp.ne.s32.totalorder %s177, %s180
    %p186 = scmp.eq.s32.totalorder %s15, 0
    %p187 = por %p185, %p186
    %p188 = scmp.ne.s32.totalorder %s177, %s180
    %p189 = scmp.eq.s32.totalorder %s20, 1
    %p190 = por %p188, %p189
    %p191 = scmp.ne.s32.totalorder %s180, %s181
    %p192 = scmp.eq.s32.totalorder %s20, 0
    %p193 = por %p191, %p192
    %p194 = scmp.ne.s32.totalorder %s180, %s181
    %p195 = scmp.eq.s32.totalorder %s21, 1
    %p196 = por %p194, %p195
    %p198 = scmp.ne.s32.totalorder %s181, %s197
    %p199 = scmp.eq.s32.totalorder %s21, 0
    %p200 = por %p198, %p199
    %s201 = ssub.s32 %s15, %s22
    %p202 = scmp.eq.s32.totalorder %s201, 0
    %s204 = sadd.s32 %s203, 1
    %s205 = scalar_select %p202, %s203, %s204
    %p208 = pneg %p202
    %p209 = scmp.eq.s32.totalorder %s15, 1
    %p210 = por %p208, %p209
    %p211 = scmp.ne.s32.totalorder %s203, %s206
    %p212 = scmp.eq.s32.totalorder %s15, 0
    %p213 = por %p211, %p212
    %p214 = scmp.ne.s32.totalorder %s203, %s206
    %p215 = scmp.eq.s32.totalorder %s20, 1
    %p216 = por %p214, %p215
    %p217 = scmp.ne.s32.totalorder %s206, %s207
    %p218 = scmp.eq.s32.totalorder %s20, 0
    %p219 = por %p217, %p218
    %p220 = scmp.ne.s32.totalorder %s206, %s207
    %p221 = scmp.eq.s32.totalorder %s21, 1
    %p222 = por %p220, %p221
    %p224 = scmp.ne.s32.totalorder %s207, %s223
    %p225 = scmp.eq.s32.totalorder %s21, 0
    %p226 = por %p224, %p225
    %s228 = sadd.s32 %s227, 1
    %p231 = scmp.eq.s32.totalorder %s15, 1
    %p232 = scmp.ne.s32.totalorder %s227, %s229
    %p233 = scmp.eq.s32.totalorder %s15, 0
    %p234 = por %p232, %p233
    %p235 = scmp.ne.s32.totalorder %s227, %s229
    %p236 = scmp.eq.s32.totalorder %s20, 1
    %p237 = por %p235, %p236
    %p238 = scmp.ne.s32.totalorder %s229, %s230
    %p239 = scmp.eq.s32.totalorder %s20, 0
    %p240 = por %p238, %p239
    %p241 = scmp.ne.s32.totalorder %s229, %s230
    %p242 = scmp.eq.s32.totalorder %s21, 1
    %p243 = por %p241, %p242
    %p245 = scmp.ne.s32.totalorder %s230, %s244
    %p246 = scmp.eq.s32.totalorder %s21, 0
    %p247 = por %p245, %p246
    %p248 = scmp.le.s32.totalorder 1, %s15
    %p249 = scmp.lt.s32.totalorder %s15, 3
    %p250 = pnand %p248, %p249
    %p251 = pneg %p250
    // Predicated region
    $region9: #{tpu_custom_call.1} parent=5 // pred_check
      _
    $region10: #{tpu_custom_call.1} parent=5 // pred_check_branch
      %253 = sbr.rel (%p250) target = $region12
    $region11: #{tpu_custom_call.1} parent=5 // pred_region
      %s254 = ssub.s32 %s15, 1
      // Predicated region
      $region13: #{tpu_custom_call.1} parent=11 // pred_check
        %p255 = pneg %p36
      $region14: #{tpu_custom_call.1} parent=11 // pred_check_branch
        %257 = sbr.rel (%p255) target = $region16
      $region15: #{tpu_custom_call.1} parent=11 // pred_region
        _
      $region16: #{tpu_custom_call.1} parent=11 // pred_fallthru
        _
      // Predicated region
      $region17: #{tpu_custom_call.1} parent=11 // pred_check
        %p258 = pneg %p57
      $region18: #{tpu_custom_call.1} parent=11 // pred_check_branch
        %260 = sbr.rel (%p258) target = $region20
      $region19: #{tpu_custom_call.1} parent=11 // pred_region
        _
      $region20: #{tpu_custom_call.1} parent=11 // pred_fallthru
        _
      // Predicated region
      $region21: #{tpu_custom_call.1} parent=11 // pred_check
        %p261 = pneg %p78
      $region22: #{tpu_custom_call.1} parent=11 // pred_check_branch
        %263 = sbr.rel (%p261) target = $region24
      $region23: #{tpu_custom_call.1} parent=11 // pred_region
        _
      $region24: #{tpu_custom_call.1} parent=11 // pred_fallthru
        _
      // Predicated region
      $region25: #{tpu_custom_call.1} parent=11 // pred_check
        %p264 = pneg %p99
      $region26: #{tpu_custom_call.1} parent=11 // pred_check_branch
        %266 = sbr.rel (%p264) target = $region28
      $region27: #{tpu_custom_call.1} parent=11 // pred_region
        _
      $region28: #{tpu_custom_call.1} parent=11 // pred_fallthru
        _
      // Predicated region
      $region29: #{tpu_custom_call.1} parent=11 // pred_check
        %p267 = pneg %p120
      $region30: #{tpu_custom_call.1} parent=11 // pred_check_branch
        %269 = sbr.rel (%p267) target = $region32
      $region31: #{tpu_custom_call.1} parent=11 // pred_region
        _
      $region32: #{tpu_custom_call.1} parent=11 // pred_fallthru
        _
      // Predicated region
      $region33: #{tpu_custom_call.1} parent=11 // pred_check
        %p270 = pneg %p141
      $region34: #{tpu_custom_call.1} parent=11 // pred_check_branch
        %272 = sbr.rel (%p270) target = $region36
      $region35: #{tpu_custom_call.1} parent=11 // pred_region
        _
      $region36: #{tpu_custom_call.1} parent=11 // pred_fallthru
        _
    $region12: #{tpu_custom_call.1} parent=5 // pred_fallthru
      _
    %p273 = scmp.lt.s32.totalorder %s15, 2
    // Predicated region
    $region37: #{tpu_custom_call.1} parent=5 // pred_check
      %p274 = pneg %p273
    $region38: #{tpu_custom_call.1} parent=5 // pred_check_branch
      %276 = sbr.rel (%p274) target = $region40
    $region39: #{tpu_custom_call.1} parent=5 // pred_region
      // Predicated region
      $region41: #{tpu_custom_call.1} parent=39 // pred_check
        %p277 = pneg %p161
      $region42: #{tpu_custom_call.1} parent=39 // pred_check_branch
        %279 = sbr.rel (%p277) target = $region44
      $region43: #{tpu_custom_call.1} parent=39 // pred_region
        %s280 = smul.u32 64, %s15
        %p281 = scmp.lt.s32.totalorder %s280, 127
        %s282 = scalar_select %p281, %s280, 127
        %s283 = smul.addr %s282, 8
        %s284 = scalar_lea.vmem %s6, %s283
        %s285 = smul.u32 64, %s15
      $region44: #{tpu_custom_call.1} parent=39 // pred_fallthru
        _
      // Predicated region
      $region45: #{tpu_custom_call.1} parent=39 // pred_check
        %p286 = pneg %p187
      $region46: #{tpu_custom_call.1} parent=39 // pred_check_branch
        %288 = sbr.rel (%p286) target = $region48
      $region47: #{tpu_custom_call.1} parent=39 // pred_region
        %s289 = smul.u32 64, %s15
        %p290 = scmp.lt.s32.totalorder %s289, 127
        %s291 = scalar_select %p290, %s289, 127
        %s292 = smul.addr %s291, 8
        %s293 = scalar_lea.vmem %s7, %s292
        %s294 = smul.u32 64, %s15
      $region48: #{tpu_custom_call.1} parent=39 // pred_fallthru
        _
      // Predicated region
      $region49: #{tpu_custom_call.1} parent=39 // pred_check
        %p295 = pneg %p213
      $region50: #{tpu_custom_call.1} parent=39 // pred_check_branch
        %297 = sbr.rel (%p295) target = $region52
      $region51: #{tpu_custom_call.1} parent=39 // pred_region
        %s298 = smul.u32 4, %s15
        %p299 = scmp.lt.s32.totalorder %s298, 7
        %s300 = scalar_select %p299, %s298, 7
        %s301 = scalar_lea.vmem %s8, %s300
        %s302 = smul.u32 4, %s15
      $region52: #{tpu_custom_call.1} parent=39 // pred_fallthru
        _
    $region40: #{tpu_custom_call.1} parent=5 // pred_fallthru
      _
    %p303 = scmp.le.s32.totalorder 1, %s15
    %p304 = scmp.lt.s32.totalorder %s15, 3
    %p305 = pnand %p303, %p304
    %p306 = pneg %p305
    // Predicated region
    $region53: #{tpu_custom_call.1} parent=5 // pred_check
      _
    $region54: #{tpu_custom_call.1} parent=5 // pred_check_branch
      %308 = sbr.rel (%p305) target = $region56
    $region55: #{tpu_custom_call.1} parent=5 // pred_region
      %s309 = ssub.s32 %s15, 1
      %p310 = pneg %p36
      %p311 = pneg %p33
      %p312 = pneg %p57
      %p313 = pneg %p54
      %p314 = pneg %p78
      %p315 = pneg %p75
      %p316 = pneg %p99
      %p317 = pneg %p96
      %p318 = pneg %p120
      %p319 = pneg %p117
      %p320 = pneg %p141
      %p321 = pneg %p138
      %s322 = smul.u32 64, %s20
      %p323 = scmp.lt.s32.totalorder %s322, 127
      %s324 = scalar_select %p323, %s322, 127
      %s325 = smul.addr %s324, 8
      %s326 = scalar_lea.vmem %s6, %s325
      %p327 = pneg %p167
      %p328 = pneg %p164
      %s329 = smul.u32 64, %s20
      %p330 = scmp.lt.s32.totalorder %s329, 127
      %s331 = scalar_select %p330, %s329, 127
      %s332 = smul.addr %s331, 8
      %s333 = scalar_lea.vmem %s7, %s332
      %p334 = pneg %p193
      %p335 = pneg %p190
      %s336 = smul.u32 4, %s20
      %p337 = scmp.lt.s32.totalorder %s336, 7
      %s338 = scalar_select %p337, %s336, 7
      %s339 = scalar_lea.vmem %s8, %s338
      %p340 = pneg %p219
      %p341 = pneg %p216
      %p342 = pneg %p240
      %p343 = pneg %p237
      %s344 = smul.u32 64, %s20
      %p345 = scmp.lt.s32.totalorder %s344, 127
      %s346 = scalar_select %p345, %s344, 127
      %s347 = smul.addr %s346, 8
      %s348 = scalar_lea.vmem %s6, %s347
      %s349 = smul.u32 64, %s20
      %s350 = smul.u32 64, %s20
      %p351 = scmp.lt.s32.totalorder %s350, 127
      %s352 = scalar_select %p351, %s350, 127
      %s353 = smul.addr %s352, 8
      %s354 = scalar_lea.vmem %s7, %s353
      %s355 = smul.u32 64, %s20
      %s356 = smul.u32 4, %s20
      %p357 = scmp.lt.s32.totalorder %s356, 7
      %s358 = scalar_select %p357, %s356, 7
      %s359 = scalar_lea.vmem %s8, %s358
      %s360 = smul.u32 4, %s20
      %p362 = scmp.eq.s32.totalorder %s20, 0
      // Predicated region
      $region57: #{tpu_custom_call.1} parent=55 // pred_check
        %p363 = pneg %p362
      $region58: #{tpu_custom_call.1} parent=55 // pred_check_branch
        %365 = sbr.rel (%p363) target = $region60
      $region59: #{tpu_custom_call.1} parent=55 // pred_region
        %v366 = vld [vmem:[%s0] sm:$0xf]
        %v367 = vld [vmem:[%s0 + $0x4] sm:$0xf]
        %v368 = vld [vmem:[%s0 + $0x8] sm:$0xf]
        %v369 = vld [vmem:[%s0 + $0xc] sm:$0xf]
        %v370 = vld [vmem:[%s0 + $0x10] sm:$0xf]
        %v371 = vld [vmem:[%s0 + $0x14] sm:$0xf]
        %v372 = vld [vmem:[%s0 + $0x18] sm:$0xf]
        %v373 = vld [vmem:[%s0 + $0x1c] sm:$0xf]
        %v374 = vld [vmem:[%s1] sm:$0xf]
        %v375 = vld [vmem:[%s1 + $0x4] sm:$0xf]
        %v376 = vld [vmem:[%s1 + $0x8] sm:$0xf]
        %v377 = vld [vmem:[%s1 + $0xc] sm:$0xf]
        %v378 = vld [vmem:[%s2] sm:$0x1]
        %v380 = vlaneseq
        %v381 = vshrl.u32 %v380, 7
        %v382 = vsub.s32 0, %v381
        %v383 = vrot.slane %v378, %v382
        %v393 = vunpack.c.l.b16 %v366
        %v394 = vunpack.c.l.b16 %v367
        %v395 = vunpack.c.l.b16 %v368
        %v396 = vunpack.c.l.b16 %v369
        %v397 = vunpack.c.l.b16 %v370
        %v398 = vunpack.c.l.b16 %v371
        %v399 = vunpack.c.l.b16 %v372
        %v400 = vunpack.c.l.b16 %v373
        %v401 = vpack.c.b16 %v394, %v393
        %v402 = vpack.c.b16 %v396, %v395
        %v403 = vpack.c.b16 %v398, %v397
        %v404 = vpack.c.b16 %v400, %v399
        %v409 = vunpack.c.l.b16 %v374
        %v410 = vunpack.c.l.b16 %v375
        %v411 = vunpack.c.l.b16 %v376
        %v412 = vunpack.c.l.b16 %v377
        %v413 = vpack.c.b16 %v410, %v409
        %v414 = vpack.c.b16 %v412, %v411
        %vm417 = vcmask 261120
        %v419 = vsel %vm417, %v401, 0
        %v422 = vsel %vm417, %v402, 0
        %v425 = vsel %vm417, %v403, 0
        %v428 = vsel %vm417, %v404, 0
        %430 = vmatprep.subr.bf16.mxu0 0
        %431 = vmatpush1.bf16.msra.mxu0 %v413
        %432 = vmatprep.subr.bf16.mxu0 0
        %433 = vmatpush1.bf16.msra.mxu0 %v414
        %434 = vmatprep.subr.bf16.mxu0 0
        %435 = vmatpush1.bf16.msra.mxu0 0
        %436 = vmatprep.subr.bf16.mxu0 0
        %437 = vmatpush1.bf16.msra.mxu0 0
        %438 = vmatprep.subr.bf16.mxu0 0
        %439 = vmatpush1.bf16.msra.mxu0 0
        %440 = vmatprep.subr.bf16.mxu0 0
        %441 = vmatpush1.bf16.msra.mxu0 0
        %442 = vmatprep.subr.bf16.mxu0 0
        %443 = vmatpush1.bf16.msra.mxu0 0
        %444 = vmatprep.subr.bf16.mxu0 0
        %445 = vmatpush1.bf16.msra.mxu0 0
        %446 = vmatprep.subr.bf16.mxu0 0
        %447 = vmatpush1.bf16.msra.mxu0 0
        %448 = vmatprep.subr.bf16.mxu0 0
        %449 = vmatpush1.bf16.msra.mxu0 0
        %450 = vmatprep.subr.bf16.mxu0 0
        %451 = vmatpush1.bf16.msra.mxu0 0
        %452 = vmatprep.subr.bf16.mxu0 0
        %453 = vmatpush1.bf16.msra.mxu0 0
        %454 = vmatprep.subr.bf16.mxu0 0
        %455 = vmatpush1.bf16.msra.mxu0 0
        %456 = vmatprep.subr.bf16.mxu0 0
        %457 = vmatpush1.bf16.msra.mxu0 0
        %458 = vmatprep.subr.bf16.mxu0 0
        %459 = vmatpush1.bf16.msra.mxu0 0
        %460 = vmatprep.subr.bf16.mxu0 0
        %461 = vmatpush1.bf16.msra.mxu0 0
        %462 = vmatprep.mubr.bf16.mxu0 0
        %463 = vmatmul.mubr.bf16.gmra.mrb[0].mxu0 %v419
        %v464 = vpop.f32.mrb[0].mxu0
        %v465 = vadd.f32 %v383, %v464
        %v466 = vpop.f32.mrb[0].mxu0
        %v467 = vpop.f32.mrb[0].mxu0
        %v468 = vadd.f32 %v383, %v467
        %v469 = vpop.f32.mrb[0].mxu0
        %470 = vmatprep.mubr.bf16.mxu0 0
        %471 = vmatmul.mubr.bf16.gmra.mrb[0].mxu0 %v422
        %v472 = vpop.f32.mrb[0].mxu0
        %v473 = vadd.f32 %v383, %v472
        %v474 = vpop.f32.mrb[0].mxu0
        %v475 = vpop.f32.mrb[0].mxu0
        %v476 = vadd.f32 %v383, %v475
        %v477 = vpop.f32.mrb[0].mxu0
        %478 = vmatprep.mubr.bf16.mxu0 0
        %479 = vmatmul.mubr.bf16.gmra.mrb[0].mxu0 %v425
        %v480 = vpop.f32.mrb[0].mxu0
        %v481 = vadd.f32 %v383, %v480
        %v482 = vpop.f32.mrb[0].mxu0
        %v483 = vpop.f32.mrb[0].mxu0
        %v484 = vadd.f32 %v383, %v483
        %v485 = vpop.f32.mrb[0].mxu0
        %486 = vmatprep.mubr.bf16.mxu0 0
        %487 = vmatmul.mubr.bf16.gmra.mrb[0].mxu0 %v428
        %v488 = vpop.f32.mrb[0].mxu0
        %v489 = vadd.f32 %v383, %v488
        %v490 = vpop.f32.mrb[0].mxu0
        %v491 = vpop.f32.mrb[0].mxu0
        %v492 = vadd.f32 %v383, %v491
        %v493 = vpop.f32.mrb[0].mxu0
        %494 = vdwg.mxu0
        %v495 = vpack.c.bf16 %v468, %v465
        %v496 = vpack.c.bf16 %v476, %v473
        %v497 = vpack.c.bf16 %v484, %v481
        %v498 = vpack.c.bf16 %v492, %v489
        %499 = vst.msk [vmem:[#allocation2] sm:$0xff] %vm417, %v495
        %500 = vst.msk [vmem:[#allocation2 + $0x8] sm:$0xff] %vm417, %v496
        %501 = vst.msk [vmem:[#allocation2 + $0x10] sm:$0xff] %vm417, %v497
        %502 = vst.msk [vmem:[#allocation2 + $0x18] sm:$0xff] %vm417, %v498
        %507 = vrot.lane.b32.xlu0 %v495, 96
        %v508 = vpop.permute.xlu0 %507
        %509 = vrot.lane.b32.xlu0 %v496, 96
        %v510 = vpop.permute.xlu0 %509
        %511 = vrot.lane.b32.xlu0 %v497, 96
        %v512 = vpop.permute.xlu0 %511
        %513 = vrot.lane.b32.xlu0 %v498, 96
        %v514 = vpop.permute.xlu0 %513
        %vm519 = vcmask 523264
        %520 = vst.msk [vmem:[#allocation3] sm:$0xff] %vm519, %v508
        %521 = vst.msk [vmem:[#allocation3 + $0x8] sm:$0xff] %vm519, %v510
        %522 = vst.msk [vmem:[#allocation3 + $0x10] sm:$0xff] %vm519, %v512
        %523 = vst.msk [vmem:[#allocation3 + $0x18] sm:$0xff] %vm519, %v514
        %524 = vst.msk [vmem:[#allocation4] sm:$0xff] %vm519, 0.0
        %525 = vst.msk [vmem:[#allocation4 + $0x8] sm:$0xff] %vm519, 0.0
        %526 = vst.msk [vmem:[#allocation4 + $0x10] sm:$0xff] %vm519, 0.0
        %527 = vst.msk [vmem:[#allocation4 + $0x18] sm:$0xff] %vm519, 0.0
        %528 = vst.msk [vmem:[#allocation4 + $0x20] sm:$0xff] %vm519, 0.0
        %529 = vst.msk [vmem:[#allocation4 + $0x28] sm:$0xff] %vm519, 0.0
        %530 = vst.msk [vmem:[#allocation4 + $0x30] sm:$0xff] %vm519, 0.0
        %531 = vst.msk [vmem:[#allocation4 + $0x38] sm:$0xff] %vm519, 0.0
        %v532 = vmul.f32 %v465, %v465
        %v533 = vmul.f32 %v468, %v468
        %v534 = vmul.f32 %v473, %v473
        %v535 = vmul.f32 %v476, %v476
        %v536 = vmul.f32 %v481, %v481
        %v537 = vmul.f32 %v484, %v484
        %v538 = vmul.f32 %v489, %v489
        %v539 = vmul.f32 %v492, %v492
        %v540 = vpack.c.bf16 %v533, %v532
        %v541 = vpack.c.bf16 %v535, %v534
        %v542 = vpack.c.bf16 %v537, %v536
        %v543 = vpack.c.bf16 %v539, %v538
        %v544 = vld [vmem:[%s5] sm:$0xf]
        %v545 = vld [vmem:[%s5 + $0x4] sm:$0xf]
        %v546 = vld [vmem:[%s5 + $0x8] sm:$0xf]
        %v547 = vld [vmem:[%s5 + $0xc] sm:$0xf]
        %v552 = vunpack.c.l.b16 %v544
        %v553 = vunpack.c.l.b16 %v545
        %v554 = vunpack.c.l.b16 %v546
        %v555 = vunpack.c.l.b16 %v547
        %v556 = vpack.c.b16 %v553, %v552
        %v557 = vpack.c.b16 %v555, %v554
        %v561 = vsel %vm417, %v540, 0
        %v564 = vsel %vm417, %v541, 0
        %v567 = vsel %vm417, %v542, 0
        %v570 = vsel %vm417, %v543, 0
        %572 = vmatprep.subr.bf16.mxu0 0
        %573 = vmatpush1.bf16.msra.mxu0 %v556
        %574 = vmatprep.subr.bf16.mxu0 0
        %575 = vmatpush1.bf16.msra.mxu0 %v557
        %576 = vmatprep.subr.bf16.mxu0 0
        %577 = vmatpush1.bf16.msra.mxu0 0
        %578 = vmatprep.subr.bf16.mxu0 0
        %579 = vmatpush1.bf16.msra.mxu0 0
        %580 = vmatprep.subr.bf16.mxu0 0
        %581 = vmatpush1.bf16.msra.mxu0 0
        %582 = vmatprep.subr.bf16.mxu0 0
        %583 = vmatpush1.bf16.msra.mxu0 0
        %584 = vmatprep.subr.bf16.mxu0 0
        %585 = vmatpush1.bf16.msra.mxu0 0
        %586 = vmatprep.subr.bf16.mxu0 0
        %587 = vmatpush1.bf16.msra.mxu0 0
        %588 = vmatprep.subr.bf16.mxu0 0
        %589 = vmatpush1.bf16.msra.mxu0 0
        %590 = vmatprep.subr.bf16.mxu0 0
        %591 = vmatpush1.bf16.msra.mxu0 0
        %592 = vmatprep.subr.bf16.mxu0 0
        %593 = vmatpush1.bf16.msra.mxu0 0
        %594 = vmatprep.subr.bf16.mxu0 0
        %595 = vmatpush1.bf16.msra.mxu0 0
        %596 = vmatprep.subr.bf16.mxu0 0
        %597 = vmatpush1.bf16.msra.mxu0 0
        %598 = vmatprep.subr.bf16.mxu0 0
        %599 = vmatpush1.bf16.msra.mxu0 0
        %600 = vmatprep.subr.bf16.mxu0 0
        %601 = vmatpush1.bf16.msra.mxu0 0
        %602 = vmatprep.subr.bf16.mxu0 0
        %603 = vmatpush1.bf16.msra.mxu0 0
        %604 = vmatprep.mubr.bf16.mxu0 0
        %605 = vmatmul.mubr.bf16.gmra.mrb[0].mxu0 %v561
        %v606 = vpop.f32.mrb[0].mxu0
        %v607 = vadd.f32 0.0, %v606
        %v608 = vpop.f32.mrb[0].mxu0
        %v609 = vpop.f32.mrb[0].mxu0
        %v610 = vadd.f32 0.0, %v609
        %v611 = vpop.f32.mrb[0].mxu0
        %612 = vmatprep.mubr.bf16.mxu0 0
        %613 = vmatmul.mubr.bf16.gmra.mrb[0].mxu0 %v564
        %v614 = vpop.f32.mrb[0].mxu0
        %v615 = vadd.f32 0.0, %v614
        %v616 = vpop.f32.mrb[0].mxu0
        %v617 = vpop.f32.mrb[0].mxu0
        %v618 = vadd.f32 0.0, %v617
        %v619 = vpop.f32.mrb[0].mxu0
        %620 = vmatprep.mubr.bf16.mxu0 0
        %621 = vmatmul.mubr.bf16.gmra.mrb[0].mxu0 %v567
        %v622 = vpop.f32.mrb[0].mxu0
        %v623 = vadd.f32 0.0, %v622
        %v624 = vpop.f32.mrb[0].mxu0
        %v625 = vpop.f32.mrb[0].mxu0
        %v626 = vadd.f32 0.0, %v625
        %v627 = vpop.f32.mrb[0].mxu0
        %628 = vmatprep.mubr.bf16.mxu0 0
        %629 = vmatmul.mubr.bf16.gmra.mrb[0].mxu0 %v570
        %v630 = vpop.f32.mrb[0].mxu0
        %v631 = vadd.f32 0.0, %v630
        %v632 = vpop.f32.mrb[0].mxu0
        %v633 = vpop.f32.mrb[0].mxu0
        %v634 = vadd.f32 0.0, %v633
        %v635 = vpop.f32.mrb[0].mxu0
        %636 = vdwg.mxu0
        %641 = vrot.lane.b32.xlu0 %v540, 96
        %v642 = vpop.permute.xlu0 %641
        %643 = vrot.lane.b32.xlu0 %v541, 96
        %v644 = vpop.permute.xlu0 %643
        %645 = vrot.lane.b32.xlu0 %v542, 96
        %v646 = vpop.permute.xlu0 %645
        %647 = vrot.lane.b32.xlu0 %v543, 96
        %v648 = vpop.permute.xlu0 %647
        %v650 = vsel %vm417, %v642, 0
        %v653 = vsel %vm417, %v644, 0
        %v656 = vsel %vm417, %v646, 0
        %v659 = vsel %vm417, %v648, 0
        %661 = vmatprep.subr.bf16.mxu0 0
        %662 = vmatpush1.bf16.msra.mxu0 %v556
        %663 = vmatprep.subr.bf16.mxu0 0
        %664 = vmatpush1.bf16.msra.mxu0 %v557
        %665 = vmatprep.subr.bf16.mxu0 0
        %666 = vmatpush1.bf16.msra.mxu0 0
        %667 = vmatprep.subr.bf16.mxu0 0
        %668 = vmatpush1.bf16.msra.mxu0 0
        %669 = vmatprep.subr.bf16.mxu0 0
        %670 = vmatpush1.bf16.msra.mxu0 0
        %671 = vmatprep.subr.bf16.mxu0 0
        %672 = vmatpush1.bf16.msra.mxu0 0
        %673 = vmatprep.subr.bf16.mxu0 0
        %674 = vmatpush1.bf16.msra.mxu0 0
        %675 = vmatprep.subr.bf16.mxu0 0
        %676 = vmatpush1.bf16.msra.mxu0 0
        %677 = vmatprep.subr.bf16.mxu0 0
        %678 = vmatpush1.bf16.msra.mxu0 0
        %679 = vmatprep.subr.bf16.mxu0 0
        %680 = vmatpush1.bf16.msra.mxu0 0
        %681 = vmatprep.subr.bf16.mxu0 0
        %682 = vmatpush1.bf16.msra.mxu0 0
        %683 = vmatprep.subr.bf16.mxu0 0
        %684 = vmatpush1.bf16.msra.mxu0 0
        %685 = vmatprep.subr.bf16.mxu0 0
        %686 = vmatpush1.bf16.msra.mxu0 0
        %687 = vmatprep.subr.bf16.mxu0 0
        %688 = vmatpush1.bf16.msra.mxu0 0
        %689 = vmatprep.subr.bf16.mxu0 0
        %690 = vmatpush1.bf16.msra.mxu0 0
        %691 = vmatprep.subr.bf16.mxu0 0
        %692 = vmatpush1.bf16.msra.mxu0 0
        %693 = vmatprep.mubr.bf16.mxu0 0
        %694 = vmatmul.mubr.bf16.gmra.mrb[0].mxu0 %v650
        %v695 = vpop.f32.mrb[0].mxu0
        %v696 = vadd.f32 0.0, %v695
        %v697 = vpop.f32.mrb[0].mxu0
        %v698 = vpop.f32.mrb[0].mxu0
        %v699 = vadd.f32 0.0, %v698
        %v700 = vpop.f32.mrb[0].mxu0
        %701 = vmatprep.mubr.bf16.mxu0 0
        %702 = vmatmul.mubr.bf16.gmra.mrb[0].mxu0 %v653
        %v703 = vpop.f32.mrb[0].mxu0
        %v704 = vadd.f32 0.0, %v703
        %v705 = vpop.f32.mrb[0].mxu0
        %v706 = vpop.f32.mrb[0].mxu0
        %v707 = vadd.f32 0.0, %v706
        %v708 = vpop.f32.mrb[0].mxu0
        %709 = vmatprep.mubr.bf16.mxu0 0
        %710 = vmatmul.mubr.bf16.gmra.mrb[0].mxu0 %v656
        %v711 = vpop.f32.mrb[0].mxu0
        %v712 = vadd.f32 0.0, %v711
        %v713 = vpop.f32.mrb[0].mxu0
        %v714 = vpop.f32.mrb[0].mxu0
        %v715 = vadd.f32 0.0, %v714
        %v716 = vpop.f32.mrb[0].mxu0
        %717 = vmatprep.mubr.bf16.mxu0 0
        %718 = vmatmul.mubr.bf16.gmra.mrb[0].mxu0 %v659
        %v719 = vpop.f32.mrb[0].mxu0
        %v720 = vadd.f32 0.0, %v719
        %v721 = vpop.f32.mrb[0].mxu0
        %v722 = vpop.f32.mrb[0].mxu0
        %v723 = vadd.f32 0.0, %v722
        %v724 = vpop.f32.mrb[0].mxu0
        %725 = vdwg.mxu0
        %v726 = vsel %vm417, %v607, -inf
        %v727 = vsel %vm417, %v610, -inf
        %v728 = vsel %vm417, %v615, -inf
        %v729 = vsel %vm417, %v618, -inf
        %v730 = vsel %vm417, %v623, -inf
        %v731 = vmax.f32 %v726, %v730
        %v732 = vsel %vm417, %v626, -inf
        %v733 = vmax.f32 %v727, %v732
        %v734 = vsel %vm417, %v631, -inf
        %v735 = vmax.f32 %v728, %v734
        %v736 = vsel %vm417, %v634, -inf
        %v737 = vmax.f32 %v729, %v736
        %v738 = vmax.f32 %v731, %v733
        %v739 = vmax.f32 %v735, %v737
        %v740 = vmax.f32 %v738, %v739
        %v741 = vrot.slane %v740, 4
        %v742 = vmax.f32 %v740, %v741
        %v743 = vrot.slane %v742, 2
        %v744 = vmax.f32 %v742, %v743
        %v745 = vrot.slane %v744, 1
        %v746 = vmax.f32 %v744, %v745
        %v747 = vrsqrt.pop %v746
        %v748 = vmul.f32 %v746, %v747
        %vm749 = vcmp.eq.f32.partialorder %v746, inf
        %v750 = vsel %vm749, %v746, %v748
        %vm751 = vcmp.eq.f32.partialorder %v746, 0.0
        %v752 = vand.u32 %v746, 2147483648
        %v753 = vsel %vm751, %v752, %v750
        %v754 = vsel %vm417, %v696, -inf
        %v755 = vsel %vm417, %v699, -inf
        %v756 = vsel %vm417, %v704, -inf
        %v757 = vsel %vm417, %v707, -inf
        %v758 = vsel %vm417, %v712, -inf
        %v759 = vmax.f32 %v754, %v758
        %v760 = vsel %vm417, %v715, -inf
        %v761 = vmax.f32 %v755, %v760
        %v762 = vsel %vm417, %v720, -inf
        %v763 = vmax.f32 %v756, %v762
        %v764 = vsel %vm417, %v723, -inf
        %v765 = vmax.f32 %v757, %v764
        %v766 = vmax.f32 %v759, %v761
        %v767 = vmax.f32 %v763, %v765
        %v768 = vmax.f32 %v766, %v767
        %v769 = vrot.slane %v768, 4
        %v770 = vmax.f32 %v768, %v769
        %v771 = vrot.slane %v770, 2
        %v772 = vmax.f32 %v770, %v771
        %v773 = vrot.slane %v772, 1
        %v774 = vmax.f32 %v772, %v773
        %v775 = vrsqrt.pop %v774
        %v776 = vmul.f32 %v774, %v775
        %vm777 = vcmp.eq.f32.partialorder %v774, inf
        %v778 = vsel %vm777, %v774, %v776
        %vm779 = vcmp.eq.f32.partialorder %v774, 0.0
        %v780 = vand.u32 %v774, 2147483648
        %v781 = vsel %vm779, %v780, %v778
        %v782 = vmul.f32 %v753, %v781
        %v783 = vmul.f32 %v782, 0.35355338
        %vm784 = vcmask 253952
        %785 = vst.msk [vmem:[#allocation5] sm:$0x1] %vm784, %v783
      $region60: #{tpu_custom_call.1} parent=55 // pred_fallthru
        _
      %v786 = vld [vmem:[%s348] sm:$0xff]
      %v787 = vld [vmem:[%s348 + $0x8] sm:$0xff]
      %v788 = vld [vmem:[%s348 + $0x10] sm:$0xff]
      %v789 = vld [vmem:[%s348 + $0x18] sm:$0xff]
      %v790 = vld [vmem:[%s348 + $0x20] sm:$0xff]
      %v791 = vld [vmem:[%s348 + $0x28] sm:$0xff]
      %v792 = vld [vmem:[%s348 + $0x30] sm:$0xff]
      %v793 = vld [vmem:[%s348 + $0x38] sm:$0xff]
      %v794 = vld [vmem:[%s348 + $0x40] sm:$0xff]
      %v795 = vld [vmem:[%s348 + $0x48] sm:$0xff]
      %v796 = vld [vmem:[%s348 + $0x50] sm:$0xff]
      %v797 = vld [vmem:[%s348 + $0x58] sm:$0xff]
      %v798 = vld [vmem:[%s348 + $0x60] sm:$0xff]
      %v799 = vld [vmem:[%s348 + $0x68] sm:$0xff]
      %v800 = vld [vmem:[%s348 + $0x70] sm:$0xff]
      %v801 = vld [vmem:[%s348 + $0x78] sm:$0xff]
      %v802 = vld [vmem:[%s348 + $0x80] sm:$0xff]
      %v803 = vld [vmem:[%s348 + $0x88] sm:$0xff]
      %v804 = vld [vmem:[%s348 + $0x90] sm:$0xff]
      %v805 = vld [vmem:[%s348 + $0x98] sm:$0xff]
      %v806 = vld [vmem:[%s348 + $0xa0] sm:$0xff]
      %v807 = vld [vmem:[%s348 + $0xa8] sm:$0xff]
      %v808 = vld [vmem:[%s348 + $0xb0] sm:$0xff]
      %v809 = vld [vmem:[%s348 + $0xb8] sm:$0xff]
      %v810 = vld [vmem:[%s348 + $0xc0] sm:$0xff]
      %v811 = vld [vmem:[%s348 + $0xc8] sm:$0xff]
      %v812 = vld [vmem:[%s348 + $0xd0] sm:$0xff]
      %v813 = vld [vmem:[%s348 + $0xd8] sm:$0xff]
      %v814 = vld [vmem:[%s348 + $0xe0] sm:$0xff]
      %v815 = vld [vmem:[%s348 + $0xe8] sm:$0xff]
      %v816 = vld [vmem:[%s348 + $0xf0] sm:$0xff]
      %v817 = vld [vmem:[%s348 + $0xf8] sm:$0xff]
      %v818 = vld [vmem:[%s348 + $0x100] sm:$0xff]
      %v819 = vld [vmem:[%s348 + $0x108] sm:$0xff]
      %v820 = vld [vmem:[%s348 + $0x110] sm:$0xff]
      %v821 = vld [vmem:[%s348 + $0x118] sm:$0xff]
      %v822 = vld [vmem:[%s348 + $0x120] sm:$0xff]
      %v823 = vld [vmem:[%s348 + $0x128] sm:$0xff]
      %v824 = vld [vmem:[%s348 + $0x130] sm:$0xff]
      %v825 = vld [vmem:[%s348 + $0x138] sm:$0xff]
      %v826 = vld [vmem:[%s348 + $0x140] sm:$0xff]
      %v827 = vld [vmem:[%s348 + $0x148] sm:$0xff]
      %v828 = vld [vmem:[%s348 + $0x150] sm:$0xff]
      %v829 = vld [vmem:[%s348 + $0x158] sm:$0xff]
      %v830 = vld [vmem:[%s348 + $0x160] sm:$0xff]
      %v831 = vld [vmem:[%s348 + $0x168] sm:$0xff]
      %v832 = vld [vmem:[%s348 + $0x170] sm:$0xff]
      %v833 = vld [vmem:[%s348 + $0x178] sm:$0xff]
      %v834 = vld [vmem:[%s348 + $0x180] sm:$0xff]
      %v835 = vld [vmem:[%s348 + $0x188] sm:$0xff]
      %v836 = vld [vmem:[%s348 + $0x190] sm:$0xff]
      %v837 = vld [vmem:[%s348 + $0x198] sm:$0xff]
      %v838 = vld [vmem:[%s348 + $0x1a0] sm:$0xff]
      %v839 = vld [vmem:[%s348 + $0x1a8] sm:$0xff]
      %v840 = vld [vmem:[%s348 + $0x1b0] sm:$0xff]
      %v841 = vld [vmem:[%s348 + $0x1b8] sm:$0xff]
      %v842 = vld [vmem:[%s348 + $0x1c0] sm:$0xff]
      %v843 = vld [vmem:[%s348 + $0x1c8] sm:$0xff]
      %v844 = vld [vmem:[%s348 + $0x1d0] sm:$0xff]
      %v845 = vld [vmem:[%s348 + $0x1d8] sm:$0xff]
      %v846 = vld [vmem:[%s348 + $0x1e0] sm:$0xff]
      %v847 = vld [vmem:[%s348 + $0x1e8] sm:$0xff]
      %v848 = vld [vmem:[%s348 + $0x1f0] sm:$0xff]
      %v849 = vld [vmem:[%s348 + $0x1f8] sm:$0xff]
      %v850 = vld [vmem:[%s354] sm:$0xff]
      %v851 = vld [vmem:[%s354 + $0x8] sm:$0xff]
      %v852 = vld [vmem:[%s354 + $0x10] sm:$0xff]
      %v853 = vld [vmem:[%s354 + $0x18] sm:$0xff]
      %v854 = vld [vmem:[%s354 + $0x20] sm:$0xff]
      %v855 = vld [vmem:[%s354 + $0x28] sm:$0xff]
      %v856 = vld [vmem:[%s354 + $0x30] sm:$0xff]
      %v857 = vld [vmem:[%s354 + $0x38] sm:$0xff]
      %v858 = vld [vmem:[%s354 + $0x40] sm:$0xff]
      %v859 = vld [vmem:[%s354 + $0x48] sm:$0xff]
      %v860 = vld [vmem:[%s354 + $0x50] sm:$0xff]
      %v861 = vld [vmem:[%s354 + $0x58] sm:$0xff]
      %v862 = vld [vmem:[%s354 + $0x60] sm:$0xff]
      %v863 = vld [vmem:[%s354 + $0x68] sm:$0xff]
      %v864 = vld [vmem:[%s354 + $0x70] sm:$0xff]
      %v865 = vld [vmem:[%s354 + $0x78] sm:$0xff]
      %v866 = vld [vmem:[%s354 + $0x80] sm:$0xff]
      %v867 = vld [vmem:[%s354 + $0x88] sm:$0xff]
      %v868 = vld [vmem:[%s354 + $0x90] sm:$0xff]
      %v869 = vld [vmem:[%s354 + $0x98] sm:$0xff]
      %v870 = vld [vmem:[%s354 + $0xa0] sm:$0xff]
      %v871 = vld [vmem:[%s354 + $0xa8] sm:$0xff]
      %v872 = vld [vmem:[%s354 + $0xb0] sm:$0xff]
      %v873 = vld [vmem:[%s354 + $0xb8] sm:$0xff]
      %v874 = vld [vmem:[%s354 + $0xc0] sm:$0xff]
      %v875 = vld [vmem:[%s354 + $0xc8] sm:$0xff]
      %v876 = vld [vmem:[%s354 + $0xd0] sm:$0xff]
      %v877 = vld [vmem:[%s354 + $0xd8] sm:$0xff]
      %v878 = vld [vmem:[%s354 + $0xe0] sm:$0xff]
      %v879 = vld [vmem:[%s354 + $0xe8] sm:$0xff]
      %v880 = vld [vmem:[%s354 + $0xf0] sm:$0xff]
      %v881 = vld [vmem:[%s354 + $0xf8] sm:$0xff]
      %v882 = vld [vmem:[%s354 + $0x100] sm:$0xff]
      %v883 = vld [vmem:[%s354 + $0x108] sm:$0xff]
      %v884 = vld [vmem:[%s354 + $0x110] sm:$0xff]
      %v885 = vld [vmem:[%s354 + $0x118] sm:$0xff]
      %v886 = vld [vmem:[%s354 + $0x120] sm:$0xff]
      %v887 = vld [vmem:[%s354 + $0x128] sm:$0xff]
      %v888 = vld [vmem:[%s354 + $0x130] sm:$0xff]
      %v889 = vld [vmem:[%s354 + $0x138] sm:$0xff]
      %v890 = vld [vmem:[%s354 + $0x140] sm:$0xff]
      %v891 = vld [vmem:[%s354 + $0x148] sm:$0xff]
      %v892 = vld [vmem:[%s354 + $0x150] sm:$0xff]
      %v893 = vld [vmem:[%s354 + $0x158] sm:$0xff]
      %v894 = vld [vmem:[%s354 + $0x160] sm:$0xff]
      %v895 = vld [vmem:[%s354 + $0x168] sm:$0xff]
      %v896 = vld [vmem:[%s354 + $0x170] sm:$0xff]
      %v897 = vld [vmem:[%s354 + $0x178] sm:$0xff]
      %v898 = vld [vmem:[%s354 + $0x180] sm:$0xff]
      %v899 = vld [vmem:[%s354 + $0x188] sm:$0xff]
      %v900 = vld [vmem:[%s354 + $0x190] sm:$0xff]
      %v901 = vld [vmem:[%s354 + $0x198] sm:$0xff]
      %v902 = vld [vmem:[%s354 + $0x1a0] sm:$0xff]
      %v903 = vld [vmem:[%s354 + $0x1a8] sm:$0xff]
      %v904 = vld [vmem:[%s354 + $0x1b0] sm:$0xff]
      %v905 = vld [vmem:[%s354 + $0x1b8] sm:$0xff]
      %v906 = vld [vmem:[%s354 + $0x1c0] sm:$0xff]
      %v907 = vld [vmem:[%s354 + $0x1c8] sm:$0xff]
      %v908 = vld [vmem:[%s354 + $0x1d0] sm:$0xff]
      %v909 = vld [vmem:[%s354 + $0x1d8] sm:$0xff]
      %v910 = vld [vmem:[%s354 + $0x1e0] sm:$0xff]
      %v911 = vld [vmem:[%s354 + $0x1e8] sm:$0xff]
      %v912 = vld [vmem:[%s354 + $0x1f0] sm:$0xff]
      %v913 = vld [vmem:[%s354 + $0x1f8] sm:$0xff]
      %v914 = vld [vmem:[%s359] sm:$0xf]
      %v915 = vlaneseq
      %v916 = vand.u32 %v915, 127
      %v917 = vlaneseq
      %v918 = vshrl.u32 %v917, 7
      %v919 = vadd.s32 %v918, 8
      %v920 = vadd.s32 %v918, 16
      %v921 = vadd.s32 %v918, 24
      %v922 = vadd.s32 %v918, 32
      %v923 = vadd.s32 %v918, 40
      %v924 = vadd.s32 %v918, 48
      %v925 = vadd.s32 %v918, 56
      %926 = vset.pattern.permute.xlu0 0
      %927 = vperm.xlu0 %926, %v786
      %v928 = vpop.permute.xlu0 %927
      %929 = vset.pattern.permute.xlu0 0
      %930 = vperm.xlu0 %929, %v787
      %v931 = vpop.permute.xlu0 %930
      %932 = vset.pattern.permute.xlu0 0
      %933 = vperm.xlu0 %932, %v788
      %v934 = vpop.permute.xlu0 %933
      %935 = vset.pattern.permute.xlu0 0
      %936 = vperm.xlu0 %935, %v789
      %v937 = vpop.permute.xlu0 %936
      %938 = vset.pattern.permute.xlu0 0
      %939 = vperm.xlu0 %938, %v790
      %v940 = vpop.permute.xlu0 %939
      %941 = vset.pattern.permute.xlu0 0
      %942 = vperm.xlu0 %941, %v791
      %v943 = vpop.permute.xlu0 %942
      %944 = vset.pattern.permute.xlu0 0
      %945 = vperm.xlu0 %944, %v792
      %v946 = vpop.permute.xlu0 %945
      %947 = vset.pattern.permute.xlu0 0
      %948 = vperm.xlu0 %947, %v793
      %v949 = vpop.permute.xlu0 %948
      %950 = vset.pattern.permute.xlu0 0
      %951 = vperm.xlu0 %950, %v794
      %v952 = vpop.permute.xlu0 %951
      %953 = vset.pattern.permute.xlu0 0
      %954 = vperm.xlu0 %953, %v795
      %v955 = vpop.permute.xlu0 %954
      %956 = vset.pattern.permute.xlu0 0
      %957 = vperm.xlu0 %956, %v796
      %v958 = vpop.permute.xlu0 %957
      %959 = vset.pattern.permute.xlu0 0
      %960 = vperm.xlu0 %959, %v797
      %v961 = vpop.permute.xlu0 %960
      %962 = vset.pattern.permute.xlu0 0
      %963 = vperm.xlu0 %962, %v798
      %v964 = vpop.permute.xlu0 %963
      %965 = vset.pattern.permute.xlu0 0
      %966 = vperm.xlu0 %965, %v799
      %v967 = vpop.permute.xlu0 %966
      %968 = vset.pattern.permute.xlu0 0
      %969 = vperm.xlu0 %968, %v800
      %v970 = vpop.permute.xlu0 %969
      %971 = vset.pattern.permute.xlu0 0
      %972 = vperm.xlu0 %971, %v801
      %v973 = vpop.permute.xlu0 %972
      %974 = vset.pattern.permute.xlu0 0
      %975 = vperm.xlu0 %974, %v802
      %v976 = vpop.permute.xlu0 %975
      %977 = vset.pattern.permute.xlu0 0
      %978 = vperm.xlu0 %977, %v803
      %v979 = vpop.permute.xlu0 %978
      %980 = vset.pattern.permute.xlu0 0
      %981 = vperm.xlu0 %980, %v804
      %v982 = vpop.permute.xlu0 %981
      %983 = vset.pattern.permute.xlu0 0
      %984 = vperm.xlu0 %983, %v805
      %v985 = vpop.permute.xlu0 %984
      %986 = vset.pattern.permute.xlu0 0
      %987 = vperm.xlu0 %986, %v806
      %v988 = vpop.permute.xlu0 %987
      %989 = vset.pattern.permute.xlu0 0
      %990 = vperm.xlu0 %989, %v807
      %v991 = vpop.permute.xlu0 %990
      %992 = vset.pattern.permute.xlu0 0
      %993 = vperm.xlu0 %992, %v808
      %v994 = vpop.permute.xlu0 %993
      %995 = vset.pattern.permute.xlu0 0
      %996 = vperm.xlu0 %995, %v809
      %v997 = vpop.permute.xlu0 %996
      %998 = vset.pattern.permute.xlu0 0
      %999 = vperm.xlu0 %998, %v810
      %v1000 = vpop.permute.xlu0 %999
      %1001 = vset.pattern.permute.xlu0 0
      %1002 = vperm.xlu0 %1001, %v811
      %v1003 = vpop.permute.xlu0 %1002
      %1004 = vset.pattern.permute.xlu0 0
      %1005 = vperm.xlu0 %1004, %v812
      %v1006 = vpop.permute.xlu0 %1005
      %1007 = vset.pattern.permute.xlu0 0
      %1008 = vperm.xlu0 %1007, %v813
      %v1009 = vpop.permute.xlu0 %1008
      %1010 = vset.pattern.permute.xlu0 0
      %1011 = vperm.xlu0 %1010, %v814
      %v1012 = vpop.permute.xlu0 %1011
      %1013 = vset.pattern.permute.xlu0 0
      %1014 = vperm.xlu0 %1013, %v815
      %v1015 = vpop.permute.xlu0 %1014
      %1016 = vset.pattern.permute.xlu0 0
      %1017 = vperm.xlu0 %1016, %v816
      %v1018 = vpop.permute.xlu0 %1017
      %1019 = vset.pattern.permute.xlu0 0
      %1020 = vperm.xlu0 %1019, %v817
      %v1021 = vpop.permute.xlu0 %1020
      %1022 = vset.pattern.permute.xlu0 0
      %1023 = vperm.xlu0 %1022, %v818
      %v1024 = vpop.permute.xlu0 %1023
      %1025 = vset.pattern.permute.xlu0 0
      %1026 = vperm.xlu0 %1025, %v819
      %v1027 = vpop.permute.xlu0 %1026
      %1028 = vset.pattern.permute.xlu0 0
      %1029 = vperm.xlu0 %1028, %v820
      %v1030 = vpop.permute.xlu0 %1029
      %1031 = vset.pattern.permute.xlu0 0
      %1032 = vperm.xlu0 %1031, %v821
      %v1033 = vpop.permute.xlu0 %1032
      %1034 = vset.pattern.permute.xlu0 0
      %1035 = vperm.xlu0 %1034, %v822
      %v1036 = vpop.permute.xlu0 %1035
      %1037 = vset.pattern.permute.xlu0 0
      %1038 = vperm.xlu0 %1037, %v823
      %v1039 = vpop.permute.xlu0 %1038
      %1040 = vset.pattern.permute.xlu0 0
      %1041 = vperm.xlu0 %1040, %v824
      %v1042 = vpop.permute.xlu0 %1041
      %1043 = vset.pattern.permute.xlu0 0
      %1044 = vperm.xlu0 %1043, %v825
      %v1045 = vpop.permute.xlu0 %1044
      %1046 = vset.pattern.permute.xlu0 0
      %1047 = vperm.xlu0 %1046, %v826
      %v1048 = vpop.permute.xlu0 %1047
      %1049 = vset.pattern.permute.xlu0 0
      %1050 = vperm.xlu0 %1049, %v827
      %v1051 = vpop.permute.xlu0 %1050
      %1052 = vset.pattern.permute.xlu0 0
      %1053 = vperm.xlu0 %1052, %v828
      %v1054 = vpop.permute.xlu0 %1053
      %1055 = vset.pattern.permute.xlu0 0
      %1056 = vperm.xlu0 %1055, %v829
      %v1057 = vpop.permute.xlu0 %1056
      %1058 = vset.pattern.permute.xlu0 0
      %1059 = vperm.xlu0 %1058, %v830
      %v1060 = vpop.permute.xlu0 %1059
      %1061 = vset.pattern.permute.xlu0 0
      %1062 = vperm.xlu0 %1061, %v831
      %v1063 = vpop.permute.xlu0 %1062
      %1064 = vset.pattern.permute.xlu0 0
      %1065 = vperm.xlu0 %1064, %v832
      %v1066 = vpop.permute.xlu0 %1065
      %1067 = vset.pattern.permute.xlu0 0
      %1068 = vperm.xlu0 %1067, %v833
      %v1069 = vpop.permute.xlu0 %1068
      %1070 = vset.pattern.permute.xlu0 0
      %1071 = vperm.xlu0 %1070, %v834
      %v1072 = vpop.permute.xlu0 %1071
      %1073 = vset.pattern.permute.xlu0 0
      %1074 = vperm.xlu0 %1073, %v835
      %v1075 = vpop.permute.xlu0 %1074
      %1076 = vset.pattern.permute.xlu0 0
      %1077 = vperm.xlu0 %1076, %v836
      %v1078 = vpop.permute.xlu0 %1077
      %1079 = vset.pattern.permute.xlu0 0
      %1080 = vperm.xlu0 %1079, %v837
      %v1081 = vpop.permute.xlu0 %1080
      %1082 = vset.pattern.permute.xlu0 0
      %1083 = vperm.xlu0 %1082, %v838
      %v1084 = vpop.permute.xlu0 %1083
      %1085 = vset.pattern.permute.xlu0 0
      %1086 = vperm.xlu0 %1085, %v839
      %v1087 = vpop.permute.xlu0 %1086
      %1088 = vset.pattern.permute.xlu0 0
      %1089 = vperm.xlu0 %1088, %v840
      %v1090 = vpop.permute.xlu0 %1089
      %1091 = vset.pattern.permute.xlu0 0
      %1092 = vperm.xlu0 %1091, %v841
      %v1093 = vpop.permute.xlu0 %1092
      %1094 = vset.pattern.permute.xlu0 0
      %1095 = vperm.xlu0 %1094, %v842
      %v1096 = vpop.permute.xlu0 %1095
      %1097 = vset.pattern.permute.xlu0 0
      %1098 = vperm.xlu0 %1097, %v843
      %v1099 = vpop.permute.xlu0 %1098
      %1100 = vset.pattern.permute.xlu0 0
      %1101 = vperm.xlu0 %1100, %v844
      %v1102 = vpop.permute.xlu0 %1101
      %1103 = vset.pattern.permute.xlu0 0
      %1104 = vperm.xlu0 %1103, %v845
      %v1105 = vpop.permute.xlu0 %1104
      %1106 = vset.pattern.permute.xlu0 0
      %1107 = vperm.xlu0 %1106, %v846
      %v1108 = vpop.permute.xlu0 %1107
      %1109 = vset.pattern.permute.xlu0 0
      %1110 = vperm.xlu0 %1109, %v847
      %v1111 = vpop.permute.xlu0 %1110
      %1112 = vset.pattern.permute.xlu0 0
      %1113 = vperm.xlu0 %1112, %v848
      %v1114 = vpop.permute.xlu0 %1113
      %1115 = vset.pattern.permute.xlu0 0
      %1116 = vperm.xlu0 %1115, %v849
      %v1117 = vpop.permute.xlu0 %1116
      %vm1118 = vcmp.eq.s32.totalorder %v916, %v928
      %vm1119 = vcmp.eq.s32.totalorder %v916, %v931
      %vm1120 = vcmp.eq.s32.totalorder %v916, %v934
      %vm1121 = vcmp.eq.s32.totalorder %v916, %v937
      %vm1122 = vcmp.eq.s32.totalorder %v916, %v940
      %vm1123 = vcmp.eq.s32.totalorder %v916, %v943
      %vm1124 = vcmp.eq.s32.totalorder %v916, %v946
      %vm1125 = vcmp.eq.s32.totalorder %v916, %v949
      %vm1126 = vcmp.eq.s32.totalorder %v916, %v952
      %vm1127 = vcmp.eq.s32.totalorder %v916, %v955
      %vm1128 = vcmp.eq.s32.totalorder %v916, %v958
      %vm1129 = vcmp.eq.s32.totalorder %v916, %v961
      %vm1130 = vcmp.eq.s32.totalorder %v916, %v964
      %vm1131 = vcmp.eq.s32.totalorder %v916, %v967
      %vm1132 = vcmp.eq.s32.totalorder %v916, %v970
      %vm1133 = vcmp.eq.s32.totalorder %v916, %v973
      %vm1134 = vcmp.eq.s32.totalorder %v916, %v976
      %vm1135 = vcmp.eq.s32.totalorder %v916, %v979
      %vm1136 = vcmp.eq.s32.totalorder %v916, %v982
      %vm1137 = vcmp.eq.s32.totalorder %v916, %v985
      %vm1138 = vcmp.eq.s32.totalorder %v916, %v988
      %vm1139 = vcmp.eq.s32.totalorder %v916, %v991
      %vm1140 = vcmp.eq.s32.totalorder %v916, %v994
      %vm1141 = vcmp.eq.s32.totalorder %v916, %v997
      %vm1142 = vcmp.eq.s32.totalorder %v916, %v1000
      %vm1143 = vcmp.eq.s32.totalorder %v916, %v1003
      %vm1144 = vcmp.eq.s32.totalorder %v916, %v1006
      %vm1145 = vcmp.eq.s32.totalorder %v916, %v1009
      %vm1146 = vcmp.eq.s32.totalorder %v916, %v1012
      %vm1147 = vcmp.eq.s32.totalorder %v916, %v1015
      %vm1148 = vcmp.eq.s32.totalorder %v916, %v1018
      %vm1149 = vcmp.eq.s32.totalorder %v916, %v1021
      %vm1150 = vcmp.eq.s32.totalorder %v916, %v1024
      %vm1151 = vcmp.eq.s32.totalorder %v916, %v1027
      %vm1152 = vcmp.eq.s32.totalorder %v916, %v1030
      %vm1153 = vcmp.eq.s32.totalorder %v916, %v1033
      %vm1154 = vcmp.eq.s32.totalorder %v916, %v1036
      %vm1155 = vcmp.eq.s32.totalorder %v916, %v1039
      %vm1156 = vcmp.eq.s32.totalorder %v916, %v1042
      %vm1157 = vcmp.eq.s32.totalorder %v916, %v1045
      %vm1158 = vcmp.eq.s32.totalorder %v916, %v1048
      %vm1159 = vcmp.eq.s32.totalorder %v916, %v1051
      %vm1160 = vcmp.eq.s32.totalorder %v916, %v1054
      %vm1161 = vcmp.eq.s32.totalorder %v916, %v1057
      %vm1162 = vcmp.eq.s32.totalorder %v916, %v1060
      %vm1163 = vcmp.eq.s32.totalorder %v916, %v1063
      %vm1164 = vcmp.eq.s32.totalorder %v916, %v1066
      %vm1165 = vcmp.eq.s32.totalorder %v916, %v1069
      %vm1166 = vcmp.eq.s32.totalorder %v916, %v1072
      %vm1167 = vcmp.eq.s32.totalorder %v916, %v1075
      %vm1168 = vcmp.eq.s32.totalorder %v916, %v1078
      %vm1169 = vcmp.eq.s32.totalorder %v916, %v1081
      %vm1170 = vcmp.eq.s32.totalorder %v916, %v1084
      %vm1171 = vcmp.eq.s32.totalorder %v916, %v1087
      %vm1172 = vcmp.eq.s32.totalorder %v916, %v1090
      %vm1173 = vcmp.eq.s32.totalorder %v916, %v1093
      %vm1174 = vcmp.eq.s32.totalorder %v916, %v1096
      %vm1175 = vcmp.eq.s32.totalorder %v916, %v1099
      %vm1176 = vcmp.eq.s32.totalorder %v916, %v1102
      %vm1177 = vcmp.eq.s32.totalorder %v916, %v1105
      %vm1178 = vcmp.eq.s32.totalorder %v916, %v1108
      %vm1179 = vcmp.eq.s32.totalorder %v916, %v1111
      %vm1180 = vcmp.eq.s32.totalorder %v916, %v1114
      %vm1181 = vcmp.eq.s32.totalorder %v916, %v1117
      %v1182 = vsel %vm1118, 1, 0
      %v1183 = vsel %vm1119, 1, 0
      %v1184 = vsel %vm1120, 1, 0
      %v1185 = vsel %vm1121, 1, 0
      %v1186 = vsel %vm1122, 1, 0
      %v1187 = vsel %vm1123, 1, 0
      %v1188 = vsel %vm1124, 1, 0
      %v1189 = vsel %vm1125, 1, 0
      %v1190 = vsel %vm1126, 1, 0
      %v1191 = vsel %vm1127, 1, 0
      %v1192 = vsel %vm1128, 1, 0
      %v1193 = vsel %vm1129, 1, 0
      %v1194 = vsel %vm1130, 1, 0
      %v1195 = vsel %vm1131, 1, 0
      %v1196 = vsel %vm1132, 1, 0
      %v1197 = vsel %vm1133, 1, 0
      %v1198 = vsel %vm1134, 1, 0
      %v1199 = vsel %vm1135, 1, 0
      %v1200 = vsel %vm1136, 1, 0
      %v1201 = vsel %vm1137, 1, 0
      %v1202 = vsel %vm1138, 1, 0
      %v1203 = vsel %vm1139, 1, 0
      %v1204 = vsel %vm1140, 1, 0
      %v1205 = vsel %vm1141, 1, 0
      %v1206 = vsel %vm1142, 1, 0
      %v1207 = vsel %vm1143, 1, 0
      %v1208 = vsel %vm1144, 1, 0
      %v1209 = vsel %vm1145, 1, 0
      %v1210 = vsel %vm1146, 1, 0
      %v1211 = vsel %vm1147, 1, 0
      %v1212 = vsel %vm1148, 1, 0
      %v1213 = vsel %vm1149, 1, 0
      %v1214 = vsel %vm1150, 1, 0
      %v1215 = vsel %vm1151, 1, 0
      %v1216 = vsel %vm1152, 1, 0
      %v1217 = vsel %vm1153, 1, 0
      %v1218 = vsel %vm1154, 1, 0
      %v1219 = vsel %vm1155, 1, 0
      %v1220 = vsel %vm1156, 1, 0
      %v1221 = vsel %vm1157, 1, 0
      %v1222 = vsel %vm1158, 1, 0
      %v1223 = vsel %vm1159, 1, 0
      %v1224 = vsel %vm1160, 1, 0
      %v1225 = vsel %vm1161, 1, 0
      %v1226 = vsel %vm1162, 1, 0
      %v1227 = vsel %vm1163, 1, 0
      %v1228 = vsel %vm1164, 1, 0
      %v1229 = vsel %vm1165, 1, 0
      %v1230 = vsel %vm1166, 1, 0
      %v1231 = vsel %vm1167, 1, 0
      %v1232 = vsel %vm1168, 1, 0
      %v1233 = vsel %vm1169, 1, 0
      %v1234 = vsel %vm1170, 1, 0
      %v1235 = vsel %vm1171, 1, 0
      %v1236 = vsel %vm1172, 1, 0
      %v1237 = vsel %vm1173, 1, 0
      %v1238 = vsel %vm1174, 1, 0
      %v1239 = vsel %vm1175, 1, 0
      %v1240 = vsel %vm1176, 1, 0
      %v1241 = vsel %vm1177, 1, 0
      %v1242 = vsel %vm1178, 1, 0
      %v1243 = vsel %vm1179, 1, 0
      %v1244 = vsel %vm1180, 1, 0
      %v1245 = vsel %vm1181, 1, 0
      %v1246 = vcvt.s32.f32 %v1182
      %v1247 = vcvt.s32.f32 %v1183
      %v1248 = vcvt.s32.f32 %v1184
      %v1249 = vcvt.s32.f32 %v1185
      %v1250 = vcvt.s32.f32 %v1186
      %v1251 = vcvt.s32.f32 %v1187
      %v1252 = vcvt.s32.f32 %v1188
      %v1253 = vcvt.s32.f32 %v1189
      %v1254 = vcvt.s32.f32 %v1190
      %v1255 = vcvt.s32.f32 %v1191
      %v1256 = vcvt.s32.f32 %v1192
      %v1257 = vcvt.s32.f32 %v1193
      %v1258 = vcvt.s32.f32 %v1194
      %v1259 = vcvt.s32.f32 %v1195
      %v1260 = vcvt.s32.f32 %v1196
      %v1261 = vcvt.s32.f32 %v1197
      %v1262 = vcvt.s32.f32 %v1198
      %v1263 = vcvt.s32.f32 %v1199
      %v1264 = vcvt.s32.f32 %v1200
      %v1265 = vcvt.s32.f32 %v1201
      %v1266 = vcvt.s32.f32 %v1202
      %v1267 = vcvt.s32.f32 %v1203
      %v1268 = vcvt.s32.f32 %v1204
      %v1269 = vcvt.s32.f32 %v1205
      %v1270 = vcvt.s32.f32 %v1206
      %v1271 = vcvt.s32.f32 %v1207
      %v1272 = vcvt.s32.f32 %v1208
      %v1273 = vcvt.s32.f32 %v1209
      %v1274 = vcvt.s32.f32 %v1210
      %v1275 = vcvt.s32.f32 %v1211
      %v1276 = vcvt.s32.f32 %v1212
      %v1277 = vcvt.s32.f32 %v1213
      %v1278 = vcvt.s32.f32 %v1214
      %v1279 = vcvt.s32.f32 %v1215
      %v1280 = vcvt.s32.f32 %v1216
      %v1281 = vcvt.s32.f32 %v1217
      %v1282 = vcvt.s32.f32 %v1218
      %v1283 = vcvt.s32.f32 %v1219
      %v1284 = vcvt.s32.f32 %v1220
      %v1285 = vcvt.s32.f32 %v1221
      %v1286 = vcvt.s32.f32 %v1222
      %v1287 = vcvt.s32.f32 %v1223
      %v1288 = vcvt.s32.f32 %v1224
      %v1289 = vcvt.s32.f32 %v1225
      %v1290 = vcvt.s32.f32 %v1226
      %v1291 = vcvt.s32.f32 %v1227
      %v1292 = vcvt.s32.f32 %v1228
      %v1293 = vcvt.s32.f32 %v1229
      %v1294 = vcvt.s32.f32 %v1230
      %v1295 = vcvt.s32.f32 %v1231
      %v1296 = vcvt.s32.f32 %v1232
      %v1297 = vcvt.s32.f32 %v1233
      %v1298 = vcvt.s32.f32 %v1234
      %v1299 = vcvt.s32.f32 %v1235
      %v1300 = vcvt.s32.f32 %v1236
      %v1301 = vcvt.s32.f32 %v1237
      %v1302 = vcvt.s32.f32 %v1238
      %v1303 = vcvt.s32.f32 %v1239
      %v1304 = vcvt.s32.f32 %v1240
      %v1305 = vcvt.s32.f32 %v1241
      %v1306 = vcvt.s32.f32 %v1242
      %v1307 = vcvt.s32.f32 %v1243
      %v1308 = vcvt.s32.f32 %v1244
      %v1309 = vcvt.s32.f32 %v1245
      %v1310 = vpack.c.bf16 %v1247, %v1246
      %v1311 = vpack.c.bf16 %v1249, %v1248
      %v1312 = vpack.c.bf16 %v1251, %v1250
      %v1313 = vpack.c.bf16 %v1253, %v1252
      %v1314 = vpack.c.bf16 %v1255, %v1254
      %v1315 = vpack.c.bf16 %v1257, %v1256
      %v1316 = vpack.c.bf16 %v1259, %v1258
      %v1317 = vpack.c.bf16 %v1261, %v1260
      %v1318 = vpack.c.bf16 %v1263, %v1262
      %v1319 = vpack.c.bf16 %v1265, %v1264
      %v1320 = vpack.c.bf16 %v1267, %v1266
      %v1321 = vpack.c.bf16 %v1269, %v1268
      %v1322 = vpack.c.bf16 %v1271, %v1270
      %v1323 = vpack.c.bf16 %v1273, %v1272
      %v1324 = vpack.c.bf16 %v1275, %v1274
      %v1325 = vpack.c.bf16 %v1277, %v1276
      %v1326 = vpack.c.bf16 %v1279, %v1278
      %v1327 = vpack.c.bf16 %v1281, %v1280
      %v1328 = vpack.c.bf16 %v1283, %v1282
      %v1329 = vpack.c.bf16 %v1285, %v1284
      %v1330 = vpack.c.bf16 %v1287, %v1286
      %v1331 = vpack.c.bf16 %v1289, %v1288
      %v1332 = vpack.c.bf16 %v1291, %v1290
      %v1333 = vpack.c.bf16 %v1293, %v1292
      %v1334 = vpack.c.bf16 %v1295, %v1294
      %v1335 = vpack.c.bf16 %v1297, %v1296
      %v1336 = vpack.c.bf16 %v1299, %v1298
      %v1337 = vpack.c.bf16 %v1301, %v1300
      %v1338 = vpack.c.bf16 %v1303, %v1302
      %v1339 = vpack.c.bf16 %v1305, %v1304
      %v1340 = vpack.c.bf16 %v1307, %v1306
      %v1341 = vpack.c.bf16 %v1309, %v1308
      %1342 = vset.pattern.permute.xlu0 0
      %1343 = vperm.xlu0 %1342, %v850
      %v1344 = vpop.permute.xlu0 %1343
      %1345 = vset.pattern.permute.xlu0 0
      %1346 = vperm.xlu0 %1345, %v851
      %v1347 = vpop.permute.xlu0 %1346
      %1348 = vset.pattern.permute.xlu0 0
      %1349 = vperm.xlu0 %1348, %v852
      %v1350 = vpop.permute.xlu0 %1349
      %1351 = vset.pattern.permute.xlu0 0
      %1352 = vperm.xlu0 %1351, %v853
      %v1353 = vpop.permute.xlu0 %1352
      %1354 = vset.pattern.permute.xlu0 0
      %1355 = vperm.xlu0 %1354, %v854
      %v1356 = vpop.permute.xlu0 %1355
      %1357 = vset.pattern.permute.xlu0 0
      %1358 = vperm.xlu0 %1357, %v855
      %v1359 = vpop.permute.xlu0 %1358
      %1360 = vset.pattern.permute.xlu0 0
      %1361 = vperm.xlu0 %1360, %v856
      %v1362 = vpop.permute.xlu0 %1361
      %1363 = vset.pattern.permute.xlu0 0
      %1364 = vperm.xlu0 %1363, %v857
      %v1365 = vpop.permute.xlu0 %1364
      %1366 = vset.pattern.permute.xlu0 0
      %1367 = vperm.xlu0 %1366, %v858
      %v1368 = vpop.permute.xlu0 %1367
      %1369 = vset.pattern.permute.xlu0 0
      %1370 = vperm.xlu0 %1369, %v859
      %v1371 = vpop.permute.xlu0 %1370
      %1372 = vset.pattern.permute.xlu0 0
      %1373 = vperm.xlu0 %1372, %v860
      %v1374 = vpop.permute.xlu0 %1373
      %1375 = vset.pattern.permute.xlu0 0
      %1376 = vperm.xlu0 %1375, %v861
      %v1377 = vpop.permute.xlu0 %1376
      %1378 = vset.pattern.permute.xlu0 0
      %1379 = vperm.xlu0 %1378, %v862
      %v1380 = vpop.permute.xlu0 %1379
      %1381 = vset.pattern.permute.xlu0 0
      %1382 = vperm.xlu0 %1381, %v863
      %v1383 = vpop.permute.xlu0 %1382
      %1384 = vset.pattern.permute.xlu0 0
      %1385 = vperm.xlu0 %1384, %v864
      %v1386 = vpop.permute.xlu0 %1385
      %1387 = vset.pattern.permute.xlu0 0
      %1388 = vperm.xlu0 %1387, %v865
      %v1389 = vpop.permute.xlu0 %1388
      %1390 = vset.pattern.permute.xlu0 0
      %1391 = vperm.xlu0 %1390, %v866
      %v1392 = vpop.permute.xlu0 %1391
      %1393 = vset.pattern.permute.xlu0 0
      %1394 = vperm.xlu0 %1393, %v867
      %v1395 = vpop.permute.xlu0 %1394
      %1396 = vset.pattern.permute.xlu0 0
      %1397 = vperm.xlu0 %1396, %v868
      %v1398 = vpop.permute.xlu0 %1397
      %1399 = vset.pattern.permute.xlu0 0
      %1400 = vperm.xlu0 %1399, %v869
      %v1401 = vpop.permute.xlu0 %1400
      %1402 = vset.pattern.permute.xlu0 0
      %1403 = vperm.xlu0 %1402, %v870
      %v1404 = vpop.permute.xlu0 %1403
      %1405 = vset.pattern.permute.xlu0 0
      %1406 = vperm.xlu0 %1405, %v871
      %v1407 = vpop.permute.xlu0 %1406
      %1408 = vset.pattern.permute.xlu0 0
      %1409 = vperm.xlu0 %1408, %v872
      %v1410 = vpop.permute.xlu0 %1409
      %1411 = vset.pattern.permute.xlu0 0
      %1412 = vperm.xlu0 %1411, %v873
      %v1413 = vpop.permute.xlu0 %1412
      %1414 = vset.pattern.permute.xlu0 0
      %1415 = vperm.xlu0 %1414, %v874
      %v1416 = vpop.permute.xlu0 %1415
      %1417 = vset.pattern.permute.xlu0 0
      %1418 = vperm.xlu0 %1417, %v875
      %v1419 = vpop.permute.xlu0 %1418
      %1420 = vset.pattern.permute.xlu0 0
      %1421 = vperm.xlu0 %1420, %v876
      %v1422 = vpop.permute.xlu0 %1421
      %1423 = vset.pattern.permute.xlu0 0
      %1424 = vperm.xlu0 %1423, %v877
      %v1425 = vpop.permute.xlu0 %1424
      %1426 = vset.pattern.permute.xlu0 0
      %1427 = vperm.xlu0 %1426, %v878
      %v1428 = vpop.permute.xlu0 %1427
      %1429 = vset.pattern.permute.xlu0 0
      %1430 = vperm.xlu0 %1429, %v879
      %v1431 = vpop.permute.xlu0 %1430
      %1432 = vset.pattern.permute.xlu0 0
      %1433 = vperm.xlu0 %1432, %v880
      %v1434 = vpop.permute.xlu0 %1433
      %1435 = vset.pattern.permute.xlu0 0
      %1436 = vperm.xlu0 %1435, %v881
      %v1437 = vpop.permute.xlu0 %1436
      %1438 = vset.pattern.permute.xlu0 0
      %1439 = vperm.xlu0 %1438, %v882
      %v1440 = vpop.permute.xlu0 %1439
      %1441 = vset.pattern.permute.xlu0 0
      %1442 = vperm.xlu0 %1441, %v883
      %v1443 = vpop.permute.xlu0 %1442
      %1444 = vset.pattern.permute.xlu0 0
      %1445 = vperm.xlu0 %1444, %v884
      %v1446 = vpop.permute.xlu0 %1445
      %1447 = vset.pattern.permute.xlu0 0
      %1448 = vperm.xlu0 %1447, %v885
      %v1449 = vpop.permute.xlu0 %1448
      %1450 = vset.pattern.permute.xlu0 0
      %1451 = vperm.xlu0 %1450, %v886
      %v1452 = vpop.permute.xlu0 %1451
      %1453 = vset.pattern.permute.xlu0 0
      %1454 = vperm.xlu0 %1453, %v887
      %v1455 = vpop.permute.xlu0 %1454
      %1456 = vset.pattern.permute.xlu0 0
      %1457 = vperm.xlu0 %1456, %v888
      %v1458 = vpop.permute.xlu0 %1457
      %1459 = vset.pattern.permute.xlu0 0
      %1460 = vperm.xlu0 %1459, %v889
      %v1461 = vpop.permute.xlu0 %1460
      %1462 = vset.pattern.permute.xlu0 0
      %1463 = vperm.xlu0 %1462, %v890
      %v1464 = vpop.permute.xlu0 %1463
      %1465 = vset.pattern.permute.xlu0 0
      %1466 = vperm.xlu0 %1465, %v891
      %v1467 = vpop.permute.xlu0 %1466
      %1468 = vset.pattern.permute.xlu0 0
      %1469 = vperm.xlu0 %1468, %v892
      %v1470 = vpop.permute.xlu0 %1469
      %1471 = vset.pattern.permute.xlu0 0
      %1472 = vperm.xlu0 %1471, %v893
      %v1473 = vpop.permute.xlu0 %1472
      %1474 = vset.pattern.permute.xlu0 0
      %1475 = vperm.xlu0 %1474, %v894
      %v1476 = vpop.permute.xlu0 %1475
      %1477 = vset.pattern.permute.xlu0 0
      %1478 = vperm.xlu0 %1477, %v895
      %v1479 = vpop.permute.xlu0 %1478
      %1480 = vset.pattern.permute.xlu0 0
      %1481 = vperm.xlu0 %1480, %v896
      %v1482 = vpop.permute.xlu0 %1481
      %1483 = vset.pattern.permute.xlu0 0
      %1484 = vperm.xlu0 %1483, %v897
      %v1485 = vpop.permute.xlu0 %1484
      %1486 = vset.pattern.permute.xlu0 0
      %1487 = vperm.xlu0 %1486, %v898
      %v1488 = vpop.permute.xlu0 %1487
      %1489 = vset.pattern.permute.xlu0 0
      %1490 = vperm.xlu0 %1489, %v899
      %v1491 = vpop.permute.xlu0 %1490
      %1492 = vset.pattern.permute.xlu0 0
      %1493 = vperm.xlu0 %1492, %v900
      %v1494 = vpop.permute.xlu0 %1493
      %1495 = vset.pattern.permute.xlu0 0
      %1496 = vperm.xlu0 %1495, %v901
      %v1497 = vpop.permute.xlu0 %1496
      %1498 = vset.pattern.permute.xlu0 0
      %1499 = vperm.xlu0 %1498, %v902
      %v1500 = vpop.permute.xlu0 %1499
      %1501 = vset.pattern.permute.xlu0 0
      %1502 = vperm.xlu0 %1501, %v903
      %v1503 = vpop.permute.xlu0 %1502
      %1504 = vset.pattern.permute.xlu0 0
      %1505 = vperm.xlu0 %1504, %v904
      %v1506 = vpop.permute.xlu0 %1505
      %1507 = vset.pattern.permute.xlu0 0
      %1508 = vperm.xlu0 %1507, %v905
      %v1509 = vpop.permute.xlu0 %1508
      %1510 = vset.pattern.permute.xlu0 0
      %1511 = vperm.xlu0 %1510, %v906
      %v1512 = vpop.permute.xlu0 %1511
      %1513 = vset.pattern.permute.xlu0 0
      %1514 = vperm.xlu0 %1513, %v907
      %v1515 = vpop.permute.xlu0 %1514
      %1516 = vset.pattern.permute.xlu0 0
      %1517 = vperm.xlu0 %1516, %v908
      %v1518 = vpop.permute.xlu0 %1517
      %1519 = vset.pattern.permute.xlu0 0
      %1520 = vperm.xlu0 %1519, %v909
      %v1521 = vpop.permute.xlu0 %1520
      %1522 = vset.pattern.permute.xlu0 0
      %1523 = vperm.xlu0 %1522, %v910
      %v1524 = vpop.permute.xlu0 %1523
      %1525 = vset.pattern.permute.xlu0 0
      %1526 = vperm.xlu0 %1525, %v911
      %v1527 = vpop.permute.xlu0 %1526
      %1528 = vset.pattern.permute.xlu0 0
      %1529 = vperm.xlu0 %1528, %v912
      %v1530 = vpop.permute.xlu0 %1529
      %1531 = vset.pattern.permute.xlu0 0
      %1532 = vperm.xlu0 %1531, %v913
      %v1533 = vpop.permute.xlu0 %1532
      %vm1534 = vcmp.eq.s32.totalorder %v916, %v1344
      %vm1535 = vcmp.eq.s32.totalorder %v916, %v1347
      %vm1536 = vcmp.eq.s32.totalorder %v916, %v1350
      %vm1537 = vcmp.eq.s32.totalorder %v916, %v1353
      %vm1538 = vcmp.eq.s32.totalorder %v916, %v1356
      %vm1539 = vcmp.eq.s32.totalorder %v916, %v1359
      %vm1540 = vcmp.eq.s32.totalorder %v916, %v1362
      %vm1541 = vcmp.eq.s32.totalorder %v916, %v1365
      %vm1542 = vcmp.eq.s32.totalorder %v916, %v1368
      %vm1543 = vcmp.eq.s32.totalorder %v916, %v1371
      %vm1544 = vcmp.eq.s32.totalorder %v916, %v1374
      %vm1545 = vcmp.eq.s32.totalorder %v916, %v1377
      %vm1546 = vcmp.eq.s32.totalorder %v916, %v1380
      %vm1547 = vcmp.eq.s32.totalorder %v916, %v1383
      %vm1548 = vcmp.eq.s32.totalorder %v916, %v1386
      %vm1549 = vcmp.eq.s32.totalorder %v916, %v1389
      %vm1550 = vcmp.eq.s32.totalorder %v916, %v1392
      %vm1551 = vcmp.eq.s32.totalorder %v916, %v1395
      %vm1552 = vcmp.eq.s32.totalorder %v916, %v1398
      %vm1553 = vcmp.eq.s32.totalorder %v916, %v1401
      %vm1554 = vcmp.eq.s32.totalorder %v916, %v1404
      %vm1555 = vcmp.eq.s32.totalorder %v916, %v1407
      %vm1556 = vcmp.eq.s32.totalorder %v916, %v1410
      %vm1557 = vcmp.eq.s32.totalorder %v916, %v1413
      %vm1558 = vcmp.eq.s32.totalorder %v916, %v1416
      %vm1559 = vcmp.eq.s32.totalorder %v916, %v1419
      %vm1560 = vcmp.eq.s32.totalorder %v916, %v1422
      %vm1561 = vcmp.eq.s32.totalorder %v916, %v1425
      %vm1562 = vcmp.eq.s32.totalorder %v916, %v1428
      %vm1563 = vcmp.eq.s32.totalorder %v916, %v1431
      %vm1564 = vcmp.eq.s32.totalorder %v916, %v1434
      %vm1565 = vcmp.eq.s32.totalorder %v916, %v1437
      %vm1566 = vcmp.eq.s32.totalorder %v916, %v1440
      %vm1567 = vcmp.eq.s32.totalorder %v916, %v1443
      %vm1568 = vcmp.eq.s32.totalorder %v916, %v1446
      %vm1569 = vcmp.eq.s32.totalorder %v916, %v1449
      %vm1570 = vcmp.eq.s32.totalorder %v916, %v1452
      %vm1571 = vcmp.eq.s32.totalorder %v916, %v1455
      %vm1572 = vcmp.eq.s32.totalorder %v916, %v1458
      %vm1573 = vcmp.eq.s32.totalorder %v916, %v1461
      %vm1574 = vcmp.eq.s32.totalorder %v916, %v1464
      %vm1575 = vcmp.eq.s32.totalorder %v916, %v1467
      %vm1576 = vcmp.eq.s32.totalorder %v916, %v1470
      %vm1577 = vcmp.eq.s32.totalorder %v916, %v1473
      %vm1578 = vcmp.eq.s32.totalorder %v916, %v1476
      %vm1579 = vcmp.eq.s32.totalorder %v916, %v1479
      %vm1580 = vcmp.eq.s32.totalorder %v916, %v1482
      %vm1581 = vcmp.eq.s32.totalorder %v916, %v1485
      %vm1582 = vcmp.eq.s32.totalorder %v916, %v1488
      %vm1583 = vcmp.eq.s32.totalorder %v916, %v1491
      %vm1584 = vcmp.eq.s32.totalorder %v916, %v1494
      %vm1585 = vcmp.eq.s32.totalorder %v916, %v1497
      %vm1586 = vcmp.eq.s32.totalorder %v916, %v1500
      %vm1587 = vcmp.eq.s32.totalorder %v916, %v1503
      %vm1588 = vcmp.eq.s32.totalorder %v916, %v1506
      %vm1589 = vcmp.eq.s32.totalorder %v916, %v1509
      %vm1590 = vcmp.eq.s32.totalorder %v916, %v1512
      %vm1591 = vcmp.eq.s32.totalorder %v916, %v1515
      %vm1592 = vcmp.eq.s32.totalorder %v916, %v1518
      %vm1593 = vcmp.eq.s32.totalorder %v916, %v1521
      %vm1594 = vcmp.eq.s32.totalorder %v916, %v1524
      %vm1595 = vcmp.eq.s32.totalorder %v916, %v1527
      %vm1596 = vcmp.eq.s32.totalorder %v916, %v1530
      %vm1597 = vcmp.eq.s32.totalorder %v916, %v1533
      %v1598 = vsel %vm1534, 1, 0
      %v1599 = vsel %vm1535, 1, 0
      %v1600 = vsel %vm1536, 1, 0
      %v1601 = vsel %vm1537, 1, 0
      %v1602 = vsel %vm1538, 1, 0
      %v1603 = vsel %vm1539, 1, 0
      %v1604 = vsel %vm1540, 1, 0
      %v1605 = vsel %vm1541, 1, 0
      %v1606 = vsel %vm1542, 1, 0
      %v1607 = vsel %vm1543, 1, 0
      %v1608 = vsel %vm1544, 1, 0
      %v1609 = vsel %vm1545, 1, 0
      %v1610 = vsel %vm1546, 1, 0
      %v1611 = vsel %vm1547, 1, 0
      %v1612 = vsel %vm1548, 1, 0
      %v1613 = vsel %vm1549, 1, 0
      %v1614 = vsel %vm1550, 1, 0
      %v1615 = vsel %vm1551, 1, 0
      %v1616 = vsel %vm1552, 1, 0
      %v1617 = vsel %vm1553, 1, 0
      %v1618 = vsel %vm1554, 1, 0
      %v1619 = vsel %vm1555, 1, 0
      %v1620 = vsel %vm1556, 1, 0
      %v1621 = vsel %vm1557, 1, 0
      %v1622 = vsel %vm1558, 1, 0
      %v1623 = vsel %vm1559, 1, 0
      %v1624 = vsel %vm1560, 1, 0
      %v1625 = vsel %vm1561, 1, 0
      %v1626 = vsel %vm1562, 1, 0
      %v1627 = vsel %vm1563, 1, 0
      %v1628 = vsel %vm1564, 1, 0
      %v1629 = vsel %vm1565, 1, 0
      %v1630 = vsel %vm1566, 1, 0
      %v1631 = vsel %vm1567, 1, 0
      %v1632 = vsel %vm1568, 1, 0
      %v1633 = vsel %vm1569, 1, 0
      %v1634 = vsel %vm1570, 1, 0
      %v1635 = vsel %vm1571, 1, 0
      %v1636 = vsel %vm1572, 1, 0
      %v1637 = vsel %vm1573, 1, 0
      %v1638 = vsel %vm1574, 1, 0
      %v1639 = vsel %vm1575, 1, 0
      %v1640 = vsel %vm1576, 1, 0
      %v1641 = vsel %vm1577, 1, 0
      %v1642 = vsel %vm1578, 1, 0
      %v1643 = vsel %vm1579, 1, 0
      %v1644 = vsel %vm1580, 1, 0
      %v1645 = vsel %vm1581, 1, 0
      %v1646 = vsel %vm1582, 1, 0
      %v1647 = vsel %vm1583, 1, 0
      %v1648 = vsel %vm1584, 1, 0
      %v1649 = vsel %vm1585, 1, 0
      %v1650 = vsel %vm1586, 1, 0
      %v1651 = vsel %vm1587, 1, 0
      %v1652 = vsel %vm1588, 1, 0
      %v1653 = vsel %vm1589, 1, 0
      %v1654 = vsel %vm1590, 1, 0
      %v1655 = vsel %vm1591, 1, 0
      %v1656 = vsel %vm1592, 1, 0
      %v1657 = vsel %vm1593, 1, 0
      %v1658 = vsel %vm1594, 1, 0
      %v1659 = vsel %vm1595, 1, 0
      %v1660 = vsel %vm1596, 1, 0
      %v1661 = vsel %vm1597, 1, 0
      %v1662 = vcvt.s32.f32 %v1598
      %v1663 = vcvt.s32.f32 %v1599
      %v1664 = vcvt.s32.f32 %v1600
      %v1665 = vcvt.s32.f32 %v1601
      %v1666 = vcvt.s32.f32 %v1602
      %v1667 = vcvt.s32.f32 %v1603
      %v1668 = vcvt.s32.f32 %v1604
      %v1669 = vcvt.s32.f32 %v1605
      %v1670 = vcvt.s32.f32 %v1606
      %v1671 = vcvt.s32.f32 %v1607
      %v1672 = vcvt.s32.f32 %v1608
      %v1673 = vcvt.s32.f32 %v1609
      %v1674 = vcvt.s32.f32 %v1610
      %v1675 = vcvt.s32.f32 %v1611
      %v1676 = vcvt.s32.f32 %v1612
      %v1677 = vcvt.s32.f32 %v1613
      %v1678 = vcvt.s32.f32 %v1614
      %v1679 = vcvt.s32.f32 %v1615
      %v1680 = vcvt.s32.f32 %v1616
      %v1681 = vcvt.s32.f32 %v1617
      %v1682 = vcvt.s32.f32 %v1618
      %v1683 = vcvt.s32.f32 %v1619
      %v1684 = vcvt.s32.f32 %v1620
      %v1685 = vcvt.s32.f32 %v1621
      %v1686 = vcvt.s32.f32 %v1622
      %v1687 = vcvt.s32.f32 %v1623
      %v1688 = vcvt.s32.f32 %v1624
      %v1689 = vcvt.s32.f32 %v1625
      %v1690 = vcvt.s32.f32 %v1626
      %v1691 = vcvt.s32.f32 %v1627
      %v1692 = vcvt.s32.f32 %v1628
      %v1693 = vcvt.s32.f32 %v1629
      %v1694 = vcvt.s32.f32 %v1630
      %v1695 = vcvt.s32.f32 %v1631
      %v1696 = vcvt.s32.f32 %v1632
      %v1697 = vcvt.s32.f32 %v1633
      %v1698 = vcvt.s32.f32 %v1634
      %v1699 = vcvt.s32.f32 %v1635
      %v1700 = vcvt.s32.f32 %v1636
      %v1701 = vcvt.s32.f32 %v1637
      %v1702 = vcvt.s32.f32 %v1638
      %v1703 = vcvt.s32.f32 %v1639
      %v1704 = vcvt.s32.f32 %v1640
      %v1705 = vcvt.s32.f32 %v1641
      %v1706 = vcvt.s32.f32 %v1642
      %v1707 = vcvt.s32.f32 %v1643
      %v1708 = vcvt.s32.f32 %v1644
      %v1709 = vcvt.s32.f32 %v1645
      %v1710 = vcvt.s32.f32 %v1646
      %v1711 = vcvt.s32.f32 %v1647
      %v1712 = vcvt.s32.f32 %v1648
      %v1713 = vcvt.s32.f32 %v1649
      %v1714 = vcvt.s32.f32 %v1650
      %v1715 = vcvt.s32.f32 %v1651
      %v1716 = vcvt.s32.f32 %v1652
      %v1717 = vcvt.s32.f32 %v1653
      %v1718 = vcvt.s32.f32 %v1654
      %v1719 = vcvt.s32.f32 %v1655
      %v1720 = vcvt.s32.f32 %v1656
      %v1721 = vcvt.s32.f32 %v1657
      %v1722 = vcvt.s32.f32 %v1658
      %v1723 = vcvt.s32.f32 %v1659
      %v1724 = vcvt.s32.f32 %v1660
      %v1725 = vcvt.s32.f32 %v1661
      %v1726 = vpack.c.bf16 %v1663, %v1662
      %v1727 = vpack.c.bf16 %v1665, %v1664
      %v1728 = vpack.c.bf16 %v1667, %v1666
      %v1729 = vpack.c.bf16 %v1669, %v1668
      %v1730 = vpack.c.bf16 %v1671, %v1670
      %v1731 = vpack.c.bf16 %v1673, %v1672
      %v1732 = vpack.c.bf16 %v1675, %v1674
      %v1733 = vpack.c.bf16 %v1677, %v1676
      %v1734 = vpack.c.bf16 %v1679, %v1678
      %v1735 = vpack.c.bf16 %v1681, %v1680
      %v1736 = vpack.c.bf16 %v1683, %v1682
      %v1737 = vpack.c.bf16 %v1685, %v1684
      %v1738 = vpack.c.bf16 %v1687, %v1686
      %v1739 = vpack.c.bf16 %v1689, %v1688
      %v1740 = vpack.c.bf16 %v1691, %v1690
      %v1741 = vpack.c.bf16 %v1693, %v1692
      %v1742 = vpack.c.bf16 %v1695, %v1694
      %v1743 = vpack.c.bf16 %v1697, %v1696
      %v1744 = vpack.c.bf16 %v1699, %v1698
      %v1745 = vpack.c.bf16 %v1701, %v1700
      %v1746 = vpack.c.bf16 %v1703, %v1702
      %v1747 = vpack.c.bf16 %v1705, %v1704
      %v1748 = vpack.c.bf16 %v1707, %v1706
      %v1749 = vpack.c.bf16 %v1709, %v1708
      %v1750 = vpack.c.bf16 %v1711, %v1710
      %v1751 = vpack.c.bf16 %v1713, %v1712
      %v1752 = vpack.c.bf16 %v1715, %v1714
      %v1753 = vpack.c.bf16 %v1717, %v1716
      %v1754 = vpack.c.bf16 %v1719, %v1718
      %v1755 = vpack.c.bf16 %v1721, %v1720
      %v1756 = vpack.c.bf16 %v1723, %v1722
      %v1757 = vpack.c.bf16 %v1725, %v1724
      %v1758 = vlaneseq
      %v1759 = vshrl.u32 %v1758, 7
      %v1760 = vsub.s32 0, %v1759
      %v1761 = vrot.slane %v914, %v1760
      %v1762 = vlaneseq
      %v1763 = vshrl.u32 %v1762, 7
      %v1764 = vsub.s32 1, %v1763
      %v1765 = vrot.slane %v914, %v1764
      %v1766 = vlaneseq
      %v1767 = vshrl.u32 %v1766, 7
      %v1768 = vsub.s32 2, %v1767
      %v1769 = vrot.slane %v914, %v1768
      %v1770 = vlaneseq
      %v1771 = vshrl.u32 %v1770, 7
      %v1772 = vsub.s32 3, %v1771
      %v1773 = vrot.slane %v914, %v1772
      %vm1774 = vcmp.eq.s32.totalorder %v918, %v1761
      %vm1775 = vcmp.eq.s32.totalorder %v918, %v1765
      %vm1776 = vcmp.eq.s32.totalorder %v918, %v1769
      %vm1777 = vcmp.eq.s32.totalorder %v918, %v1773
      %vm1778 = vcmp.eq.s32.totalorder %v919, %v1761
      %vm1779 = vcmp.eq.s32.totalorder %v919, %v1765
      %vm1780 = vcmp.eq.s32.totalorder %v919, %v1769
      %vm1781 = vcmp.eq.s32.totalorder %v919, %v1773
      %vm1782 = vcmp.eq.s32.totalorder %v920, %v1761
      %vm1783 = vcmp.eq.s32.totalorder %v920, %v1765
      %vm1784 = vcmp.eq.s32.totalorder %v920, %v1769
      %vm1785 = vcmp.eq.s32.totalorder %v920, %v1773
      %vm1786 = vcmp.eq.s32.totalorder %v921, %v1761
      %vm1787 = vcmp.eq.s32.totalorder %v921, %v1765
      %vm1788 = vcmp.eq.s32.totalorder %v921, %v1769
      %vm1789 = vcmp.eq.s32.totalorder %v921, %v1773
      %vm1790 = vcmp.eq.s32.totalorder %v922, %v1761
      %vm1791 = vcmp.eq.s32.totalorder %v922, %v1765
      %vm1792 = vcmp.eq.s32.totalorder %v922, %v1769
      %vm1793 = vcmp.eq.s32.totalorder %v922, %v1773
      %vm1794 = vcmp.eq.s32.totalorder %v923, %v1761
      %vm1795 = vcmp.eq.s32.totalorder %v923, %v1765
      %vm1796 = vcmp.eq.s32.totalorder %v923, %v1769
      %vm1797 = vcmp.eq.s32.totalorder %v923, %v1773
      %vm1798 = vcmp.eq.s32.totalorder %v924, %v1761
      %vm1799 = vcmp.eq.s32.totalorder %v924, %v1765
      %vm1800 = vcmp.eq.s32.totalorder %v924, %v1769
      %vm1801 = vcmp.eq.s32.totalorder %v924, %v1773
      %vm1802 = vcmp.eq.s32.totalorder %v925, %v1761
      %vm1803 = vcmp.eq.s32.totalorder %v925, %v1765
      %vm1804 = vcmp.eq.s32.totalorder %v925, %v1769
      %vm1805 = vcmp.eq.s32.totalorder %v925, %v1773
      %v1806 = vsel %vm1774, 1, 0
      %v1807 = vsel %vm1775, 1, 0
      %v1808 = vsel %vm1776, 1, 0
      %v1809 = vsel %vm1777, 1, 0
      %v1810 = vsel %vm1778, 1, 0
      %v1811 = vsel %vm1779, 1, 0
      %v1812 = vsel %vm1780, 1, 0
      %v1813 = vsel %vm1781, 1, 0
      %v1814 = vsel %vm1782, 1, 0
      %v1815 = vsel %vm1783, 1, 0
      %v1816 = vsel %vm1784, 1, 0
      %v1817 = vsel %vm1785, 1, 0
      %v1818 = vsel %vm1786, 1, 0
      %v1819 = vsel %vm1787, 1, 0
      %v1820 = vsel %vm1788, 1, 0
      %v1821 = vsel %vm1789, 1, 0
      %v1822 = vsel %vm1790, 1, 0
      %v1823 = vsel %vm1791, 1, 0
      %v1824 = vsel %vm1792, 1, 0
      %v1825 = vsel %vm1793, 1, 0
      %v1826 = vsel %vm1794, 1, 0
      %v1827 = vsel %vm1795, 1, 0
      %v1828 = vsel %vm1796, 1, 0
      %v1829 = vsel %vm1797, 1, 0
      %v1830 = vsel %vm1798, 1, 0
      %v1831 = vsel %vm1799, 1, 0
      %v1832 = vsel %vm1800, 1, 0
      %v1833 = vsel %vm1801, 1, 0
      %v1834 = vsel %vm1802, 1, 0
      %v1835 = vsel %vm1803, 1, 0
      %v1836 = vsel %vm1804, 1, 0
      %v1837 = vsel %vm1805, 1, 0
      %v1838 = vcvt.s32.f32 %v1806
      %v1839 = vcvt.s32.f32 %v1807
      %v1840 = vcvt.s32.f32 %v1808
      %v1841 = vcvt.s32.f32 %v1809
      %v1842 = vcvt.s32.f32 %v1810
      %v1843 = vcvt.s32.f32 %v1811
      %v1844 = vcvt.s32.f32 %v1812
      %v1845 = vcvt.s32.f32 %v1813
      %v1846 = vcvt.s32.f32 %v1814
      %v1847 = vcvt.s32.f32 %v1815
      %v1848 = vcvt.s32.f32 %v1816
      %v1849 = vcvt.s32.f32 %v1817
      %v1850 = vcvt.s32.f32 %v1818
      %v1851 = vcvt.s32.f32 %v1819
      %v1852 = vcvt.s32.f32 %v1820
      %v1853 = vcvt.s32.f32 %v1821
      %v1854 = vcvt.s32.f32 %v1822
      %v1855 = vcvt.s32.f32 %v1823
      %v1856 = vcvt.s32.f32 %v1824
      %v1857 = vcvt.s32.f32 %v1825
      %v1858 = vcvt.s32.f32 %v1826
      %v1859 = vcvt.s32.f32 %v1827
      %v1860 = vcvt.s32.f32 %v1828
      %v1861 = vcvt.s32.f32 %v1829
      %v1862 = vcvt.s32.f32 %v1830
      %v1863 = vcvt.s32.f32 %v1831
      %v1864 = vcvt.s32.f32 %v1832
      %v1865 = vcvt.s32.f32 %v1833
      %v1866 = vcvt.s32.f32 %v1834
      %v1867 = vcvt.s32.f32 %v1835
      %v1868 = vcvt.s32.f32 %v1836
      %v1869 = vcvt.s32.f32 %v1837
      %v1870 = vpack.c.bf16 %v1842, %v1838
      %v1871 = vpack.c.bf16 %v1843, %v1839
      %v1872 = vpack.c.bf16 %v1844, %v1840
      %v1873 = vpack.c.bf16 %v1845, %v1841
      %v1874 = vpack.c.bf16 %v1850, %v1846
      %v1875 = vpack.c.bf16 %v1851, %v1847
      %v1876 = vpack.c.bf16 %v1852, %v1848
      %v1877 = vpack.c.bf16 %v1853, %v1849
      %v1878 = vpack.c.bf16 %v1858, %v1854
      %v1879 = vpack.c.bf16 %v1859, %v1855
      %v1880 = vpack.c.bf16 %v1860, %v1856
      %v1881 = vpack.c.bf16 %v1861, %v1857
      %v1882 = vpack.c.bf16 %v1866, %v1862
      %v1883 = vpack.c.bf16 %v1867, %v1863
      %v1884 = vpack.c.bf16 %v1868, %v1864
      %v1885 = vpack.c.bf16 %v1869, %v1865
      %v1886 = vld [vmem:[#allocation2] sm:$0xff]
      %v1887 = vld [vmem:[#allocation2 + $0x8] sm:$0xff]
      %v1888 = vld [vmem:[#allocation2 + $0x10] sm:$0xff]
      %v1889 = vld [vmem:[#allocation2 + $0x18] sm:$0xff]
      %vm1890 = vcmask 523264
      %v1892 = vsel %vm1890, %v1726, 0
      %v1895 = vsel %vm1890, %v1727, 0
      %v1898 = vsel %vm1890, %v1728, 0
      %v1901 = vsel %vm1890, %v1729, 0
      %v1904 = vsel %vm1890, %v1730, 0
      %v1907 = vsel %vm1890, %v1731, 0
      %v1910 = vsel %vm1890, %v1732, 0
      %v1913 = vsel %vm1890, %v1733, 0
      %v1916 = vsel %vm1890, %v1734, 0
      %v1919 = vsel %vm1890, %v1735, 0
      %v1922 = vsel %vm1890, %v1736, 0
      %v1925 = vsel %vm1890, %v1737, 0
      %v1928 = vsel %vm1890, %v1738, 0
      %v1931 = vsel %vm1890, %v1739, 0
      %v1934 = vsel %vm1890, %v1740, 0
      %v1937 = vsel %vm1890, %v1741, 0
      %v1940 = vsel %vm1890, %v1742, 0
      %v1943 = vsel %vm1890, %v1743, 0
      %v1946 = vsel %vm1890, %v1744, 0
      %v1949 = vsel %vm1890, %v1745, 0
      %v1952 = vsel %vm1890, %v1746, 0
      %v1955 = vsel %vm1890, %v1747, 0
      %v1958 = vsel %vm1890, %v1748, 0
      %v1961 = vsel %vm1890, %v1749, 0
      %v1964 = vsel %vm1890, %v1750, 0
      %v1967 = vsel %vm1890, %v1751, 0
      %v1970 = vsel %vm1890, %v1752, 0
      %v1973 = vsel %vm1890, %v1753, 0
      %v1976 = vsel %vm1890, %v1754, 0
      %v1979 = vsel %vm1890, %v1755, 0
      %v1982 = vsel %vm1890, %v1756, 0
      %v1985 = vsel %vm1890, %v1757, 0
      %1987 = vmatprep.subr.bf16.mxu0 0
      %1988 = vmatpush1.bf16.msra.mxu0 %v1886
      %1989 = vmatprep.subr.bf16.mxu0 0
      %1990 = vmatpush1.bf16.msra.mxu0 %v1887
      %1991 = vmatprep.subr.bf16.mxu0 0
      %1992 = vmatpush1.bf16.msra.mxu0 %v1888
      %1993 = vmatprep.subr.bf16.mxu0 0
      %1994 = vmatpush1.bf16.msra.mxu0 %v1889
      %1995 = vmatprep.subr.bf16.mxu0 0
      %1996 = vmatpush1.bf16.msra.mxu0 0
      %1997 = vmatprep.subr.bf16.mxu0 0
      %1998 = vmatpush1.bf16.msra.mxu0 0
      %1999 = vmatprep.subr.bf16.mxu0 0
      %2000 = vmatpush1.bf16.msra.mxu0 0
      %2001 = vmatprep.subr.bf16.mxu0 0
      %2002 = vmatpush1.bf16.msra.mxu0 0
      %2003 = vmatprep.subr.bf16.mxu0 0
      %2004 = vmatpush1.bf16.msra.mxu0 0
      %2005 = vmatprep.subr.bf16.mxu0 0
      %2006 = vmatpush1.bf16.msra.mxu0 0
      %2007 = vmatprep.subr.bf16.mxu0 0
      %2008 = vmatpush1.bf16.msra.mxu0 0
      %2009 = vmatprep.subr.bf16.mxu0 0
      %2010 = vmatpush1.bf16.msra.mxu0 0
      %2011 = vmatprep.subr.bf16.mxu0 0
      %2012 = vmatpush1.bf16.msra.mxu0 0
      %2013 = vmatprep.subr.bf16.mxu0 0
      %2014 = vmatpush1.bf16.msra.mxu0 0
      %2015 = vmatprep.subr.bf16.mxu0 0
      %2016 = vmatpush1.bf16.msra.mxu0 0
      %2017 = vmatprep.subr.bf16.mxu0 0
      %2018 = vmatpush1.bf16.msra.mxu0 0
      %2019 = vmatprep.mubr.bf16.mxu0 0
      %2020 = vmatmul.mubr.bf16.gmra.mrb[0].mxu0 %v1892
      %v2021 = vpop.f32.mrb[0].mxu0
      %v2022 = vadd.f32 0.0, %v2021
      %v2023 = vpop.f32.mrb[0].mxu0
      %v2024 = vpop.f32.mrb[0].mxu0
      %v2025 = vadd.f32 0.0, %v2024
      %v2026 = vpop.f32.mrb[0].mxu0
      %2027 = vmatprep.mubr.bf16.mxu0 0
      %2028 = vmatmul.mubr.bf16.gmra.mrb[0].mxu0 %v1895
      %v2029 = vpop.f32.mrb[0].mxu0
      %v2030 = vadd.f32 0.0, %v2029
      %v2031 = vpop.f32.mrb[0].mxu0
      %v2032 = vpop.f32.mrb[0].mxu0
      %v2033 = vadd.f32 0.0, %v2032
      %v2034 = vpop.f32.mrb[0].mxu0
      %2035 = vmatprep.mubr.bf16.mxu0 0
      %2036 = vmatmul.mubr.bf16.gmra.mrb[0].mxu0 %v1898
      %v2037 = vpop.f32.mrb[0].mxu0
      %v2038 = vadd.f32 0.0, %v2037
      %v2039 = vpop.f32.mrb[0].mxu0
      %v2040 = vpop.f32.mrb[0].mxu0
      %v2041 = vadd.f32 0.0, %v2040
      %v2042 = vpop.f32.mrb[0].mxu0
      %2043 = vmatprep.mubr.bf16.mxu0 0
      %2044 = vmatmul.mubr.bf16.gmra.mrb[0].mxu0 %v1901
      %v2045 = vpop.f32.mrb[0].mxu0
      %v2046 = vadd.f32 0.0, %v2045
      %v2047 = vpop.f32.mrb[0].mxu0
      %v2048 = vpop.f32.mrb[0].mxu0
      %v2049 = vadd.f32 0.0, %v2048
      %v2050 = vpop.f32.mrb[0].mxu0
      %2051 = vmatprep.mubr.bf16.mxu0 0
      %2052 = vmatmul.mubr.bf16.gmra.mrb[0].mxu0 %v1904
      %v2053 = vpop.f32.mrb[0].mxu0
      %v2054 = vadd.f32 0.0, %v2053
      %v2055 = vpop.f32.mrb[0].mxu0
      %v2056 = vpop.f32.mrb[0].mxu0
      %v2057 = vadd.f32 0.0, %v2056
      %v2058 = vpop.f32.mrb[0].mxu0
      %2059 = vmatprep.mubr.bf16.mxu0 0
      %2060 = vmatmul.mubr.bf16.gmra.mrb[0].mxu0 %v1907
      %v2061 = vpop.f32.mrb[0].mxu0
      %v2062 = vadd.f32 0.0, %v2061
      %v2063 = vpop.f32.mrb[0].mxu0
      %v2064 = vpop.f32.mrb[0].mxu0
      %v2065 = vadd.f32 0.0, %v2064
      %v2066 = vpop.f32.mrb[0].mxu0
      %2067 = vmatprep.mubr.bf16.mxu0 0
      %2068 = vmatmul.mubr.bf16.gmra.mrb[0].mxu0 %v1910
      %v2069 = vpop.f32.mrb[0].mxu0
      %v2070 = vadd.f32 0.0, %v2069
      %v2071 = vpop.f32.mrb[0].mxu0
      %v2072 = vpop.f32.mrb[0].mxu0
      %v2073 = vadd.f32 0.0, %v2072
      %v2074 = vpop.f32.mrb[0].mxu0
      %2075 = vmatprep.mubr.bf16.mxu0 0
      %2076 = vmatmul.mubr.bf16.gmra.mrb[0].mxu0 %v1913
      %v2077 = vpop.f32.mrb[0].mxu0
      %v2078 = vadd.f32 0.0, %v2077
      %v2079 = vpop.f32.mrb[0].mxu0
      %v2080 = vpop.f32.mrb[0].mxu0
      %v2081 = vadd.f32 0.0, %v2080
      %v2082 = vpop.f32.mrb[0].mxu0
      %2083 = vmatprep.mubr.bf16.mxu0 0
      %2084 = vmatmul.mubr.bf16.gmra.mrb[0].mxu0 %v1916
      %v2085 = vpop.f32.mrb[0].mxu0
      %v2086 = vadd.f32 0.0, %v2085
      %v2087 = vpop.f32.mrb[0].mxu0
      %v2088 = vpop.f32.mrb[0].mxu0
      %v2089 = vadd.f32 0.0, %v2088
      %v2090 = vpop.f32.mrb[0].mxu0
      %2091 = vmatprep.mubr.bf16.mxu0 0
      %2092 = vmatmul.mubr.bf16.gmra.mrb[0].mxu0 %v1919
      %v2093 = vpop.f32.mrb[0].mxu0
      %v2094 = vadd.f32 0.0, %v2093
      %v2095 = vpop.f32.mrb[0].mxu0
      %v2096 = vpop.f32.mrb[0].mxu0
      %v2097 = vadd.f32 0.0, %v2096
      %v2098 = vpop.f32.mrb[0].mxu0
      %2099 = vmatprep.mubr.bf16.mxu0 0
      %2100 = vmatmul.mubr.bf16.gmra.mrb[0].mxu0 %v1922
      %v2101 = vpop.f32.mrb[0].mxu0
      %v2102 = vadd.f32 0.0, %v2101
      %v2103 = vpop.f32.mrb[0].mxu0
      %v2104 = vpop.f32.mrb[0].mxu0
      %v2105 = vadd.f32 0.0, %v2104
      %v2106 = vpop.f32.mrb[0].mxu0
      %2107 = vmatprep.mubr.bf16.mxu0 0
      %2108 = vmatmul.mubr.bf16.gmra.mrb[0].mxu0 %v1925
      %v2109 = vpop.f32.mrb[0].mxu0
      %v2110 = vadd.f32 0.0, %v2109
      %v2111 = vpop.f32.mrb[0].mxu0
      %v2112 = vpop.f32.mrb[0].mxu0
      %v2113 = vadd.f32 0.0, %v2112
      %v2114 = vpop.f32.mrb[0].mxu0
      %2115 = vmatprep.mubr.bf16.mxu0 0
      %2116 = vmatmul.mubr.bf16.gmra.mrb[0].mxu0 %v1928
      %v2117 = vpop.f32.mrb[0].mxu0
      %v2118 = vadd.f32 0.0, %v2117
      %v2119 = vpop.f32.mrb[0].mxu0
      %v2120 = vpop.f32.mrb[0].mxu0
      %v2121 = vadd.f32 0.0, %v2120
      %v2122 = vpop.f32.mrb[0].mxu0
      %2123 = vmatprep.mubr.bf16.mxu0 0
      %2124 = vmatmul.mubr.bf16.gmra.mrb[0].mxu0 %v1931
      %v2125 = vpop.f32.mrb[0].mxu0
      %v2126 = vadd.f32 0.0, %v2125
      %v2127 = vpop.f32.mrb[0].mxu0
      %v2128 = vpop.f32.mrb[0].mxu0
      %v2129 = vadd.f32 0.0, %v2128
      %v2130 = vpop.f32.mrb[0].mxu0
      %2131 = vmatprep.mubr.bf16.mxu0 0
      %2132 = vmatmul.mubr.bf16.gmra.mrb[0].mxu0 %v1934
      %v2133 = vpop.f32.mrb[0].mxu0
      %v2134 = vadd.f32 0.0, %v2133
      %v2135 = vpop.f32.mrb[0].mxu0
      %v2136 = vpop.f32.mrb[0].mxu0
      %v2137 = vadd.f32 0.0, %v2136
      %v2138 = vpop.f32.mrb[0].mxu0
      %2139 = vmatprep.mubr.bf16.mxu0 0
      %2140 = vmatmul.mubr.bf16.gmra.mrb[0].mxu0 %v1937
      %v2141 = vpop.f32.mrb[0].mxu0
      %v2142 = vadd.f32 0.0, %v2141
      %v2143 = vpop.f32.mrb[0].mxu0
      %v2144 = vpop.f32.mrb[0].mxu0
      %v2145 = vadd.f32 0.0, %v2144
      %v2146 = vpop.f32.mrb[0].mxu0
      %2147 = vmatprep.mubr.bf16.mxu0 0
      %2148 = vmatmul.mubr.bf16.gmra.mrb[0].mxu0 %v1940
      %v2149 = vpop.f32.mrb[0].mxu0
      %v2150 = vadd.f32 0.0, %v2149
      %v2151 = vpop.f32.mrb[0].mxu0
      %v2152 = vpop.f32.mrb[0].mxu0
      %v2153 = vadd.f32 0.0, %v2152
      %v2154 = vpop.f32.mrb[0].mxu0
      %2155 = vmatprep.mubr.bf16.mxu0 0
      %2156 = vmatmul.mubr.bf16.gmra.mrb[0].mxu0 %v1943
      %v2157 = vpop.f32.mrb[0].mxu0
      %v2158 = vadd.f32 0.0, %v2157
      %v2159 = vpop.f32.mrb[0].mxu0
      %v2160 = vpop.f32.mrb[0].mxu0
      %v2161 = vadd.f32 0.0, %v2160
      %v2162 = vpop.f32.mrb[0].mxu0
      %2163 = vmatprep.mubr.bf16.mxu0 0
      %2164 = vmatmul.mubr.bf16.gmra.mrb[0].mxu0 %v1946
      %v2165 = vpop.f32.mrb[0].mxu0
      %v2166 = vadd.f32 0.0, %v2165
      %v2167 = vpop.f32.mrb[0].mxu0
      %v2168 = vpop.f32.mrb[0].mxu0
      %v2169 = vadd.f32 0.0, %v2168
      %v2170 = vpop.f32.mrb[0].mxu0
      %2171 = vmatprep.mubr.bf16.mxu0 0
      %2172 = vmatmul.mubr.bf16.gmra.mrb[0].mxu0 %v1949
      %v2173 = vpop.f32.mrb[0].mxu0
      %v2174 = vadd.f32 0.0, %v2173
      %v2175 = vpop.f32.mrb[0].mxu0
      %v2176 = vpop.f32.mrb[0].mxu0
      %v2177 = vadd.f32 0.0, %v2176
      %v2178 = vpop.f32.mrb[0].mxu0
      %2179 = vmatprep.mubr.bf16.mxu0 0
      %2180 = vmatmul.mubr.bf16.gmra.mrb[0].mxu0 %v1952
      %v2181 = vpop.f32.mrb[0].mxu0
      %v2182 = vadd.f32 0.0, %v2181
      %v2183 = vpop.f32.mrb[0].mxu0
      %v2184 = vpop.f32.mrb[0].mxu0
      %v2185 = vadd.f32 0.0, %v2184
      %v2186 = vpop.f32.mrb[0].mxu0
      %2187 = vmatprep.mubr.bf16.mxu0 0
      %2188 = vmatmul.mubr.bf16.gmra.mrb[0].mxu0 %v1955
      %v2189 = vpop.f32.mrb[0].mxu0
      %v2190 = vadd.f32 0.0, %v2189
      %v2191 = vpop.f32.mrb[0].mxu0
      %v2192 = vpop.f32.mrb[0].mxu0
      %v2193 = vadd.f32 0.0, %v2192
      %v2194 = vpop.f32.mrb[0].mxu0
      %2195 = vmatprep.mubr.bf16.mxu0 0
      %2196 = vmatmul.mubr.bf16.gmra.mrb[0].mxu0 %v1958
      %v2197 = vpop.f32.mrb[0].mxu0
      %v2198 = vadd.f32 0.0, %v2197
      %v2199 = vpop.f32.mrb[0].mxu0
      %v2200 = vpop.f32.mrb[0].mxu0
      %v2201 = vadd.f32 0.0, %v2200
      %v2202 = vpop.f32.mrb[0].mxu0
      %2203 = vmatprep.mubr.bf16.mxu0 0
      %2204 = vmatmul.mubr.bf16.gmra.mrb[0].mxu0 %v1961
      %v2205 = vpop.f32.mrb[0].mxu0
      %v2206 = vadd.f32 0.0, %v2205
      %v2207 = vpop.f32.mrb[0].mxu0
      %v2208 = vpop.f32.mrb[0].mxu0
      %v2209 = vadd.f32 0.0, %v2208
      %v2210 = vpop.f32.mrb[0].mxu0
      %2211 = vmatprep.mubr.bf16.mxu0 0
      %2212 = vmatmul.mubr.bf16.gmra.mrb[0].mxu0 %v1964
      %v2213 = vpop.f32.mrb[0].mxu0
      %v2214 = vadd.f32 0.0, %v2213
      %v2215 = vpop.f32.mrb[0].mxu0
      %v2216 = vpop.f32.mrb[0].mxu0
      %v2217 = vadd.f32 0.0, %v2216
      %v2218 = vpop.f32.mrb[0].mxu0
      %2219 = vmatprep.mubr.bf16.mxu0 0
      %2220 = vmatmul.mubr.bf16.gmra.mrb[0].mxu0 %v1967
      %v2221 = vpop.f32.mrb[0].mxu0
      %v2222 = vadd.f32 0.0, %v2221
      %v2223 = vpop.f32.mrb[0].mxu0
      %v2224 = vpop.f32.mrb[0].mxu0
      %v2225 = vadd.f32 0.0, %v2224
      %v2226 = vpop.f32.mrb[0].mxu0
      %2227 = vmatprep.mubr.bf16.mxu0 0
      %2228 = vmatmul.mubr.bf16.gmra.mrb[0].mxu0 %v1970
      %v2229 = vpop.f32.mrb[0].mxu0
      %v2230 = vadd.f32 0.0, %v2229
      %v2231 = vpop.f32.mrb[0].mxu0
      %v2232 = vpop.f32.mrb[0].mxu0
      %v2233 = vadd.f32 0.0, %v2232
      %v2234 = vpop.f32.mrb[0].mxu0
      %2235 = vmatprep.mubr.bf16.mxu0 0
      %2236 = vmatmul.mubr.bf16.gmra.mrb[0].mxu0 %v1973
      %v2237 = vpop.f32.mrb[0].mxu0
      %v2238 = vadd.f32 0.0, %v2237
      %v2239 = vpop.f32.mrb[0].mxu0
      %v2240 = vpop.f32.mrb[0].mxu0
      %v2241 = vadd.f32 0.0, %v2240
      %v2242 = vpop.f32.mrb[0].mxu0
      %2243 = vmatprep.mubr.bf16.mxu0 0
      %2244 = vmatmul.mubr.bf16.gmra.mrb[0].mxu0 %v1976
      %v2245 = vpop.f32.mrb[0].mxu0
      %v2246 = vadd.f32 0.0, %v2245
      %v2247 = vpop.f32.mrb[0].mxu0
      %v2248 = vpop.f32.mrb[0].mxu0
      %v2249 = vadd.f32 0.0, %v2248
      %v2250 = vpop.f32.mrb[0].mxu0
      %2251 = vmatprep.mubr.bf16.mxu0 0
      %2252 = vmatmul.mubr.bf16.gmra.mrb[0].mxu0 %v1979
      %v2253 = vpop.f32.mrb[0].mxu0
      %v2254 = vadd.f32 0.0, %v2253
      %v2255 = vpop.f32.mrb[0].mxu0
      %v2256 = vpop.f32.mrb[0].mxu0
      %v2257 = vadd.f32 0.0, %v2256
      %v2258 = vpop.f32.mrb[0].mxu0
      %2259 = vmatprep.mubr.bf16.mxu0 0
      %2260 = vmatmul.mubr.bf16.gmra.mrb[0].mxu0 %v1982
      %v2261 = vpop.f32.mrb[0].mxu0
      %v2262 = vadd.f32 0.0, %v2261
      %v2263 = vpop.f32.mrb[0].mxu0
      %v2264 = vpop.f32.mrb[0].mxu0
      %v2265 = vadd.f32 0.0, %v2264
      %v2266 = vpop.f32.mrb[0].mxu0
      %2267 = vmatprep.mubr.bf16.mxu0 0
      %2268 = vmatmul.mubr.bf16.gmra.mrb[0].mxu0 %v1985
      %v2269 = vpop.f32.mrb[0].mxu0
      %v2270 = vadd.f32 0.0, %v2269
      %v2271 = vpop.f32.mrb[0].mxu0
      %v2272 = vpop.f32.mrb[0].mxu0
      %v2273 = vadd.f32 0.0, %v2272
      %v2274 = vpop.f32.mrb[0].mxu0
      %2275 = vdwg.mxu0
      %v2276 = vld [vmem:[#allocation3] sm:$0xff]
      %v2277 = vld [vmem:[#allocation3 + $0x8] sm:$0xff]
      %v2278 = vld [vmem:[#allocation3 + $0x10] sm:$0xff]
      %v2279 = vld [vmem:[#allocation3 + $0x18] sm:$0xff]
      %v2281 = vsel %vm1890, %v1310, 0
      %v2284 = vsel %vm1890, %v1311, 0
      %v2287 = vsel %vm1890, %v1312, 0
      %v2290 = vsel %vm1890, %v1313, 0
      %v2293 = vsel %vm1890, %v1314, 0
      %v2296 = vsel %vm1890, %v1315, 0
      %v2299 = vsel %vm1890, %v1316, 0
      %v2302 = vsel %vm1890, %v1317, 0
      %v2305 = vsel %vm1890, %v1318, 0
      %v2308 = vsel %vm1890, %v1319, 0
      %v2311 = vsel %vm1890, %v1320, 0
      %v2314 = vsel %vm1890, %v1321, 0
      %v2317 = vsel %vm1890, %v1322, 0
      %v2320 = vsel %vm1890, %v1323, 0
      %v2323 = vsel %vm1890, %v1324, 0
      %v2326 = vsel %vm1890, %v1325, 0
      %v2329 = vsel %vm1890, %v1326, 0
      %v2332 = vsel %vm1890, %v1327, 0
      %v2335 = vsel %vm1890, %v1328, 0
      %v2338 = vsel %vm1890, %v1329, 0
      %v2341 = vsel %vm1890, %v1330, 0
      %v2344 = vsel %vm1890, %v1331, 0
      %v2347 = vsel %vm1890, %v1332, 0
      %v2350 = vsel %vm1890, %v1333, 0
      %v2353 = vsel %vm1890, %v1334, 0
      %v2356 = vsel %vm1890, %v1335, 0
      %v2359 = vsel %vm1890, %v1336, 0
      %v2362 = vsel %vm1890, %v1337, 0
      %v2365 = vsel %vm1890, %v1338, 0
      %v2368 = vsel %vm1890, %v1339, 0
      %v2371 = vsel %vm1890, %v1340, 0
      %v2374 = vsel %vm1890, %v1341, 0
      %2376 = vmatprep.subr.bf16.mxu0 0
      %2377 = vmatpush1.bf16.msra.mxu0 %v2276
      %2378 = vmatprep.subr.bf16.mxu0 0
      %2379 = vmatpush1.bf16.msra.mxu0 %v2277
      %2380 = vmatprep.subr.bf16.mxu0 0
      %2381 = vmatpush1.bf16.msra.mxu0 %v2278
      %2382 = vmatprep.subr.bf16.mxu0 0
      %2383 = vmatpush1.bf16.msra.mxu0 %v2279
      %2384 = vmatprep.subr.bf16.mxu0 0
      %2385 = vmatpush1.bf16.msra.mxu0 0
      %2386 = vmatprep.subr.bf16.mxu0 0
      %2387 = vmatpush1.bf16.msra.mxu0 0
      %2388 = vmatprep.subr.bf16.mxu0 0
      %2389 = vmatpush1.bf16.msra.mxu0 0
      %2390 = vmatprep.subr.bf16.mxu0 0
      %2391 = vmatpush1.bf16.msra.mxu0 0
      %2392 = vmatprep.subr.bf16.mxu0 0
      %2393 = vmatpush1.bf16.msra.mxu0 0
      %2394 = vmatprep.subr.bf16.mxu0 0
      %2395 = vmatpush1.bf16.msra.mxu0 0
      %2396 = vmatprep.subr.bf16.mxu0 0
      %2397 = vmatpush1.bf16.msra.mxu0 0
      %2398 = vmatprep.subr.bf16.mxu0 0
      %2399 = vmatpush1.bf16.msra.mxu0 0
      %2400 = vmatprep.subr.bf16.mxu0 0
      %2401 = vmatpush1.bf16.msra.mxu0 0
      %2402 = vmatprep.subr.bf16.mxu0 0
      %2403 = vmatpush1.bf16.msra.mxu0 0
      %2404 = vmatprep.subr.bf16.mxu0 0
      %2405 = vmatpush1.bf16.msra.mxu0 0
      %2406 = vmatprep.subr.bf16.mxu0 0
      %2407 = vmatpush1.bf16.msra.mxu0 0
      %2408 = vmatprep.mubr.bf16.mxu0 0
      %2409 = vmatmul.mubr.bf16.gmra.mrb[0].mxu0 %v2281
      %v2410 = vpop.f32.mrb[0].mxu0
      %v2411 = vadd.f32 0.0, %v2410
      %v2412 = vpop.f32.mrb[0].mxu0
      %v2413 = vpop.f32.mrb[0].mxu0
      %v2414 = vadd.f32 0.0, %v2413
      %v2415 = vpop.f32.mrb[0].mxu0
      %2416 = vmatprep.mubr.bf16.mxu0 0
      %2417 = vmatmul.mubr.bf16.gmra.mrb[0].mxu0 %v2284
      %v2418 = vpop.f32.mrb[0].mxu0
      %v2419 = vadd.f32 0.0, %v2418
      %v2420 = vpop.f32.mrb[0].mxu0
      %v2421 = vpop.f32.mrb[0].mxu0
      %v2422 = vadd.f32 0.0, %v2421
      %v2423 = vpop.f32.mrb[0].mxu0
      %2424 = vmatprep.mubr.bf16.mxu0 0
      %2425 = vmatmul.mubr.bf16.gmra.mrb[0].mxu0 %v2287
      %v2426 = vpop.f32.mrb[0].mxu0
      %v2427 = vadd.f32 0.0, %v2426
      %v2428 = vpop.f32.mrb[0].mxu0
      %v2429 = vpop.f32.mrb[0].mxu0
      %v2430 = vadd.f32 0.0, %v2429
      %v2431 = vpop.f32.mrb[0].mxu0
      %2432 = vmatprep.mubr.bf16.mxu0 0
      %2433 = vmatmul.mubr.bf16.gmra.mrb[0].mxu0 %v2290
      %v2434 = vpop.f32.mrb[0].mxu0
      %v2435 = vadd.f32 0.0, %v2434
      %v2436 = vpop.f32.mrb[0].mxu0
      %v2437 = vpop.f32.mrb[0].mxu0
      %v2438 = vadd.f32 0.0, %v2437
      %v2439 = vpop.f32.mrb[0].mxu0
      %2440 = vmatprep.mubr.bf16.mxu0 0
      %2441 = vmatmul.mubr.bf16.gmra.mrb[0].mxu0 %v2293
      %v2442 = vpop.f32.mrb[0].mxu0
      %v2443 = vadd.f32 0.0, %v2442
      %v2444 = vpop.f32.mrb[0].mxu0
      %v2445 = vpop.f32.mrb[0].mxu0
      %v2446 = vadd.f32 0.0, %v2445
      %v2447 = vpop.f32.mrb[0].mxu0
      %2448 = vmatprep.mubr.bf16.mxu0 0
      %2449 = vmatmul.mubr.bf16.gmra.mrb[0].mxu0 %v2296
      %v2450 = vpop.f32.mrb[0].mxu0
      %v2451 = vadd.f32 0.0, %v2450
      %v2452 = vpop.f32.mrb[0].mxu0
      %v2453 = vpop.f32.mrb[0].mxu0
      %v2454 = vadd.f32 0.0, %v2453
      %v2455 = vpop.f32.mrb[0].mxu0
      %2456 = vmatprep.mubr.bf16.mxu0 0
      %2457 = vmatmul.mubr.bf16.gmra.mrb[0].mxu0 %v2299
      %v2458 = vpop.f32.mrb[0].mxu0
      %v2459 = vadd.f32 0.0, %v2458
      %v2460 = vpop.f32.mrb[0].mxu0
      %v2461 = vpop.f32.mrb[0].mxu0
      %v2462 = vadd.f32 0.0, %v2461
      %v2463 = vpop.f32.mrb[0].mxu0
      %2464 = vmatprep.mubr.bf16.mxu0 0
      %2465 = vmatmul.mubr.bf16.gmra.mrb[0].mxu0 %v2302
      %v2466 = vpop.f32.mrb[0].mxu0
      %v2467 = vadd.f32 0.0, %v2466
      %v2468 = vpop.f32.mrb[0].mxu0
      %v2469 = vpop.f32.mrb[0].mxu0
      %v2470 = vadd.f32 0.0, %v2469
      %v2471 = vpop.f32.mrb[0].mxu0
      %2472 = vmatprep.mubr.bf16.mxu0 0
      %2473 = vmatmul.mubr.bf16.gmra.mrb[0].mxu0 %v2305
      %v2474 = vpop.f32.mrb[0].mxu0
      %v2475 = vadd.f32 0.0, %v2474
      %v2476 = vpop.f32.mrb[0].mxu0
      %v2477 = vpop.f32.mrb[0].mxu0
      %v2478 = vadd.f32 0.0, %v2477
      %v2479 = vpop.f32.mrb[0].mxu0
      %2480 = vmatprep.mubr.bf16.mxu0 0
      %2481 = vmatmul.mubr.bf16.gmra.mrb[0].mxu0 %v2308
      %v2482 = vpop.f32.mrb[0].mxu0
      %v2483 = vadd.f32 0.0, %v2482
      %v2484 = vpop.f32.mrb[0].mxu0
      %v2485 = vpop.f32.mrb[0].mxu0
      %v2486 = vadd.f32 0.0, %v2485
      %v2487 = vpop.f32.mrb[0].mxu0
      %2488 = vmatprep.mubr.bf16.mxu0 0
      %2489 = vmatmul.mubr.bf16.gmra.mrb[0].mxu0 %v2311
      %v2490 = vpop.f32.mrb[0].mxu0
      %v2491 = vadd.f32 0.0, %v2490
      %v2492 = vpop.f32.mrb[0].mxu0
      %v2493 = vpop.f32.mrb[0].mxu0
      %v2494 = vadd.f32 0.0, %v2493
      %v2495 = vpop.f32.mrb[0].mxu0
      %2496 = vmatprep.mubr.bf16.mxu0 0
      %2497 = vmatmul.mubr.bf16.gmra.mrb[0].mxu0 %v2314
      %v2498 = vpop.f32.mrb[0].mxu0
      %v2499 = vadd.f32 0.0, %v2498
      %v2500 = vpop.f32.mrb[0].mxu0
      %v2501 = vpop.f32.mrb[0].mxu0
      %v2502 = vadd.f32 0.0, %v2501
      %v2503 = vpop.f32.mrb[0].mxu0
      %2504 = vmatprep.mubr.bf16.mxu0 0
      %2505 = vmatmul.mubr.bf16.gmra.mrb[0].mxu0 %v2317
      %v2506 = vpop.f32.mrb[0].mxu0
      %v2507 = vadd.f32 0.0, %v2506
      %v2508 = vpop.f32.mrb[0].mxu0
      %v2509 = vpop.f32.mrb[0].mxu0
      %v2510 = vadd.f32 0.0, %v2509
      %v2511 = vpop.f32.mrb[0].mxu0
      %2512 = vmatprep.mubr.bf16.mxu0 0
      %2513 = vmatmul.mubr.bf16.gmra.mrb[0].mxu0 %v2320
      %v2514 = vpop.f32.mrb[0].mxu0
      %v2515 = vadd.f32 0.0, %v2514
      %v2516 = vpop.f32.mrb[0].mxu0
      %v2517 = vpop.f32.mrb[0].mxu0
      %v2518 = vadd.f32 0.0, %v2517
      %v2519 = vpop.f32.mrb[0].mxu0
      %2520 = vmatprep.mubr.bf16.mxu0 0
      %2521 = vmatmul.mubr.bf16.gmra.mrb[0].mxu0 %v2323
      %v2522 = vpop.f32.mrb[0].mxu0
      %v2523 = vadd.f32 0.0, %v2522
      %v2524 = vpop.f32.mrb[0].mxu0
      %v2525 = vpop.f32.mrb[0].mxu0
      %v2526 = vadd.f32 0.0, %v2525
      %v2527 = vpop.f32.mrb[0].mxu0
      %2528 = vmatprep.mubr.bf16.mxu0 0
      %2529 = vmatmul.mubr.bf16.gmra.mrb[0].mxu0 %v2326
      %v2530 = vpop.f32.mrb[0].mxu0
      %v2531 = vadd.f32 0.0, %v2530
      %v2532 = vpop.f32.mrb[0].mxu0
      %v2533 = vpop.f32.mrb[0].mxu0
      %v2534 = vadd.f32 0.0, %v2533
      %v2535 = vpop.f32.mrb[0].mxu0
      %2536 = vmatprep.mubr.bf16.mxu0 0
      %2537 = vmatmul.mubr.bf16.gmra.mrb[0].mxu0 %v2329
      %v2538 = vpop.f32.mrb[0].mxu0
      %v2539 = vadd.f32 0.0, %v2538
      %v2540 = vpop.f32.mrb[0].mxu0
      %v2541 = vpop.f32.mrb[0].mxu0
      %v2542 = vadd.f32 0.0, %v2541
      %v2543 = vpop.f32.mrb[0].mxu0
      %2544 = vmatprep.mubr.bf16.mxu0 0
      %2545 = vmatmul.mubr.bf16.gmra.mrb[0].mxu0 %v2332
      %v2546 = vpop.f32.mrb[0].mxu0
      %v2547 = vadd.f32 0.0, %v2546
      %v2548 = vpop.f32.mrb[0].mxu0
      %v2549 = vpop.f32.mrb[0].mxu0
      %v2550 = vadd.f32 0.0, %v2549
      %v2551 = vpop.f32.mrb[0].mxu0
      %2552 = vmatprep.mubr.bf16.mxu0 0
      %2553 = vmatmul.mubr.bf16.gmra.mrb[0].mxu0 %v2335
      %v2554 = vpop.f32.mrb[0].mxu0
      %v2555 = vadd.f32 0.0, %v2554
      %v2556 = vpop.f32.mrb[0].mxu0
      %v2557 = vpop.f32.mrb[0].mxu0
      %v2558 = vadd.f32 0.0, %v2557
      %v2559 = vpop.f32.mrb[0].mxu0
      %2560 = vmatprep.mubr.bf16.mxu0 0
      %2561 = vmatmul.mubr.bf16.gmra.mrb[0].mxu0 %v2338
      %v2562 = vpop.f32.mrb[0].mxu0
      %v2563 = vadd.f32 0.0, %v2562
      %v2564 = vpop.f32.mrb[0].mxu0
      %v2565 = vpop.f32.mrb[0].mxu0
      %v2566 = vadd.f32 0.0, %v2565
      %v2567 = vpop.f32.mrb[0].mxu0
      %2568 = vmatprep.mubr.bf16.mxu0 0
      %2569 = vmatmul.mubr.bf16.gmra.mrb[0].mxu0 %v2341
      %v2570 = vpop.f32.mrb[0].mxu0
      %v2571 = vadd.f32 0.0, %v2570
      %v2572 = vpop.f32.mrb[0].mxu0
      %v2573 = vpop.f32.mrb[0].mxu0
      %v2574 = vadd.f32 0.0, %v2573
      %v2575 = vpop.f32.mrb[0].mxu0
      %2576 = vmatprep.mubr.bf16.mxu0 0
      %2577 = vmatmul.mubr.bf16.gmra.mrb[0].mxu0 %v2344
      %v2578 = vpop.f32.mrb[0].mxu0
      %v2579 = vadd.f32 0.0, %v2578
      %v2580 = vpop.f32.mrb[0].mxu0
      %v2581 = vpop.f32.mrb[0].mxu0
      %v2582 = vadd.f32 0.0, %v2581
      %v2583 = vpop.f32.mrb[0].mxu0
      %2584 = vmatprep.mubr.bf16.mxu0 0
      %2585 = vmatmul.mubr.bf16.gmra.mrb[0].mxu0 %v2347
      %v2586 = vpop.f32.mrb[0].mxu0
      %v2587 = vadd.f32 0.0, %v2586
      %v2588 = vpop.f32.mrb[0].mxu0
      %v2589 = vpop.f32.mrb[0].mxu0
      %v2590 = vadd.f32 0.0, %v2589
      %v2591 = vpop.f32.mrb[0].mxu0
      %2592 = vmatprep.mubr.bf16.mxu0 0
      %2593 = vmatmul.mubr.bf16.gmra.mrb[0].mxu0 %v2350
      %v2594 = vpop.f32.mrb[0].mxu0
      %v2595 = vadd.f32 0.0, %v2594
      %v2596 = vpop.f32.mrb[0].mxu0
      %v2597 = vpop.f32.mrb[0].mxu0
      %v2598 = vadd.f32 0.0, %v2597
      %v2599 = vpop.f32.mrb[0].mxu0
      %2600 = vmatprep.mubr.bf16.mxu0 0
      %2601 = vmatmul.mubr.bf16.gmra.mrb[0].mxu0 %v2353
      %v2602 = vpop.f32.mrb[0].mxu0
      %v2603 = vadd.f32 0.0, %v2602
      %v2604 = vpop.f32.mrb[0].mxu0
      %v2605 = vpop.f32.mrb[0].mxu0
      %v2606 = vadd.f32 0.0, %v2605
      %v2607 = vpop.f32.mrb[0].mxu0
      %2608 = vmatprep.mubr.bf16.mxu0 0
      %2609 = vmatmul.mubr.bf16.gmra.mrb[0].mxu0 %v2356
      %v2610 = vpop.f32.mrb[0].mxu0
      %v2611 = vadd.f32 0.0, %v2610
      %v2612 = vpop.f32.mrb[0].mxu0
      %v2613 = vpop.f32.mrb[0].mxu0
      %v2614 = vadd.f32 0.0, %v2613
      %v2615 = vpop.f32.mrb[0].mxu0
      %2616 = vmatprep.mubr.bf16.mxu0 0
      %2617 = vmatmul.mubr.bf16.gmra.mrb[0].mxu0 %v2359
      %v2618 = vpop.f32.mrb[0].mxu0
      %v2619 = vadd.f32 0.0, %v2618
      %v2620 = vpop.f32.mrb[0].mxu0
      %v2621 = vpop.f32.mrb[0].mxu0
      %v2622 = vadd.f32 0.0, %v2621
      %v2623 = vpop.f32.mrb[0].mxu0
      %2624 = vmatprep.mubr.bf16.mxu0 0
      %2625 = vmatmul.mubr.bf16.gmra.mrb[0].mxu0 %v2362
      %v2626 = vpop.f32.mrb[0].mxu0
      %v2627 = vadd.f32 0.0, %v2626
      %v2628 = vpop.f32.mrb[0].mxu0
      %v2629 = vpop.f32.mrb[0].mxu0
      %v2630 = vadd.f32 0.0, %v2629
      %v2631 = vpop.f32.mrb[0].mxu0
      %2632 = vmatprep.mubr.bf16.mxu0 0
      %2633 = vmatmul.mubr.bf16.gmra.mrb[0].mxu0 %v2365
      %v2634 = vpop.f32.mrb[0].mxu0
      %v2635 = vadd.f32 0.0, %v2634
      %v2636 = vpop.f32.mrb[0].mxu0
      %v2637 = vpop.f32.mrb[0].mxu0
      %v2638 = vadd.f32 0.0, %v2637
      %v2639 = vpop.f32.mrb[0].mxu0
      %2640 = vmatprep.mubr.bf16.mxu0 0
      %2641 = vmatmul.mubr.bf16.gmra.mrb[0].mxu0 %v2368
      %v2642 = vpop.f32.mrb[0].mxu0
      %v2643 = vadd.f32 0.0, %v2642
      %v2644 = vpop.f32.mrb[0].mxu0
      %v2645 = vpop.f32.mrb[0].mxu0
      %v2646 = vadd.f32 0.0, %v2645
      %v2647 = vpop.f32.mrb[0].mxu0
      %2648 = vmatprep.mubr.bf16.mxu0 0
      %2649 = vmatmul.mubr.bf16.gmra.mrb[0].mxu0 %v2371
      %v2650 = vpop.f32.mrb[0].mxu0
      %v2651 = vadd.f32 0.0, %v2650
      %v2652 = vpop.f32.mrb[0].mxu0
      %v2653 = vpop.f32.mrb[0].mxu0
      %v2654 = vadd.f32 0.0, %v2653
      %v2655 = vpop.f32.mrb[0].mxu0
      %2656 = vmatprep.mubr.bf16.mxu0 0
      %2657 = vmatmul.mubr.bf16.gmra.mrb[0].mxu0 %v2374
      %v2658 = vpop.f32.mrb[0].mxu0
      %v2659 = vadd.f32 0.0, %v2658
      %v2660 = vpop.f32.mrb[0].mxu0
      %v2661 = vpop.f32.mrb[0].mxu0
      %v2662 = vadd.f32 0.0, %v2661
      %v2663 = vpop.f32.mrb[0].mxu0
      %2664 = vdwg.mxu0
      %v2665 = vmul.f32 %v2022, %v2411
      %v2666 = vmul.f32 %v2025, %v2414
      %v2667 = vmul.f32 %v2030, %v2419
      %v2668 = vmul.f32 %v2033, %v2422
      %v2669 = vmul.f32 %v2038, %v2427
      %v2670 = vmul.f32 %v2041, %v2430
      %v2671 = vmul.f32 %v2046, %v2435
      %v2672 = vmul.f32 %v2049, %v2438
      %v2673 = vmul.f32 %v2054, %v2443
      %v2674 = vmul.f32 %v2057, %v2446
      %v2675 = vmul.f32 %v2062, %v2451
      %v2676 = vmul.f32 %v2065, %v2454
      %v2677 = vmul.f32 %v2070, %v2459
      %v2678 = vmul.f32 %v2073, %v2462
      %v2679 = vmul.f32 %v2078, %v2467
      %v2680 = vmul.f32 %v2081, %v2470
      %v2681 = vmul.f32 %v2086, %v2475
      %v2682 = vmul.f32 %v2089, %v2478
      %v2683 = vmul.f32 %v2094, %v2483
      %v2684 = vmul.f32 %v2097, %v2486
      %v2685 = vmul.f32 %v2102, %v2491
      %v2686 = vmul.f32 %v2105, %v2494
      %v2687 = vmul.f32 %v2110, %v2499
      %v2688 = vmul.f32 %v2113, %v2502
      %v2689 = vmul.f32 %v2118, %v2507
      %v2690 = vmul.f32 %v2121, %v2510
      %v2691 = vmul.f32 %v2126, %v2515
      %v2692 = vmul.f32 %v2129, %v2518
      %v2693 = vmul.f32 %v2134, %v2523
      %v2694 = vmul.f32 %v2137, %v2526
      %v2695 = vmul.f32 %v2142, %v2531
      %v2696 = vmul.f32 %v2145, %v2534
      %v2697 = vmul.f32 %v2150, %v2539
      %v2698 = vmul.f32 %v2153, %v2542
      %v2699 = vmul.f32 %v2158, %v2547
      %v2700 = vmul.f32 %v2161, %v2550
      %v2701 = vmul.f32 %v2166, %v2555
      %v2702 = vmul.f32 %v2169, %v2558
      %v2703 = vmul.f32 %v2174, %v2563
      %v2704 = vmul.f32 %v2177, %v2566
      %v2705 = vmul.f32 %v2182, %v2571
      %v2706 = vmul.f32 %v2185, %v2574
      %v2707 = vmul.f32 %v2190, %v2579
      %v2708 = vmul.f32 %v2193, %v2582
      %v2709 = vmul.f32 %v2198, %v2587
      %v2710 = vmul.f32 %v2201, %v2590
      %v2711 = vmul.f32 %v2206, %v2595
      %v2712 = vmul.f32 %v2209, %v2598
      %v2713 = vmul.f32 %v2214, %v2603
      %v2714 = vmul.f32 %v2217, %v2606
      %v2715 = vmul.f32 %v2222, %v2611
      %v2716 = vmul.f32 %v2225, %v2614
      %v2717 = vmul.f32 %v2230, %v2619
      %v2718 = vmul.f32 %v2233, %v2622
      %v2719 = vmul.f32 %v2238, %v2627
      %v2720 = vmul.f32 %v2241, %v2630
      %v2721 = vmul.f32 %v2246, %v2635
      %v2722 = vmul.f32 %v2249, %v2638
      %v2723 = vmul.f32 %v2254, %v2643
      %v2724 = vmul.f32 %v2257, %v2646
      %v2725 = vmul.f32 %v2262, %v2651
      %v2726 = vmul.f32 %v2265, %v2654
      %v2727 = vmul.f32 %v2270, %v2659
      %v2728 = vmul.f32 %v2273, %v2662
      %v2729 = vpack.c.bf16 %v2666, %v2665
      %v2730 = vpack.c.bf16 %v2668, %v2667
      %v2731 = vpack.c.bf16 %v2670, %v2669
      %v2732 = vpack.c.bf16 %v2672, %v2671
      %v2733 = vpack.c.bf16 %v2674, %v2673
      %v2734 = vpack.c.bf16 %v2676, %v2675
      %v2735 = vpack.c.bf16 %v2678, %v2677
      %v2736 = vpack.c.bf16 %v2680, %v2679
      %v2737 = vpack.c.bf16 %v2682, %v2681
      %v2738 = vpack.c.bf16 %v2684, %v2683
      %v2739 = vpack.c.bf16 %v2686, %v2685
      %v2740 = vpack.c.bf16 %v2688, %v2687
      %v2741 = vpack.c.bf16 %v2690, %v2689
      %v2742 = vpack.c.bf16 %v2692, %v2691
      %v2743 = vpack.c.bf16 %v2694, %v2693
      %v2744 = vpack.c.bf16 %v2696, %v2695
      %v2745 = vpack.c.bf16 %v2698, %v2697
      %v2746 = vpack.c.bf16 %v2700, %v2699
      %v2747 = vpack.c.bf16 %v2702, %v2701
      %v2748 = vpack.c.bf16 %v2704, %v2703
      %v2749 = vpack.c.bf16 %v2706, %v2705
      %v2750 = vpack.c.bf16 %v2708, %v2707
      %v2751 = vpack.c.bf16 %v2710, %v2709
      %v2752 = vpack.c.bf16 %v2712, %v2711
      %v2753 = vpack.c.bf16 %v2714, %v2713
      %v2754 = vpack.c.bf16 %v2716, %v2715
      %v2755 = vpack.c.bf16 %v2718, %v2717
      %v2756 = vpack.c.bf16 %v2720, %v2719
      %v2757 = vpack.c.bf16 %v2722, %v2721
      %v2758 = vpack.c.bf16 %v2724, %v2723
      %v2759 = vpack.c.bf16 %v2726, %v2725
      %v2760 = vpack.c.bf16 %v2728, %v2727
      %v2761 = vld [vmem:[%s5] sm:$0xf]
      %v2762 = vld [vmem:[%s5 + $0x4] sm:$0xf]
      %v2763 = vld [vmem:[%s5 + $0x8] sm:$0xf]
      %v2764 = vld [vmem:[%s5 + $0xc] sm:$0xf]
      %v2769 = vunpack.c.l.b16 %v2761
      %v2770 = vunpack.c.l.b16 %v2762
      %v2771 = vunpack.c.l.b16 %v2763
      %v2772 = vunpack.c.l.b16 %v2764
      %v2773 = vpack.c.b16 %v2770, %v2769
      %v2774 = vpack.c.b16 %v2772, %v2771
      %vm2777 = vcmask 261120
      %v2779 = vsel %vm2777, %v2729, 0
      %v2782 = vsel %vm2777, %v2730, 0
      %v2785 = vsel %vm2777, %v2731, 0
      %v2788 = vsel %vm2777, %v2732, 0
      %v2791 = vsel %vm2777, %v2733, 0
      %v2794 = vsel %vm2777, %v2734, 0
      %v2797 = vsel %vm2777, %v2735, 0
      %v2800 = vsel %vm2777, %v2736, 0
      %v2803 = vsel %vm2777, %v2737, 0
      %v2806 = vsel %vm2777, %v2738, 0
      %v2809 = vsel %vm2777, %v2739, 0
      %v2812 = vsel %vm2777, %v2740, 0
      %v2815 = vsel %vm2777, %v2741, 0
      %v2818 = vsel %vm2777, %v2742, 0
      %v2821 = vsel %vm2777, %v2743, 0
      %v2824 = vsel %vm2777, %v2744, 0
      %v2827 = vsel %vm2777, %v2745, 0
      %v2830 = vsel %vm2777, %v2746, 0
      %v2833 = vsel %vm2777, %v2747, 0
      %v2836 = vsel %vm2777, %v2748, 0
      %v2839 = vsel %vm2777, %v2749, 0
      %v2842 = vsel %vm2777, %v2750, 0
      %v2845 = vsel %vm2777, %v2751, 0
      %v2848 = vsel %vm2777, %v2752, 0
      %v2851 = vsel %vm2777, %v2753, 0
      %v2854 = vsel %vm2777, %v2754, 0
      %v2857 = vsel %vm2777, %v2755, 0
      %v2860 = vsel %vm2777, %v2756, 0
      %v2863 = vsel %vm2777, %v2757, 0
      %v2866 = vsel %vm2777, %v2758, 0
      %v2869 = vsel %vm2777, %v2759, 0
      %v2872 = vsel %vm2777, %v2760, 0
      %2874 = vmatprep.subr.bf16.mxu0 0
      %2875 = vmatpush1.bf16.msra.mxu0 %v2773
      %2876 = vmatprep.subr.bf16.mxu0 0
      %2877 = vmatpush1.bf16.msra.mxu0 %v2774
      %2878 = vmatprep.subr.bf16.mxu0 0
      %2879 = vmatpush1.bf16.msra.mxu0 0
      %2880 = vmatprep.subr.bf16.mxu0 0
      %2881 = vmatpush1.bf16.msra.mxu0 0
      %2882 = vmatprep.subr.bf16.mxu0 0
      %2883 = vmatpush1.bf16.msra.mxu0 0
      %2884 = vmatprep.subr.bf16.mxu0 0
      %2885 = vmatpush1.bf16.msra.mxu0 0
      %2886 = vmatprep.subr.bf16.mxu0 0
      %2887 = vmatpush1.bf16.msra.mxu0 0
      %2888 = vmatprep.subr.bf16.mxu0 0
      %2889 = vmatpush1.bf16.msra.mxu0 0
      %2890 = vmatprep.subr.bf16.mxu0 0
      %2891 = vmatpush1.bf16.msra.mxu0 0
      %2892 = vmatprep.subr.bf16.mxu0 0
      %2893 = vmatpush1.bf16.msra.mxu0 0
      %2894 = vmatprep.subr.bf16.mxu0 0
      %2895 = vmatpush1.bf16.msra.mxu0 0
      %2896 = vmatprep.subr.bf16.mxu0 0
      %2897 = vmatpush1.bf16.msra.mxu0 0
      %2898 = vmatprep.subr.bf16.mxu0 0
      %2899 = vmatpush1.bf16.msra.mxu0 0
      %2900 = vmatprep.subr.bf16.mxu0 0
      %2901 = vmatpush1.bf16.msra.mxu0 0
      %2902 = vmatprep.subr.bf16.mxu0 0
      %2903 = vmatpush1.bf16.msra.mxu0 0
      %2904 = vmatprep.subr.bf16.mxu0 0
      %2905 = vmatpush1.bf16.msra.mxu0 0
      %2906 = vmatprep.mubr.bf16.mxu0 0
      %2907 = vmatmul.mubr.bf16.gmra.mrb[0].mxu0 %v2779
      %v2908 = vpop.f32.mrb[0].mxu0
      %v2909 = vadd.f32 0.0, %v2908
      %v2910 = vpop.f32.mrb[0].mxu0
      %v2911 = vpop.f32.mrb[0].mxu0
      %v2912 = vadd.f32 0.0, %v2911
      %v2913 = vpop.f32.mrb[0].mxu0
      %2914 = vmatprep.mubr.bf16.mxu0 0
      %2915 = vmatmul.mubr.bf16.gmra.mrb[0].mxu0 %v2782
      %v2916 = vpop.f32.mrb[0].mxu0
      %v2917 = vadd.f32 0.0, %v2916
      %v2918 = vpop.f32.mrb[0].mxu0
      %v2919 = vpop.f32.mrb[0].mxu0
      %v2920 = vadd.f32 0.0, %v2919
      %v2921 = vpop.f32.mrb[0].mxu0
      %2922 = vmatprep.mubr.bf16.mxu0 0
      %2923 = vmatmul.mubr.bf16.gmra.mrb[0].mxu0 %v2785
      %v2924 = vpop.f32.mrb[0].mxu0
      %v2925 = vadd.f32 0.0, %v2924
      %v2926 = vpop.f32.mrb[0].mxu0
      %v2927 = vpop.f32.mrb[0].mxu0
      %v2928 = vadd.f32 0.0, %v2927
      %v2929 = vpop.f32.mrb[0].mxu0
      %2930 = vmatprep.mubr.bf16.mxu0 0
      %2931 = vmatmul.mubr.bf16.gmra.mrb[0].mxu0 %v2788
      %v2932 = vpop.f32.mrb[0].mxu0
      %v2933 = vadd.f32 0.0, %v2932
      %v2934 = vpop.f32.mrb[0].mxu0
      %v2935 = vpop.f32.mrb[0].mxu0
      %v2936 = vadd.f32 0.0, %v2935
      %v2937 = vpop.f32.mrb[0].mxu0
      %2938 = vmatprep.mubr.bf16.mxu0 0
      %2939 = vmatmul.mubr.bf16.gmra.mrb[0].mxu0 %v2791
      %v2940 = vpop.f32.mrb[0].mxu0
      %v2941 = vadd.f32 0.0, %v2940
      %v2942 = vpop.f32.mrb[0].mxu0
      %v2943 = vpop.f32.mrb[0].mxu0
      %v2944 = vadd.f32 0.0, %v2943
      %v2945 = vpop.f32.mrb[0].mxu0
      %2946 = vmatprep.mubr.bf16.mxu0 0
      %2947 = vmatmul.mubr.bf16.gmra.mrb[0].mxu0 %v2794
      %v2948 = vpop.f32.mrb[0].mxu0
      %v2949 = vadd.f32 0.0, %v2948
      %v2950 = vpop.f32.mrb[0].mxu0
      %v2951 = vpop.f32.mrb[0].mxu0
      %v2952 = vadd.f32 0.0, %v2951
      %v2953 = vpop.f32.mrb[0].mxu0
      %2954 = vmatprep.mubr.bf16.mxu0 0
      %2955 = vmatmul.mubr.bf16.gmra.mrb[0].mxu0 %v2797
      %v2956 = vpop.f32.mrb[0].mxu0
      %v2957 = vadd.f32 0.0, %v2956
      %v2958 = vpop.f32.mrb[0].mxu0
      %v2959 = vpop.f32.mrb[0].mxu0
      %v2960 = vadd.f32 0.0, %v2959
      %v2961 = vpop.f32.mrb[0].mxu0
      %2962 = vmatprep.mubr.bf16.mxu0 0
      %2963 = vmatmul.mubr.bf16.gmra.mrb[0].mxu0 %v2800
      %v2964 = vpop.f32.mrb[0].mxu0
      %v2965 = vadd.f32 0.0, %v2964
      %v2966 = vpop.f32.mrb[0].mxu0
      %v2967 = vpop.f32.mrb[0].mxu0
      %v2968 = vadd.f32 0.0, %v2967
      %v2969 = vpop.f32.mrb[0].mxu0
      %2970 = vmatprep.mubr.bf16.mxu0 0
      %2971 = vmatmul.mubr.bf16.gmra.mrb[0].mxu0 %v2803
      %v2972 = vpop.f32.mrb[0].mxu0
      %v2973 = vadd.f32 0.0, %v2972
      %v2974 = vpop.f32.mrb[0].mxu0
      %v2975 = vpop.f32.mrb[0].mxu0
      %v2976 = vadd.f32 0.0, %v2975
      %v2977 = vpop.f32.mrb[0].mxu0
      %2978 = vmatprep.mubr.bf16.mxu0 0
      %2979 = vmatmul.mubr.bf16.gmra.mrb[0].mxu0 %v2806
      %v2980 = vpop.f32.mrb[0].mxu0
      %v2981 = vadd.f32 0.0, %v2980
      %v2982 = vpop.f32.mrb[0].mxu0
      %v2983 = vpop.f32.mrb[0].mxu0
      %v2984 = vadd.f32 0.0, %v2983
      %v2985 = vpop.f32.mrb[0].mxu0
      %2986 = vmatprep.mubr.bf16.mxu0 0
      %2987 = vmatmul.mubr.bf16.gmra.mrb[0].mxu0 %v2809
      %v2988 = vpop.f32.mrb[0].mxu0
      %v2989 = vadd.f32 0.0, %v2988
      %v2990 = vpop.f32.mrb[0].mxu0
      %v2991 = vpop.f32.mrb[0].mxu0
      %v2992 = vadd.f32 0.0, %v2991
      %v2993 = vpop.f32.mrb[0].mxu0
      %2994 = vmatprep.mubr.bf16.mxu0 0
      %2995 = vmatmul.mubr.bf16.gmra.mrb[0].mxu0 %v2812
      %v2996 = vpop.f32.mrb[0].mxu0
      %v2997 = vadd.f32 0.0, %v2996
      %v2998 = vpop.f32.mrb[0].mxu0
      %v2999 = vpop.f32.mrb[0].mxu0
      %v3000 = vadd.f32 0.0, %v2999
      %v3001 = vpop.f32.mrb[0].mxu0
      %3002 = vmatprep.mubr.bf16.mxu0 0
      %3003 = vmatmul.mubr.bf16.gmra.mrb[0].mxu0 %v2815
      %v3004 = vpop.f32.mrb[0].mxu0
      %v3005 = vadd.f32 0.0, %v3004
      %v3006 = vpop.f32.mrb[0].mxu0
      %v3007 = vpop.f32.mrb[0].mxu0
      %v3008 = vadd.f32 0.0, %v3007
      %v3009 = vpop.f32.mrb[0].mxu0
      %3010 = vmatprep.mubr.bf16.mxu0 0
      %3011 = vmatmul.mubr.bf16.gmra.mrb[0].mxu0 %v2818
      %v3012 = vpop.f32.mrb[0].mxu0
      %v3013 = vadd.f32 0.0, %v3012
      %v3014 = vpop.f32.mrb[0].mxu0
      %v3015 = vpop.f32.mrb[0].mxu0
      %v3016 = vadd.f32 0.0, %v3015
      %v3017 = vpop.f32.mrb[0].mxu0
      %3018 = vmatprep.mubr.bf16.mxu0 0
      %3019 = vmatmul.mubr.bf16.gmra.mrb[0].mxu0 %v2821
      %v3020 = vpop.f32.mrb[0].mxu0
      %v3021 = vadd.f32 0.0, %v3020
      %v3022 = vpop.f32.mrb[0].mxu0
      %v3023 = vpop.f32.mrb[0].mxu0
      %v3024 = vadd.f32 0.0, %v3023
      %v3025 = vpop.f32.mrb[0].mxu0
      %3026 = vmatprep.mubr.bf16.mxu0 0
      %3027 = vmatmul.mubr.bf16.gmra.mrb[0].mxu0 %v2824
      %v3028 = vpop.f32.mrb[0].mxu0
      %v3029 = vadd.f32 0.0, %v3028
      %v3030 = vpop.f32.mrb[0].mxu0
      %v3031 = vpop.f32.mrb[0].mxu0
      %v3032 = vadd.f32 0.0, %v3031
      %v3033 = vpop.f32.mrb[0].mxu0
      %3034 = vmatprep.mubr.bf16.mxu0 0
      %3035 = vmatmul.mubr.bf16.gmra.mrb[0].mxu0 %v2827
      %v3036 = vpop.f32.mrb[0].mxu0
      %v3037 = vadd.f32 0.0, %v3036
      %v3038 = vpop.f32.mrb[0].mxu0
      %v3039 = vpop.f32.mrb[0].mxu0
      %v3040 = vadd.f32 0.0, %v3039
      %v3041 = vpop.f32.mrb[0].mxu0
      %3042 = vmatprep.mubr.bf16.mxu0 0
      %3043 = vmatmul.mubr.bf16.gmra.mrb[0].mxu0 %v2830
      %v3044 = vpop.f32.mrb[0].mxu0
      %v3045 = vadd.f32 0.0, %v3044
      %v3046 = vpop.f32.mrb[0].mxu0
      %v3047 = vpop.f32.mrb[0].mxu0
      %v3048 = vadd.f32 0.0, %v3047
      %v3049 = vpop.f32.mrb[0].mxu0
      %3050 = vmatprep.mubr.bf16.mxu0 0
      %3051 = vmatmul.mubr.bf16.gmra.mrb[0].mxu0 %v2833
      %v3052 = vpop.f32.mrb[0].mxu0
      %v3053 = vadd.f32 0.0, %v3052
      %v3054 = vpop.f32.mrb[0].mxu0
      %v3055 = vpop.f32.mrb[0].mxu0
      %v3056 = vadd.f32 0.0, %v3055
      %v3057 = vpop.f32.mrb[0].mxu0
      %3058 = vmatprep.mubr.bf16.mxu0 0
      %3059 = vmatmul.mubr.bf16.gmra.mrb[0].mxu0 %v2836
      %v3060 = vpop.f32.mrb[0].mxu0
      %v3061 = vadd.f32 0.0, %v3060
      %v3062 = vpop.f32.mrb[0].mxu0
      %v3063 = vpop.f32.mrb[0].mxu0
      %v3064 = vadd.f32 0.0, %v3063
      %v3065 = vpop.f32.mrb[0].mxu0
      %3066 = vmatprep.mubr.bf16.mxu0 0
      %3067 = vmatmul.mubr.bf16.gmra.mrb[0].mxu0 %v2839
      %v3068 = vpop.f32.mrb[0].mxu0
      %v3069 = vadd.f32 0.0, %v3068
      %v3070 = vpop.f32.mrb[0].mxu0
      %v3071 = vpop.f32.mrb[0].mxu0
      %v3072 = vadd.f32 0.0, %v3071
      %v3073 = vpop.f32.mrb[0].mxu0
      %3074 = vmatprep.mubr.bf16.mxu0 0
      %3075 = vmatmul.mubr.bf16.gmra.mrb[0].mxu0 %v2842
      %v3076 = vpop.f32.mrb[0].mxu0
      %v3077 = vadd.f32 0.0, %v3076
      %v3078 = vpop.f32.mrb[0].mxu0
      %v3079 = vpop.f32.mrb[0].mxu0
      %v3080 = vadd.f32 0.0, %v3079
      %v3081 = vpop.f32.mrb[0].mxu0
      %3082 = vmatprep.mubr.bf16.mxu0 0
      %3083 = vmatmul.mubr.bf16.gmra.mrb[0].mxu0 %v2845
      %v3084 = vpop.f32.mrb[0].mxu0
      %v3085 = vadd.f32 0.0, %v3084
      %v3086 = vpop.f32.mrb[0].mxu0
      %v3087 = vpop.f32.mrb[0].mxu0
      %v3088 = vadd.f32 0.0, %v3087
      %v3089 = vpop.f32.mrb[0].mxu0
      %3090 = vmatprep.mubr.bf16.mxu0 0
      %3091 = vmatmul.mubr.bf16.gmra.mrb[0].mxu0 %v2848
      %v3092 = vpop.f32.mrb[0].mxu0
      %v3093 = vadd.f32 0.0, %v3092
      %v3094 = vpop.f32.mrb[0].mxu0
      %v3095 = vpop.f32.mrb[0].mxu0
      %v3096 = vadd.f32 0.0, %v3095
      %v3097 = vpop.f32.mrb[0].mxu0
      %3098 = vmatprep.mubr.bf16.mxu0 0
      %3099 = vmatmul.mubr.bf16.gmra.mrb[0].mxu0 %v2851
      %v3100 = vpop.f32.mrb[0].mxu0
      %v3101 = vadd.f32 0.0, %v3100
      %v3102 = vpop.f32.mrb[0].mxu0
      %v3103 = vpop.f32.mrb[0].mxu0
      %v3104 = vadd.f32 0.0, %v3103
      %v3105 = vpop.f32.mrb[0].mxu0
      %3106 = vmatprep.mubr.bf16.mxu0 0
      %3107 = vmatmul.mubr.bf16.gmra.mrb[0].mxu0 %v2854
      %v3108 = vpop.f32.mrb[0].mxu0
      %v3109 = vadd.f32 0.0, %v3108
      %v3110 = vpop.f32.mrb[0].mxu0
      %v3111 = vpop.f32.mrb[0].mxu0
      %v3112 = vadd.f32 0.0, %v3111
      %v3113 = vpop.f32.mrb[0].mxu0
      %3114 = vmatprep.mubr.bf16.mxu0 0
      %3115 = vmatmul.mubr.bf16.gmra.mrb[0].mxu0 %v2857
      %v3116 = vpop.f32.mrb[0].mxu0
      %v3117 = vadd.f32 0.0, %v3116
      %v3118 = vpop.f32.mrb[0].mxu0
      %v3119 = vpop.f32.mrb[0].mxu0
      %v3120 = vadd.f32 0.0, %v3119
      %v3121 = vpop.f32.mrb[0].mxu0
      %3122 = vmatprep.mubr.bf16.mxu0 0
      %3123 = vmatmul.mubr.bf16.gmra.mrb[0].mxu0 %v2860
      %v3124 = vpop.f32.mrb[0].mxu0
      %v3125 = vadd.f32 0.0, %v3124
      %v3126 = vpop.f32.mrb[0].mxu0
      %v3127 = vpop.f32.mrb[0].mxu0
      %v3128 = vadd.f32 0.0, %v3127
      %v3129 = vpop.f32.mrb[0].mxu0
      %3130 = vmatprep.mubr.bf16.mxu0 0
      %3131 = vmatmul.mubr.bf16.gmra.mrb[0].mxu0 %v2863
      %v3132 = vpop.f32.mrb[0].mxu0
      %v3133 = vadd.f32 0.0, %v3132
      %v3134 = vpop.f32.mrb[0].mxu0
      %v3135 = vpop.f32.mrb[0].mxu0
      %v3136 = vadd.f32 0.0, %v3135
      %v3137 = vpop.f32.mrb[0].mxu0
      %3138 = vmatprep.mubr.bf16.mxu0 0
      %3139 = vmatmul.mubr.bf16.gmra.mrb[0].mxu0 %v2866
      %v3140 = vpop.f32.mrb[0].mxu0
      %v3141 = vadd.f32 0.0, %v3140
      %v3142 = vpop.f32.mrb[0].mxu0
      %v3143 = vpop.f32.mrb[0].mxu0
      %v3144 = vadd.f32 0.0, %v3143
      %v3145 = vpop.f32.mrb[0].mxu0
      %3146 = vmatprep.mubr.bf16.mxu0 0
      %3147 = vmatmul.mubr.bf16.gmra.mrb[0].mxu0 %v2869
      %v3148 = vpop.f32.mrb[0].mxu0
      %v3149 = vadd.f32 0.0, %v3148
      %v3150 = vpop.f32.mrb[0].mxu0
      %v3151 = vpop.f32.mrb[0].mxu0
      %v3152 = vadd.f32 0.0, %v3151
      %v3153 = vpop.f32.mrb[0].mxu0
      %3154 = vmatprep.mubr.bf16.mxu0 0
      %3155 = vmatmul.mubr.bf16.gmra.mrb[0].mxu0 %v2872
      %v3156 = vpop.f32.mrb[0].mxu0
      %v3157 = vadd.f32 0.0, %v3156
      %v3158 = vpop.f32.mrb[0].mxu0
      %v3159 = vpop.f32.mrb[0].mxu0
      %v3160 = vadd.f32 0.0, %v3159
      %v3161 = vpop.f32.mrb[0].mxu0
      %3162 = vdwg.mxu0
      %v3163 = vmul.f32 %v2909, 0.35355338
      %v3164 = vmul.f32 %v2912, 0.35355338
      %v3165 = vmul.f32 %v2917, 0.35355338
      %v3166 = vmul.f32 %v2920, 0.35355338
      %v3167 = vmul.f32 %v2925, 0.35355338
      %v3168 = vmul.f32 %v2928, 0.35355338
      %v3169 = vmul.f32 %v2933, 0.35355338
      %v3170 = vmul.f32 %v2936, 0.35355338
      %v3171 = vmul.f32 %v2941, 0.35355338
      %v3172 = vmul.f32 %v2944, 0.35355338
      %v3173 = vmul.f32 %v2949, 0.35355338
      %v3174 = vmul.f32 %v2952, 0.35355338
      %v3175 = vmul.f32 %v2957, 0.35355338
      %v3176 = vmul.f32 %v2960, 0.35355338
      %v3177 = vmul.f32 %v2965, 0.35355338
      %v3178 = vmul.f32 %v2968, 0.35355338
      %v3179 = vmul.f32 %v2973, 0.35355338
      %v3180 = vmul.f32 %v2976, 0.35355338
      %v3181 = vmul.f32 %v2981, 0.35355338
      %v3182 = vmul.f32 %v2984, 0.35355338
      %v3183 = vmul.f32 %v2989, 0.35355338
      %v3184 = vmul.f32 %v2992, 0.35355338
      %v3185 = vmul.f32 %v2997, 0.35355338
      %v3186 = vmul.f32 %v3000, 0.35355338
      %v3187 = vmul.f32 %v3005, 0.35355338
      %v3188 = vmul.f32 %v3008, 0.35355338
      %v3189 = vmul.f32 %v3013, 0.35355338
      %v3190 = vmul.f32 %v3016, 0.35355338
      %v3191 = vmul.f32 %v3021, 0.35355338
      %v3192 = vmul.f32 %v3024, 0.35355338
      %v3193 = vmul.f32 %v3029, 0.35355338
      %v3194 = vmul.f32 %v3032, 0.35355338
      %v3195 = vmul.f32 %v3037, 0.35355338
      %v3196 = vmul.f32 %v3040, 0.35355338
      %v3197 = vmul.f32 %v3045, 0.35355338
      %v3198 = vmul.f32 %v3048, 0.35355338
      %v3199 = vmul.f32 %v3053, 0.35355338
      %v3200 = vmul.f32 %v3056, 0.35355338
      %v3201 = vmul.f32 %v3061, 0.35355338
      %v3202 = vmul.f32 %v3064, 0.35355338
      %v3203 = vmul.f32 %v3069, 0.35355338
      %v3204 = vmul.f32 %v3072, 0.35355338
      %v3205 = vmul.f32 %v3077, 0.35355338
      %v3206 = vmul.f32 %v3080, 0.35355338
      %v3207 = vmul.f32 %v3085, 0.35355338
      %v3208 = vmul.f32 %v3088, 0.35355338
      %v3209 = vmul.f32 %v3093, 0.35355338
      %v3210 = vmul.f32 %v3096, 0.35355338
      %v3211 = vmul.f32 %v3101, 0.35355338
      %v3212 = vmul.f32 %v3104, 0.35355338
      %v3213 = vmul.f32 %v3109, 0.35355338
      %v3214 = vmul.f32 %v3112, 0.35355338
      %v3215 = vmul.f32 %v3117, 0.35355338
      %v3216 = vmul.f32 %v3120, 0.35355338
      %v3217 = vmul.f32 %v3125, 0.35355338
      %v3218 = vmul.f32 %v3128, 0.35355338
      %v3219 = vmul.f32 %v3133, 0.35355338
      %v3220 = vmul.f32 %v3136, 0.35355338
      %v3221 = vmul.f32 %v3141, 0.35355338
      %v3222 = vmul.f32 %v3144, 0.35355338
      %v3223 = vmul.f32 %v3149, 0.35355338
      %v3224 = vmul.f32 %v3152, 0.35355338
      %v3225 = vmul.f32 %v3157, 0.35355338
      %v3226 = vmul.f32 %v3160, 0.35355338
      %v3227 = vld [vmem:[#allocation5] sm:$0x1]
      %v3229 = vlaneseq
      %v3230 = vshrl.u32 %v3229, 7
      %v3231 = vsub.s32 0, %v3230
      %v3232 = vrot.slane %v3227, %v3231
      %v3234 = vsub.f32 %v3163, %v3232
      %v3235 = vsub.f32 %v3164, %v3232
      %v3236 = vsub.f32 %v3165, %v3232
      %v3237 = vsub.f32 %v3166, %v3232
      %v3238 = vsub.f32 %v3167, %v3232
      %v3239 = vsub.f32 %v3168, %v3232
      %v3240 = vsub.f32 %v3169, %v3232
      %v3241 = vsub.f32 %v3170, %v3232
      %v3242 = vsub.f32 %v3171, %v3232
      %v3243 = vsub.f32 %v3172, %v3232
      %v3244 = vsub.f32 %v3173, %v3232
      %v3245 = vsub.f32 %v3174, %v3232
      %v3246 = vsub.f32 %v3175, %v3232
      %v3247 = vsub.f32 %v3176, %v3232
      %v3248 = vsub.f32 %v3177, %v3232
      %v3249 = vsub.f32 %v3178, %v3232
      %v3250 = vsub.f32 %v3179, %v3232
      %v3251 = vsub.f32 %v3180, %v3232
      %v3252 = vsub.f32 %v3181, %v3232
      %v3253 = vsub.f32 %v3182, %v3232
      %v3254 = vsub.f32 %v3183, %v3232
      %v3255 = vsub.f32 %v3184, %v3232
      %v3256 = vsub.f32 %v3185, %v3232
      %v3257 = vsub.f32 %v3186, %v3232
      %v3258 = vsub.f32 %v3187, %v3232
      %v3259 = vsub.f32 %v3188, %v3232
      %v3260 = vsub.f32 %v3189, %v3232
      %v3261 = vsub.f32 %v3190, %v3232
      %v3262 = vsub.f32 %v3191, %v3232
      %v3263 = vsub.f32 %v3192, %v3232
      %v3264 = vsub.f32 %v3193, %v3232
      %v3265 = vsub.f32 %v3194, %v3232
      %v3266 = vsub.f32 %v3195, %v3232
      %v3267 = vsub.f32 %v3196, %v3232
      %v3268 = vsub.f32 %v3197, %v3232
      %v3269 = vsub.f32 %v3198, %v3232
      %v3270 = vsub.f32 %v3199, %v3232
      %v3271 = vsub.f32 %v3200, %v3232
      %v3272 = vsub.f32 %v3201, %v3232
      %v3273 = vsub.f32 %v3202, %v3232
      %v3274 = vsub.f32 %v3203, %v3232
      %v3275 = vsub.f32 %v3204, %v3232
      %v3276 = vsub.f32 %v3205, %v3232
      %v3277 = vsub.f32 %v3206, %v3232
      %v3278 = vsub.f32 %v3207, %v3232
      %v3279 = vsub.f32 %v3208, %v3232
      %v3280 = vsub.f32 %v3209, %v3232
      %v3281 = vsub.f32 %v3210, %v3232
      %v3282 = vsub.f32 %v3211, %v3232
      %v3283 = vsub.f32 %v3212, %v3232
      %v3284 = vsub.f32 %v3213, %v3232
      %v3285 = vsub.f32 %v3214, %v3232
      %v3286 = vsub.f32 %v3215, %v3232
      %v3287 = vsub.f32 %v3216, %v3232
      %v3288 = vsub.f32 %v3217, %v3232
      %v3289 = vsub.f32 %v3218, %v3232
      %v3290 = vsub.f32 %v3219, %v3232
      %v3291 = vsub.f32 %v3220, %v3232
      %v3292 = vsub.f32 %v3221, %v3232
      %v3293 = vsub.f32 %v3222, %v3232
      %v3294 = vsub.f32 %v3223, %v3232
      %v3295 = vsub.f32 %v3224, %v3232
      %v3296 = vsub.f32 %v3225, %v3232
      %v3297 = vsub.f32 %v3226, %v3232
      %v3298 = vmul.f32 %v3234, 1.442695
      %v3299 = vpow.pop %v3298
      %v3300 = vmul.f32 %v3235, 1.442695
      %v3301 = vpow.pop %v3300
      %v3302 = vmul.f32 %v3236, 1.442695
      %v3303 = vpow.pop %v3302
      %v3304 = vmul.f32 %v3237, 1.442695
      %v3305 = vpow.pop %v3304
      %v3306 = vmul.f32 %v3238, 1.442695
      %v3307 = vpow.pop %v3306
      %v3308 = vmul.f32 %v3239, 1.442695
      %v3309 = vpow.pop %v3308
      %v3310 = vmul.f32 %v3240, 1.442695
      %v3311 = vpow.pop %v3310
      %v3312 = vmul.f32 %v3241, 1.442695
      %v3313 = vpow.pop %v3312
      %v3314 = vmul.f32 %v3242, 1.442695
      %v3315 = vpow.pop %v3314
      %v3316 = vmul.f32 %v3243, 1.442695
      %v3317 = vpow.pop %v3316
      %v3318 = vmul.f32 %v3244, 1.442695
      %v3319 = vpow.pop %v3318
      %v3320 = vmul.f32 %v3245, 1.442695
      %v3321 = vpow.pop %v3320
      %v3322 = vmul.f32 %v3246, 1.442695
      %v3323 = vpow.pop %v3322
      %v3324 = vmul.f32 %v3247, 1.442695
      %v3325 = vpow.pop %v3324
      %v3326 = vmul.f32 %v3248, 1.442695
      %v3327 = vpow.pop %v3326
      %v3328 = vmul.f32 %v3249, 1.442695
      %v3329 = vpow.pop %v3328
      %v3330 = vmul.f32 %v3250, 1.442695
      %v3331 = vpow.pop %v3330
      %v3332 = vmul.f32 %v3251, 1.442695
      %v3333 = vpow.pop %v3332
      %v3334 = vmul.f32 %v3252, 1.442695
      %v3335 = vpow.pop %v3334
      %v3336 = vmul.f32 %v3253, 1.442695
      %v3337 = vpow.pop %v3336
      %v3338 = vmul.f32 %v3254, 1.442695
      %v3339 = vpow.pop %v3338
      %v3340 = vmul.f32 %v3255, 1.442695
      %v3341 = vpow.pop %v3340
      %v3342 = vmul.f32 %v3256, 1.442695
      %v3343 = vpow.pop %v3342
      %v3344 = vmul.f32 %v3257, 1.442695
      %v3345 = vpow.pop %v3344
      %v3346 = vmul.f32 %v3258, 1.442695
      %v3347 = vpow.pop %v3346
      %v3348 = vmul.f32 %v3259, 1.442695
      %v3349 = vpow.pop %v3348
      %v3350 = vmul.f32 %v3260, 1.442695
      %v3351 = vpow.pop %v3350
      %v3352 = vmul.f32 %v3261, 1.442695
      %v3353 = vpow.pop %v3352
      %v3354 = vmul.f32 %v3262, 1.442695
      %v3355 = vpow.pop %v3354
      %v3356 = vmul.f32 %v3263, 1.442695
      %v3357 = vpow.pop %v3356
      %v3358 = vmul.f32 %v3264, 1.442695
      %v3359 = vpow.pop %v3358
      %v3360 = vmul.f32 %v3265, 1.442695
      %v3361 = vpow.pop %v3360
      %v3362 = vmul.f32 %v3266, 1.442695
      %v3363 = vpow.pop %v3362
      %v3364 = vmul.f32 %v3267, 1.442695
      %v3365 = vpow.pop %v3364
      %v3366 = vmul.f32 %v3268, 1.442695
      %v3367 = vpow.pop %v3366
      %v3368 = vmul.f32 %v3269, 1.442695
      %v3369 = vpow.pop %v3368
      %v3370 = vmul.f32 %v3270, 1.442695
      %v3371 = vpow.pop %v3370
      %v3372 = vmul.f32 %v3271, 1.442695
      %v3373 = vpow.pop %v3372
      %v3374 = vmul.f32 %v3272, 1.442695
      %v3375 = vpow.pop %v3374
      %v3376 = vmul.f32 %v3273, 1.442695
      %v3377 = vpow.pop %v3376
      %v3378 = vmul.f32 %v3274, 1.442695
      %v3379 = vpow.pop %v3378
      %v3380 = vmul.f32 %v3275, 1.442695
      %v3381 = vpow.pop %v3380
      %v3382 = vmul.f32 %v3276, 1.442695
      %v3383 = vpow.pop %v3382
      %v3384 = vmul.f32 %v3277, 1.442695
      %v3385 = vpow.pop %v3384
      %v3386 = vmul.f32 %v3278, 1.442695
      %v3387 = vpow.pop %v3386
      %v3388 = vmul.f32 %v3279, 1.442695
      %v3389 = vpow.pop %v3388
      %v3390 = vmul.f32 %v3280, 1.442695
      %v3391 = vpow.pop %v3390
      %v3392 = vmul.f32 %v3281, 1.442695
      %v3393 = vpow.pop %v3392
      %v3394 = vmul.f32 %v3282, 1.442695
      %v3395 = vpow.pop %v3394
      %v3396 = vmul.f32 %v3283, 1.442695
      %v3397 = vpow.pop %v3396
      %v3398 = vmul.f32 %v3284, 1.442695
      %v3399 = vpow.pop %v3398
      %v3400 = vmul.f32 %v3285, 1.442695
      %v3401 = vpow.pop %v3400
      %v3402 = vmul.f32 %v3286, 1.442695
      %v3403 = vpow.pop %v3402
      %v3404 = vmul.f32 %v3287, 1.442695
      %v3405 = vpow.pop %v3404
      %v3406 = vmul.f32 %v3288, 1.442695
      %v3407 = vpow.pop %v3406
      %v3408 = vmul.f32 %v3289, 1.442695
      %v3409 = vpow.pop %v3408
      %v3410 = vmul.f32 %v3290, 1.442695
      %v3411 = vpow.pop %v3410
      %v3412 = vmul.f32 %v3291, 1.442695
      %v3413 = vpow.pop %v3412
      %v3414 = vmul.f32 %v3292, 1.442695
      %v3415 = vpow.pop %v3414
      %v3416 = vmul.f32 %v3293, 1.442695
      %v3417 = vpow.pop %v3416
      %v3418 = vmul.f32 %v3294, 1.442695
      %v3419 = vpow.pop %v3418
      %v3420 = vmul.f32 %v3295, 1.442695
      %v3421 = vpow.pop %v3420
      %v3422 = vmul.f32 %v3296, 1.442695
      %v3423 = vpow.pop %v3422
      %v3424 = vmul.f32 %v3297, 1.442695
      %v3425 = vpow.pop %v3424
      %3490 = vrot.lane.b32.xlu0 %v3299, 32
      %v3491 = vpop.permute.xlu0 %3490
      %3492 = vrot.lane.b32.xlu0 %v3301, 32
      %v3493 = vpop.permute.xlu0 %3492
      %3494 = vrot.lane.b32.xlu0 %v3303, 32
      %v3495 = vpop.permute.xlu0 %3494
      %3496 = vrot.lane.b32.xlu0 %v3305, 32
      %v3497 = vpop.permute.xlu0 %3496
      %3498 = vrot.lane.b32.xlu0 %v3307, 32
      %v3499 = vpop.permute.xlu0 %3498
      %3500 = vrot.lane.b32.xlu0 %v3309, 32
      %v3501 = vpop.permute.xlu0 %3500
      %3502 = vrot.lane.b32.xlu0 %v3311, 32
      %v3503 = vpop.permute.xlu0 %3502
      %3504 = vrot.lane.b32.xlu0 %v3313, 32
      %v3505 = vpop.permute.xlu0 %3504
      %3506 = vrot.lane.b32.xlu0 %v3315, 32
      %v3507 = vpop.permute.xlu0 %3506
      %3508 = vrot.lane.b32.xlu0 %v3317, 32
      %v3509 = vpop.permute.xlu0 %3508
      %3510 = vrot.lane.b32.xlu0 %v3319, 32
      %v3511 = vpop.permute.xlu0 %3510
      %3512 = vrot.lane.b32.xlu0 %v3321, 32
      %v3513 = vpop.permute.xlu0 %3512
      %3514 = vrot.lane.b32.xlu0 %v3323, 32
      %v3515 = vpop.permute.xlu0 %3514
      %3516 = vrot.lane.b32.xlu0 %v3325, 32
      %v3517 = vpop.permute.xlu0 %3516
      %3518 = vrot.lane.b32.xlu0 %v3327, 32
      %v3519 = vpop.permute.xlu0 %3518
      %3520 = vrot.lane.b32.xlu0 %v3329, 32
      %v3521 = vpop.permute.xlu0 %3520
      %3522 = vrot.lane.b32.xlu0 %v3331, 32
      %v3523 = vpop.permute.xlu0 %3522
      %3524 = vrot.lane.b32.xlu0 %v3333, 32
      %v3525 = vpop.permute.xlu0 %3524
      %3526 = vrot.lane.b32.xlu0 %v3335, 32
      %v3527 = vpop.permute.xlu0 %3526
      %3528 = vrot.lane.b32.xlu0 %v3337, 32
      %v3529 = vpop.permute.xlu0 %3528
      %3530 = vrot.lane.b32.xlu0 %v3339, 32
      %v3531 = vpop.permute.xlu0 %3530
      %3532 = vrot.lane.b32.xlu0 %v3341, 32
      %v3533 = vpop.permute.xlu0 %3532
      %3534 = vrot.lane.b32.xlu0 %v3343, 32
      %v3535 = vpop.permute.xlu0 %3534
      %3536 = vrot.lane.b32.xlu0 %v3345, 32
      %v3537 = vpop.permute.xlu0 %3536
      %3538 = vrot.lane.b32.xlu0 %v3347, 32
      %v3539 = vpop.permute.xlu0 %3538
      %3540 = vrot.lane.b32.xlu0 %v3349, 32
      %v3541 = vpop.permute.xlu0 %3540
      %3542 = vrot.lane.b32.xlu0 %v3351, 32
      %v3543 = vpop.permute.xlu0 %3542
      %3544 = vrot.lane.b32.xlu0 %v3353, 32
      %v3545 = vpop.permute.xlu0 %3544
      %3546 = vrot.lane.b32.xlu0 %v3355, 32
      %v3547 = vpop.permute.xlu0 %3546
      %3548 = vrot.lane.b32.xlu0 %v3357, 32
      %v3549 = vpop.permute.xlu0 %3548
      %3550 = vrot.lane.b32.xlu0 %v3359, 32
      %v3551 = vpop.permute.xlu0 %3550
      %3552 = vrot.lane.b32.xlu0 %v3361, 32
      %v3553 = vpop.permute.xlu0 %3552
      %3554 = vrot.lane.b32.xlu0 %v3363, 32
      %v3555 = vpop.permute.xlu0 %3554
      %3556 = vrot.lane.b32.xlu0 %v3365, 32
      %v3557 = vpop.permute.xlu0 %3556
      %3558 = vrot.lane.b32.xlu0 %v3367, 32
      %v3559 = vpop.permute.xlu0 %3558
      %3560 = vrot.lane.b32.xlu0 %v3369, 32
      %v3561 = vpop.permute.xlu0 %3560
      %3562 = vrot.lane.b32.xlu0 %v3371, 32
      %v3563 = vpop.permute.xlu0 %3562
      %3564 = vrot.lane.b32.xlu0 %v3373, 32
      %v3565 = vpop.permute.xlu0 %3564
      %3566 = vrot.lane.b32.xlu0 %v3375, 32
      %v3567 = vpop.permute.xlu0 %3566
      %3568 = vrot.lane.b32.xlu0 %v3377, 32
      %v3569 = vpop.permute.xlu0 %3568
      %3570 = vrot.lane.b32.xlu0 %v3379, 32
      %v3571 = vpop.permute.xlu0 %3570
      %3572 = vrot.lane.b32.xlu0 %v3381, 32
      %v3573 = vpop.permute.xlu0 %3572
      %3574 = vrot.lane.b32.xlu0 %v3383, 32
      %v3575 = vpop.permute.xlu0 %3574
      %3576 = vrot.lane.b32.xlu0 %v3385, 32
      %v3577 = vpop.permute.xlu0 %3576
      %3578 = vrot.lane.b32.xlu0 %v3387, 32
      %v3579 = vpop.permute.xlu0 %3578
      %3580 = vrot.lane.b32.xlu0 %v3389, 32
      %v3581 = vpop.permute.xlu0 %3580
      %3582 = vrot.lane.b32.xlu0 %v3391, 32
      %v3583 = vpop.permute.xlu0 %3582
      %3584 = vrot.lane.b32.xlu0 %v3393, 32
      %v3585 = vpop.permute.xlu0 %3584
      %3586 = vrot.lane.b32.xlu0 %v3395, 32
      %v3587 = vpop.permute.xlu0 %3586
      %3588 = vrot.lane.b32.xlu0 %v3397, 32
      %v3589 = vpop.permute.xlu0 %3588
      %3590 = vrot.lane.b32.xlu0 %v3399, 32
      %v3591 = vpop.permute.xlu0 %3590
      %3592 = vrot.lane.b32.xlu0 %v3401, 32
      %v3593 = vpop.permute.xlu0 %3592
      %3594 = vrot.lane.b32.xlu0 %v3403, 32
      %v3595 = vpop.permute.xlu0 %3594
      %3596 = vrot.lane.b32.xlu0 %v3405, 32
      %v3597 = vpop.permute.xlu0 %3596
      %3598 = vrot.lane.b32.xlu0 %v3407, 32
      %v3599 = vpop.permute.xlu0 %3598
      %3600 = vrot.lane.b32.xlu0 %v3409, 32
      %v3601 = vpop.permute.xlu0 %3600
      %3602 = vrot.lane.b32.xlu0 %v3411, 32
      %v3603 = vpop.permute.xlu0 %3602
      %3604 = vrot.lane.b32.xlu0 %v3413, 32
      %v3605 = vpop.permute.xlu0 %3604
      %3606 = vrot.lane.b32.xlu0 %v3415, 32
      %v3607 = vpop.permute.xlu0 %3606
      %3608 = vrot.lane.b32.xlu0 %v3417, 32
      %v3609 = vpop.permute.xlu0 %3608
      %3610 = vrot.lane.b32.xlu0 %v3419, 32
      %v3611 = vpop.permute.xlu0 %3610
      %3612 = vrot.lane.b32.xlu0 %v3421, 32
      %v3613 = vpop.permute.xlu0 %3612
      %3614 = vrot.lane.b32.xlu0 %v3423, 32
      %v3615 = vpop.permute.xlu0 %3614
      %3616 = vrot.lane.b32.xlu0 %v3425, 32
      %v3617 = vpop.permute.xlu0 %3616
      %v3682 = vmul.f32 %v2411, %v3491
      %v3683 = vmul.f32 %v2414, %v3493
      %v3684 = vmul.f32 %v2419, %v3495
      %v3685 = vmul.f32 %v2422, %v3497
      %v3686 = vmul.f32 %v2427, %v3499
      %v3687 = vmul.f32 %v2430, %v3501
      %v3688 = vmul.f32 %v2435, %v3503
      %v3689 = vmul.f32 %v2438, %v3505
      %v3690 = vmul.f32 %v2443, %v3507
      %v3691 = vmul.f32 %v2446, %v3509
      %v3692 = vmul.f32 %v2451, %v3511
      %v3693 = vmul.f32 %v2454, %v3513
      %v3694 = vmul.f32 %v2459, %v3515
      %v3695 = vmul.f32 %v2462, %v3517
      %v3696 = vmul.f32 %v2467, %v3519
      %v3697 = vmul.f32 %v2470, %v3521
      %v3698 = vmul.f32 %v2475, %v3523
      %v3699 = vmul.f32 %v2478, %v3525
      %v3700 = vmul.f32 %v2483, %v3527
      %v3701 = vmul.f32 %v2486, %v3529
      %v3702 = vmul.f32 %v2491, %v3531
      %v3703 = vmul.f32 %v2494, %v3533
      %v3704 = vmul.f32 %v2499, %v3535
      %v3705 = vmul.f32 %v2502, %v3537
      %v3706 = vmul.f32 %v2507, %v3539
      %v3707 = vmul.f32 %v2510, %v3541
      %v3708 = vmul.f32 %v2515, %v3543
      %v3709 = vmul.f32 %v2518, %v3545
      %v3710 = vmul.f32 %v2523, %v3547
      %v3711 = vmul.f32 %v2526, %v3549
      %v3712 = vmul.f32 %v2531, %v3551
      %v3713 = vmul.f32 %v2534, %v3553
      %v3714 = vmul.f32 %v2539, %v3555
      %v3715 = vmul.f32 %v2542, %v3557
      %v3716 = vmul.f32 %v2547, %v3559
      %v3717 = vmul.f32 %v2550, %v3561
      %v3718 = vmul.f32 %v2555, %v3563
      %v3719 = vmul.f32 %v2558, %v3565
      %v3720 = vmul.f32 %v2563, %v3567
      %v3721 = vmul.f32 %v2566, %v3569
      %v3722 = vmul.f32 %v2571, %v3571
      %v3723 = vmul.f32 %v2574, %v3573
      %v3724 = vmul.f32 %v2579, %v3575
      %v3725 = vmul.f32 %v2582, %v3577
      %v3726 = vmul.f32 %v2587, %v3579
      %v3727 = vmul.f32 %v2590, %v3581
      %v3728 = vmul.f32 %v2595, %v3583
      %v3729 = vmul.f32 %v2598, %v3585
      %v3730 = vmul.f32 %v2603, %v3587
      %v3731 = vmul.f32 %v2606, %v3589
      %v3732 = vmul.f32 %v2611, %v3591
      %v3733 = vmul.f32 %v2614, %v3593
      %v3734 = vmul.f32 %v2619, %v3595
      %v3735 = vmul.f32 %v2622, %v3597
      %v3736 = vmul.f32 %v2627, %v3599
      %v3737 = vmul.f32 %v2630, %v3601
      %v3738 = vmul.f32 %v2635, %v3603
      %v3739 = vmul.f32 %v2638, %v3605
      %v3740 = vmul.f32 %v2643, %v3607
      %v3741 = vmul.f32 %v2646, %v3609
      %v3742 = vmul.f32 %v2651, %v3611
      %v3743 = vmul.f32 %v2654, %v3613
      %v3744 = vmul.f32 %v2659, %v3615
      %v3745 = vmul.f32 %v2662, %v3617
      %v3746 = vsel %vm2777, %v3299, %v3682
      %v3747 = vsel %vm2777, %v3301, %v3683
      %v3748 = vsel %vm2777, %v3303, %v3684
      %v3749 = vsel %vm2777, %v3305, %v3685
      %v3750 = vsel %vm2777, %v3307, %v3686
      %v3751 = vsel %vm2777, %v3309, %v3687
      %v3752 = vsel %vm2777, %v3311, %v3688
      %v3753 = vsel %vm2777, %v3313, %v3689
      %v3754 = vsel %vm2777, %v3315, %v3690
      %v3755 = vsel %vm2777, %v3317, %v3691
      %v3756 = vsel %vm2777, %v3319, %v3692
      %v3757 = vsel %vm2777, %v3321, %v3693
      %v3758 = vsel %vm2777, %v3323, %v3694
      %v3759 = vsel %vm2777, %v3325, %v3695
      %v3760 = vsel %vm2777, %v3327, %v3696
      %v3761 = vsel %vm2777, %v3329, %v3697
      %v3762 = vsel %vm2777, %v3331, %v3698
      %v3763 = vsel %vm2777, %v3333, %v3699
      %v3764 = vsel %vm2777, %v3335, %v3700
      %v3765 = vsel %vm2777, %v3337, %v3701
      %v3766 = vsel %vm2777, %v3339, %v3702
      %v3767 = vsel %vm2777, %v3341, %v3703
      %v3768 = vsel %vm2777, %v3343, %v3704
      %v3769 = vsel %vm2777, %v3345, %v3705
      %v3770 = vsel %vm2777, %v3347, %v3706
      %v3771 = vsel %vm2777, %v3349, %v3707
      %v3772 = vsel %vm2777, %v3351, %v3708
      %v3773 = vsel %vm2777, %v3353, %v3709
      %v3774 = vsel %vm2777, %v3355, %v3710
      %v3775 = vsel %vm2777, %v3357, %v3711
      %v3776 = vsel %vm2777, %v3359, %v3712
      %v3777 = vsel %vm2777, %v3361, %v3713
      %v3778 = vsel %vm2777, %v3363, %v3714
      %v3779 = vsel %vm2777, %v3365, %v3715
      %v3780 = vsel %vm2777, %v3367, %v3716
      %v3781 = vsel %vm2777, %v3369, %v3717
      %v3782 = vsel %vm2777, %v3371, %v3718
      %v3783 = vsel %vm2777, %v3373, %v3719
      %v3784 = vsel %vm2777, %v3375, %v3720
      %v3785 = vsel %vm2777, %v3377, %v3721
      %v3786 = vsel %vm2777, %v3379, %v3722
      %v3787 = vsel %vm2777, %v3381, %v3723
      %v3788 = vsel %vm2777, %v3383, %v3724
      %v3789 = vsel %vm2777, %v3385, %v3725
      %v3790 = vsel %vm2777, %v3387, %v3726
      %v3791 = vsel %vm2777, %v3389, %v3727
      %v3792 = vsel %vm2777, %v3391, %v3728
      %v3793 = vsel %vm2777, %v3393, %v3729
      %v3794 = vsel %vm2777, %v3395, %v3730
      %v3795 = vsel %vm2777, %v3397, %v3731
      %v3796 = vsel %vm2777, %v3399, %v3732
      %v3797 = vsel %vm2777, %v3401, %v3733
      %v3798 = vsel %vm2777, %v3403, %v3734
      %v3799 = vsel %vm2777, %v3405, %v3735
      %v3800 = vsel %vm2777, %v3407, %v3736
      %v3801 = vsel %vm2777, %v3409, %v3737
      %v3802 = vsel %vm2777, %v3411, %v3738
      %v3803 = vsel %vm2777, %v3413, %v3739
      %v3804 = vsel %vm2777, %v3415, %v3740
      %v3805 = vsel %vm2777, %v3417, %v3741
      %v3806 = vsel %vm2777, %v3419, %v3742
      %v3807 = vsel %vm2777, %v3421, %v3743
      %v3808 = vsel %vm2777, %v3423, %v3744
      %v3809 = vsel %vm2777, %v3425, %v3745
      %v3810 = vpack.c.bf16 %v3747, %v3746
      %v3811 = vpack.c.bf16 %v3749, %v3748
      %v3812 = vpack.c.bf16 %v3751, %v3750
      %v3813 = vpack.c.bf16 %v3753, %v3752
      %v3814 = vpack.c.bf16 %v3755, %v3754
      %v3815 = vpack.c.bf16 %v3757, %v3756
      %v3816 = vpack.c.bf16 %v3759, %v3758
      %v3817 = vpack.c.bf16 %v3761, %v3760
      %v3818 = vpack.c.bf16 %v3763, %v3762
      %v3819 = vpack.c.bf16 %v3765, %v3764
      %v3820 = vpack.c.bf16 %v3767, %v3766
      %v3821 = vpack.c.bf16 %v3769, %v3768
      %v3822 = vpack.c.bf16 %v3771, %v3770
      %v3823 = vpack.c.bf16 %v3773, %v3772
      %v3824 = vpack.c.bf16 %v3775, %v3774
      %v3825 = vpack.c.bf16 %v3777, %v3776
      %v3826 = vpack.c.bf16 %v3779, %v3778
      %v3827 = vpack.c.bf16 %v3781, %v3780
      %v3828 = vpack.c.bf16 %v3783, %v3782
      %v3829 = vpack.c.bf16 %v3785, %v3784
      %v3830 = vpack.c.bf16 %v3787, %v3786
      %v3831 = vpack.c.bf16 %v3789, %v3788
      %v3832 = vpack.c.bf16 %v3791, %v3790
      %v3833 = vpack.c.bf16 %v3793, %v3792
      %v3834 = vpack.c.bf16 %v3795, %v3794
      %v3835 = vpack.c.bf16 %v3797, %v3796
      %v3836 = vpack.c.bf16 %v3799, %v3798
      %v3837 = vpack.c.bf16 %v3801, %v3800
      %v3838 = vpack.c.bf16 %v3803, %v3802
      %v3839 = vpack.c.bf16 %v3805, %v3804
      %v3840 = vpack.c.bf16 %v3807, %v3806
      %v3841 = vpack.c.bf16 %v3809, %v3808
      %v3842 = vld [vmem:[#allocation4] sm:$0xff]
      %v3843 = vld [vmem:[#allocation4 + $0x8] sm:$0xff]
      %v3844 = vld [vmem:[#allocation4 + $0x10] sm:$0xff]
      %v3845 = vld [vmem:[#allocation4 + $0x18] sm:$0xff]
      %v3846 = vld [vmem:[#allocation4 + $0x20] sm:$0xff]
      %v3847 = vld [vmem:[#allocation4 + $0x28] sm:$0xff]
      %v3848 = vld [vmem:[#allocation4 + $0x30] sm:$0xff]
      %v3849 = vld [vmem:[#allocation4 + $0x38] sm:$0xff]
      %3850 = vmatprep.subr.bf16.mxu0 0
      %3851 = vmatpush1.bf16.msra.mxu0 %v3810
      %3852 = vmatprep.subr.bf16.mxu0 0
      %3853 = vmatpush1.bf16.msra.mxu0 %v3811
      %3854 = vmatprep.subr.bf16.mxu0 0
      %3855 = vmatpush1.bf16.msra.mxu0 %v3812
      %3856 = vmatprep.subr.bf16.mxu0 0
      %3857 = vmatpush1.bf16.msra.mxu0 %v3813
      %3858 = vmatprep.subr.bf16.mxu0 0
      %3859 = vmatpush1.bf16.msra.mxu0 %v3814
      %3860 = vmatprep.subr.bf16.mxu0 0
      %3861 = vmatpush1.bf16.msra.mxu0 %v3815
      %3862 = vmatprep.subr.bf16.mxu0 0
      %3863 = vmatpush1.bf16.msra.mxu0 %v3816
      %3864 = vmatprep.subr.bf16.mxu0 0
      %3865 = vmatpush1.bf16.msra.mxu0 %v3817
      %3866 = vmatprep.subr.bf16.mxu0 0
      %3867 = vmatpush1.bf16.msra.mxu0 %v3818
      %3868 = vmatprep.subr.bf16.mxu0 0
      %3869 = vmatpush1.bf16.msra.mxu0 %v3819
      %3870 = vmatprep.subr.bf16.mxu0 0
      %3871 = vmatpush1.bf16.msra.mxu0 %v3820
      %3872 = vmatprep.subr.bf16.mxu0 0
      %3873 = vmatpush1.bf16.msra.mxu0 %v3821
      %3874 = vmatprep.subr.bf16.mxu0 0
      %3875 = vmatpush1.bf16.msra.mxu0 %v3822
      %3876 = vmatprep.subr.bf16.mxu0 0
      %3877 = vmatpush1.bf16.msra.mxu0 %v3823
      %3878 = vmatprep.subr.bf16.mxu0 0
      %3879 = vmatpush1.bf16.msra.mxu0 %v3824
      %3880 = vmatprep.subr.bf16.mxu0 0
      %3881 = vmatpush1.bf16.msra.mxu0 %v3825
      %3882 = vmatprep.mubr.bf16.mxu0 %v1871
      %3883 = vmatmul.mubr.bf16.gmra.mrb[0].mxu0 %v1870
      %v3884 = vpop.f32.mrb[0].mxu0
      %v3885 = vadd.f32 0.0, %v3884
      %v3886 = vpop.f32.mrb[0].mxu0
      %v3887 = vpop.f32.mrb[0].mxu0
      %v3888 = vadd.f32 0.0, %v3887
      %v3889 = vpop.f32.mrb[0].mxu0
      %3890 = vmatprep.mubr.bf16.mxu0 %v1875
      %3891 = vmatmul.mubr.bf16.gmra.mrb[0].mxu0 %v1874
      %v3892 = vpop.f32.mrb[0].mxu0
      %v3893 = vadd.f32 0.0, %v3892
      %v3894 = vpop.f32.mrb[0].mxu0
      %v3895 = vpop.f32.mrb[0].mxu0
      %v3896 = vadd.f32 0.0, %v3895
      %v3897 = vpop.f32.mrb[0].mxu0
      %3898 = vmatprep.mubr.bf16.mxu0 %v1879
      %3899 = vmatmul.mubr.bf16.gmra.mrb[0].mxu0 %v1878
      %v3900 = vpop.f32.mrb[0].mxu0
      %v3901 = vadd.f32 0.0, %v3900
      %v3902 = vpop.f32.mrb[0].mxu0
      %v3903 = vpop.f32.mrb[0].mxu0
      %v3904 = vadd.f32 0.0, %v3903
      %v3905 = vpop.f32.mrb[0].mxu0
      %3906 = vmatprep.mubr.bf16.mxu0 %v1883
      %3907 = vmatmul.mubr.bf16.gmra.mrb[0].mxu0 %v1882
      %v3908 = vpop.f32.mrb[0].mxu0
      %v3909 = vadd.f32 0.0, %v3908
      %v3910 = vpop.f32.mrb[0].mxu0
      %v3911 = vpop.f32.mrb[0].mxu0
      %v3912 = vadd.f32 0.0, %v3911
      %v3913 = vpop.f32.mrb[0].mxu0
      %3914 = vdwg.mxu0
      %3915 = vmatprep.subr.bf16.mxu0 0
      %3916 = vmatpush1.bf16.msra.mxu0 %v3826
      %3917 = vmatprep.subr.bf16.mxu0 0
      %3918 = vmatpush1.bf16.msra.mxu0 %v3827
      %3919 = vmatprep.subr.bf16.mxu0 0
      %3920 = vmatpush1.bf16.msra.mxu0 %v3828
      %3921 = vmatprep.subr.bf16.mxu0 0
      %3922 = vmatpush1.bf16.msra.mxu0 %v3829
      %3923 = vmatprep.subr.bf16.mxu0 0
      %3924 = vmatpush1.bf16.msra.mxu0 %v3830
      %3925 = vmatprep.subr.bf16.mxu0 0
      %3926 = vmatpush1.bf16.msra.mxu0 %v3831
      %3927 = vmatprep.subr.bf16.mxu0 0
      %3928 = vmatpush1.bf16.msra.mxu0 %v3832
      %3929 = vmatprep.subr.bf16.mxu0 0
      %3930 = vmatpush1.bf16.msra.mxu0 %v3833
      %3931 = vmatprep.subr.bf16.mxu0 0
      %3932 = vmatpush1.bf16.msra.mxu0 %v3834
      %3933 = vmatprep.subr.bf16.mxu0 0
      %3934 = vmatpush1.bf16.msra.mxu0 %v3835
      %3935 = vmatprep.subr.bf16.mxu0 0
      %3936 = vmatpush1.bf16.msra.mxu0 %v3836
      %3937 = vmatprep.subr.bf16.mxu0 0
      %3938 = vmatpush1.bf16.msra.mxu0 %v3837
      %3939 = vmatprep.subr.bf16.mxu0 0
      %3940 = vmatpush1.bf16.msra.mxu0 %v3838
      %3941 = vmatprep.subr.bf16.mxu0 0
      %3942 = vmatpush1.bf16.msra.mxu0 %v3839
      %3943 = vmatprep.subr.bf16.mxu0 0
      %3944 = vmatpush1.bf16.msra.mxu0 %v3840
      %3945 = vmatprep.subr.bf16.mxu0 0
      %3946 = vmatpush1.bf16.msra.mxu0 %v3841
      %3947 = vmatprep.mubr.bf16.mxu0 %v1873
      %3948 = vmatmul.mubr.bf16.gmra.mrb[0].mxu0 %v1872
      %v3949 = vpop.f32.mrb[0].mxu0
      %v3950 = vadd.f32 %v3885, %v3949
      %v3951 = vpop.f32.mrb[0].mxu0
      %v3952 = vpop.f32.mrb[0].mxu0
      %v3953 = vadd.f32 %v3888, %v3952
      %v3954 = vpop.f32.mrb[0].mxu0
      %3955 = vmatprep.mubr.bf16.mxu0 %v1877
      %3956 = vmatmul.mubr.bf16.gmra.mrb[0].mxu0 %v1876
      %v3957 = vpop.f32.mrb[0].mxu0
      %v3958 = vadd.f32 %v3893, %v3957
      %v3959 = vpop.f32.mrb[0].mxu0
      %v3960 = vpop.f32.mrb[0].mxu0
      %v3961 = vadd.f32 %v3896, %v3960
      %v3962 = vpop.f32.mrb[0].mxu0
      %3963 = vmatprep.mubr.bf16.mxu0 %v1881
      %3964 = vmatmul.mubr.bf16.gmra.mrb[0].mxu0 %v1880
      %v3965 = vpop.f32.mrb[0].mxu0
      %v3966 = vadd.f32 %v3901, %v3965
      %v3967 = vpop.f32.mrb[0].mxu0
      %v3968 = vpop.f32.mrb[0].mxu0
      %v3969 = vadd.f32 %v3904, %v3968
      %v3970 = vpop.f32.mrb[0].mxu0
      %3971 = vmatprep.mubr.bf16.mxu0 %v1885
      %3972 = vmatmul.mubr.bf16.gmra.mrb[0].mxu0 %v1884
      %v3973 = vpop.f32.mrb[0].mxu0
      %v3974 = vadd.f32 %v3909, %v3973
      %v3975 = vpop.f32.mrb[0].mxu0
      %v3976 = vpop.f32.mrb[0].mxu0
      %v3977 = vadd.f32 %v3912, %v3976
      %v3978 = vpop.f32.mrb[0].mxu0
      %3979 = vdwg.mxu0
      %v3980 = vadd.f32 %v3842, %v3950
      %v3981 = vadd.f32 %v3843, %v3953
      %v3982 = vadd.f32 %v3844, %v3958
      %v3983 = vadd.f32 %v3845, %v3961
      %v3984 = vadd.f32 %v3846, %v3966
      %v3985 = vadd.f32 %v3847, %v3969
      %v3986 = vadd.f32 %v3848, %v3974
      %v3987 = vadd.f32 %v3849, %v3977
      %3988 = vst.msk [vmem:[#allocation4] sm:$0xff] %vm1890, %v3980
      %3989 = vst.msk [vmem:[#allocation4 + $0x8] sm:$0xff] %vm1890, %v3981
      %3990 = vst.msk [vmem:[#allocation4 + $0x10] sm:$0xff] %vm1890, %v3982
      %3991 = vst.msk [vmem:[#allocation4 + $0x18] sm:$0xff] %vm1890, %v3983
      %3992 = vst.msk [vmem:[#allocation4 + $0x20] sm:$0xff] %vm1890, %v3984
      %3993 = vst.msk [vmem:[#allocation4 + $0x28] sm:$0xff] %vm1890, %v3985
      %3994 = vst.msk [vmem:[#allocation4 + $0x30] sm:$0xff] %vm1890, %v3986
      %3995 = vst.msk [vmem:[#allocation4 + $0x38] sm:$0xff] %vm1890, %v3987
      %p3996 = scmp.eq.s32.totalorder %s20, 1
      // Predicated region
      $region61: #{tpu_custom_call.1} parent=55 // pred_check
        %p3997 = pneg %p3996
      $region62: #{tpu_custom_call.1} parent=55 // pred_check_branch
        %3999 = sbr.rel (%p3997) target = $region64
      $region63: #{tpu_custom_call.1} parent=55 // pred_region
        %v4000 = vld [vmem:[#allocation4] sm:$0xff]
        %v4001 = vld [vmem:[#allocation4 + $0x8] sm:$0xff]
        %v4002 = vld [vmem:[#allocation4 + $0x10] sm:$0xff]
        %v4003 = vld [vmem:[#allocation4 + $0x18] sm:$0xff]
        %v4004 = vld [vmem:[#allocation4 + $0x20] sm:$0xff]
        %v4005 = vld [vmem:[#allocation4 + $0x28] sm:$0xff]
        %v4006 = vld [vmem:[#allocation4 + $0x30] sm:$0xff]
        %v4007 = vld [vmem:[#allocation4 + $0x38] sm:$0xff]
        %vm4008 = vcmp.le.f32.partialorder %v4000, 0.0
        %vm4009 = vcmp.le.f32.partialorder %v4001, 0.0
        %vm4010 = vcmp.le.f32.partialorder %v4002, 0.0
        %vm4011 = vcmp.le.f32.partialorder %v4003, 0.0
        %vm4012 = vcmp.le.f32.partialorder %v4004, 0.0
        %vm4013 = vcmp.le.f32.partialorder %v4005, 0.0
        %vm4014 = vcmp.le.f32.partialorder %v4006, 0.0
        %vm4015 = vcmp.le.f32.partialorder %v4007, 0.0
        %v4016 = vsel %vm4008, 1.0, %v4000
        %v4017 = vsel %vm4009, 1.0, %v4001
        %v4018 = vsel %vm4010, 1.0, %v4002
        %v4019 = vsel %vm4011, 1.0, %v4003
        %v4020 = vsel %vm4012, 1.0, %v4004
        %v4021 = vsel %vm4013, 1.0, %v4005
        %v4022 = vsel %vm4014, 1.0, %v4006
        %v4023 = vsel %vm4015, 1.0, %v4007
        %v4024 = vrcp.pop %v4016
        %v4025 = vrcp.pop %v4017
        %v4026 = vrcp.pop %v4018
        %v4027 = vrcp.pop %v4019
        %v4028 = vrcp.pop %v4020
        %v4029 = vrcp.pop %v4021
        %v4030 = vrcp.pop %v4022
        %v4031 = vrcp.pop %v4023
        %4040 = vrot.lane.b32.xlu0 %v4024, 32
        %v4041 = vpop.permute.xlu0 %4040
        %4042 = vrot.lane.b32.xlu0 %v4025, 32
        %v4043 = vpop.permute.xlu0 %4042
        %4044 = vrot.lane.b32.xlu0 %v4026, 32
        %v4045 = vpop.permute.xlu0 %4044
        %4046 = vrot.lane.b32.xlu0 %v4027, 32
        %v4047 = vpop.permute.xlu0 %4046
        %4048 = vrot.lane.b32.xlu0 %v4028, 32
        %v4049 = vpop.permute.xlu0 %4048
        %4050 = vrot.lane.b32.xlu0 %v4029, 32
        %v4051 = vpop.permute.xlu0 %4050
        %4052 = vrot.lane.b32.xlu0 %v4030, 32
        %v4053 = vpop.permute.xlu0 %4052
        %4054 = vrot.lane.b32.xlu0 %v4031, 32
        %v4055 = vpop.permute.xlu0 %4054
        %v4064 = vmul.f32 %v4000, %v4041
        %v4065 = vmul.f32 %v4001, %v4043
        %v4066 = vmul.f32 %v4002, %v4045
        %v4067 = vmul.f32 %v4003, %v4047
        %v4068 = vmul.f32 %v4004, %v4049
        %v4069 = vmul.f32 %v4005, %v4051
        %v4070 = vmul.f32 %v4006, %v4053
        %v4071 = vmul.f32 %v4007, %v4055
        %v4072 = vpack.c.bf16 %v4065, %v4064
        %v4073 = vpack.c.bf16 %v4067, %v4066
        %v4074 = vpack.c.bf16 %v4069, %v4068
        %v4075 = vpack.c.bf16 %v4071, %v4070
        %v4076 = vld [vmem:[%s3] sm:$0xf]
        %v4077 = vld [vmem:[%s3 + $0x4] sm:$0xf]
        %v4078 = vld [vmem:[%s3 + $0x8] sm:$0xf]
        %v4079 = vld [vmem:[%s3 + $0xc] sm:$0xf]
        %v4080 = vld [vmem:[%s4] sm:$0x1]
        %v4082 = vlaneseq
        %v4083 = vshrl.u32 %v4082, 7
        %v4084 = vsub.s32 0, %v4083
        %v4085 = vrot.slane %v4080, %v4084
        %4091 = vrot.lane.b32.xlu0 %v4072, 96
        %v4092 = vpop.permute.xlu0 %4091
        %4093 = vrot.lane.b32.xlu0 %v4073, 96
        %v4094 = vpop.permute.xlu0 %4093
        %4095 = vrot.lane.b32.xlu0 %v4074, 96
        %v4096 = vpop.permute.xlu0 %4095
        %4097 = vrot.lane.b32.xlu0 %v4075, 96
        %v4098 = vpop.permute.xlu0 %4097
        %v4103 = vunpack.c.l.b16 %v4076
        %v4104 = vunpack.c.l.b16 %v4077
        %v4105 = vunpack.c.l.b16 %v4078
        %v4106 = vunpack.c.l.b16 %v4079
        %v4107 = vpack.c.b16 %v4104, %v4103
        %v4108 = vpack.c.b16 %v4106, %v4105
        %v4112 = vsel %vm2777, %v4092, 0
        %v4115 = vsel %vm2777, %v4094, 0
        %v4118 = vsel %vm2777, %v4096, 0
        %v4121 = vsel %vm2777, %v4098, 0
        %4123 = vmatprep.subr.bf16.mxu0 0
        %4124 = vmatpush1.bf16.msra.mxu0 %v4107
        %4125 = vmatprep.subr.bf16.mxu0 0
        %4126 = vmatpush1.bf16.msra.mxu0 %v4108
        %4127 = vmatprep.subr.bf16.mxu0 0
        %4128 = vmatpush1.bf16.msra.mxu0 0
        %4129 = vmatprep.subr.bf16.mxu0 0
        %4130 = vmatpush1.bf16.msra.mxu0 0
        %4131 = vmatprep.subr.bf16.mxu0 0
        %4132 = vmatpush1.bf16.msra.mxu0 0
        %4133 = vmatprep.subr.bf16.mxu0 0
        %4134 = vmatpush1.bf16.msra.mxu0 0
        %4135 = vmatprep.subr.bf16.mxu0 0
        %4136 = vmatpush1.bf16.msra.mxu0 0
        %4137 = vmatprep.subr.bf16.mxu0 0
        %4138 = vmatpush1.bf16.msra.mxu0 0
        %4139 = vmatprep.subr.bf16.mxu0 0
        %4140 = vmatpush1.bf16.msra.mxu0 0
        %4141 = vmatprep.subr.bf16.mxu0 0
        %4142 = vmatpush1.bf16.msra.mxu0 0
        %4143 = vmatprep.subr.bf16.mxu0 0
        %4144 = vmatpush1.bf16.msra.mxu0 0
        %4145 = vmatprep.subr.bf16.mxu0 0
        %4146 = vmatpush1.bf16.msra.mxu0 0
        %4147 = vmatprep.subr.bf16.mxu0 0
        %4148 = vmatpush1.bf16.msra.mxu0 0
        %4149 = vmatprep.subr.bf16.mxu0 0
        %4150 = vmatpush1.bf16.msra.mxu0 0
        %4151 = vmatprep.subr.bf16.mxu0 0
        %4152 = vmatpush1.bf16.msra.mxu0 0
        %4153 = vmatprep.subr.bf16.mxu0 0
        %4154 = vmatpush1.bf16.msra.mxu0 0
        %4155 = vmatprep.mubr.bf16.mxu0 0
        %4156 = vmatmul.mubr.bf16.gmra.mrb[0].mxu0 %v4112
        %v4157 = vpop.f32.mrb[0].mxu0
        %v4158 = vadd.f32 %v4085, %v4157
        %v4159 = vpop.f32.mrb[0].mxu0
        %v4160 = vpop.f32.mrb[0].mxu0
        %v4161 = vadd.f32 %v4085, %v4160
        %v4162 = vpop.f32.mrb[0].mxu0
        %4163 = vmatprep.mubr.bf16.mxu0 0
        %4164 = vmatmul.mubr.bf16.gmra.mrb[0].mxu0 %v4115
        %v4165 = vpop.f32.mrb[0].mxu0
        %v4166 = vadd.f32 %v4085, %v4165
        %v4167 = vpop.f32.mrb[0].mxu0
        %v4168 = vpop.f32.mrb[0].mxu0
        %v4169 = vadd.f32 %v4085, %v4168
        %v4170 = vpop.f32.mrb[0].mxu0
        %4171 = vmatprep.mubr.bf16.mxu0 0
        %4172 = vmatmul.mubr.bf16.gmra.mrb[0].mxu0 %v4118
        %v4173 = vpop.f32.mrb[0].mxu0
        %v4174 = vadd.f32 %v4085, %v4173
        %v4175 = vpop.f32.mrb[0].mxu0
        %v4176 = vpop.f32.mrb[0].mxu0
        %v4177 = vadd.f32 %v4085, %v4176
        %v4178 = vpop.f32.mrb[0].mxu0
        %4179 = vmatprep.mubr.bf16.mxu0 0
        %4180 = vmatmul.mubr.bf16.gmra.mrb[0].mxu0 %v4121
        %v4181 = vpop.f32.mrb[0].mxu0
        %v4182 = vadd.f32 %v4085, %v4181
        %v4183 = vpop.f32.mrb[0].mxu0
        %v4184 = vpop.f32.mrb[0].mxu0
        %v4185 = vadd.f32 %v4085, %v4184
        %v4186 = vpop.f32.mrb[0].mxu0
        %4187 = vdwg.mxu0
        %4188 = vst.msk [vmem:[%s9] sm:$0xff] %vm2777, %v4158
        %4189 = vst.msk [vmem:[%s9 + $0x8] sm:$0xff] %vm2777, %v4161
        %4190 = vst.msk [vmem:[%s9 + $0x10] sm:$0xff] %vm2777, %v4166
        %4191 = vst.msk [vmem:[%s9 + $0x18] sm:$0xff] %vm2777, %v4169
        %4192 = vst.msk [vmem:[%s9 + $0x20] sm:$0xff] %vm2777, %v4174
        %4193 = vst.msk [vmem:[%s9 + $0x28] sm:$0xff] %vm2777, %v4177
        %4194 = vst.msk [vmem:[%s9 + $0x30] sm:$0xff] %vm2777, %v4182
        %4195 = vst.msk [vmem:[%s9 + $0x38] sm:$0xff] %vm2777, %v4185
      $region64: #{tpu_custom_call.1} parent=55 // pred_fallthru
        _
      // Predicated region
      $region65: #{tpu_custom_call.1} parent=55 // pred_check
        %p4196 = pneg %p237
      $region66: #{tpu_custom_call.1} parent=55 // pred_check_branch
        %4198 = sbr.rel (%p4196) target = $region68
      $region67: #{tpu_custom_call.1} parent=55 // pred_region
        _
      $region68: #{tpu_custom_call.1} parent=55 // pred_fallthru
        _
      // Predicated region
      $region69: #{tpu_custom_call.1} parent=55 // pred_check
        %p4199 = pneg %p237
      $region70: #{tpu_custom_call.1} parent=55 // pred_check_branch
        %4201 = sbr.rel (%p4199) target = $region72
      $region71: #{tpu_custom_call.1} parent=55 // pred_region
        _
      $region72: #{tpu_custom_call.1} parent=55 // pred_fallthru
        _
    $region56: #{tpu_custom_call.1} parent=5 // pred_fallthru
      _
    %p4202 = scmp.le.s32.totalorder 2, %s15
    // Predicated region
    $region73: #{tpu_custom_call.1} parent=5 // pred_check
      %p4203 = pneg %p4202
    $region74: #{tpu_custom_call.1} parent=5 // pred_check_branch
      %4205 = sbr.rel (%p4203) target = $region76
    $region75: #{tpu_custom_call.1} parent=5 // pred_region
      %s4206 = ssub.s32 %s15, 2
    $region76: #{tpu_custom_call.1} parent=5 // pred_fallthru
      _
  $region6: #{tpu_custom_call.1} parent=0 // loop_footer
    %s19 = sadd.s32 1, %s15
  $region7: #{tpu_custom_call.1} parent=0 // loop_footer_branch
    %14 = sbr.rel target = $region3
  $region8: #{tpu_custom_call.1} parent=0 // loop_exit
    _

</llo_original>
